<compile_context>
chip_gen: v5e
topology: v5e:2x2
jax: 0.10.0
libtpu: 0.0.40
codegen_flags: <defaults>
</compile_context>

<pallas_src>
import functools
from math import sqrt

import jax
import jax.numpy as jnp
from jax.experimental import pallas as pl
from jax.experimental.pallas import tpu as pltpu


# ----------------------------------------------------------------------------
# In-kernel building blocks
# ----------------------------------------------------------------------------

def _attention_block(xq, kv_src, mask, wq, bq, wkv, bkv, wo, bo,
                     num_heads, head_dim):
    """Multi-head attention + residual for one (batch, q-tile) block.

    xq:     (tq, E) f32   query-side activations (residual source)
    kv_src: (Lk, E) bf16  key/value source (full sequence)
    mask:   (tq, Lk) bf16 1 = attend, 0 = masked
    wq (E,E) / wkv (E,2E) / wo (E,E) are bf16; biases f32.
    1/sqrt(head_dim) is already folded into wq/bq.
    """
    bf16, f32 = jnp.bfloat16, jnp.float32
    tq, E = xq.shape
    Lk = kv_src.shape[0]

    q = jnp.dot(xq.astype(bf16), wq, preferred_element_type=f32) + bq  # (tq, E)
    kv = jnp.dot(kv_src, wkv, preferred_element_type=f32) + bkv        # (Lk, 2E)
    k = kv[:, :E]
    v = kv[:, E:]

    qh = q.reshape(tq, num_heads, head_dim).astype(bf16)
    kh = k.reshape(Lk, num_heads, head_dim).astype(bf16)
    vh = v.reshape(Lk, num_heads, head_dim).astype(bf16)

    # batched scores over heads: (H, tq, Lk), f32 accumulation on the MXU
    s = jnp.einsum("qhd,khd->hqk", qh, kh, preferred_element_type=f32)
    bias = jnp.where(mask > 0, jnp.float32(0.0), jnp.float32(-1e9))    # (tq, Lk)
    s = s + bias[None, :, :]
    s = s - jnp.max(s, axis=-1, keepdims=True)
    p = jnp.exp(s)
    p = p * pl.reciprocal(jnp.sum(p, axis=-1, keepdims=True), approx=True)

    # batched context: (tq, H, head_dim) -> (tq, E) (= head concat order)
    ctx = jnp.einsum("hqk,khd->qhd", p.astype(bf16), vh,
                     preferred_element_type=f32)
    attn = ctx.reshape(tq, E).astype(bf16)

    out = jnp.dot(attn, wo, preferred_element_type=f32) + bo
    return out + xq                                                    # residual


def _ln(x, gamma, beta, eps):
    """LayerNorm over last dim, f32 math."""
    mean = jnp.mean(x, axis=-1, keepdims=True)
    c = x - mean
    var = jnp.mean(c * c, axis=-1, keepdims=True)
    return c * jax.lax.rsqrt(var + jnp.float32(eps)) * gamma + beta


# ----------------------------------------------------------------------------
# Fused decoder-layer kernel (one (batch, q-tile) per grid step)
# ----------------------------------------------------------------------------

def _decoder_layer_kernel(num_heads, head_dim, eps,
                          xq_ref, xfull_ref, enc_ref,
                          smask_ref, emask_ref, npm_ref,
                          swq, sbq, skv, sbkv, swo, sbo,
                          ln1_g, ln1_b,
                          cwq, cbq, ckv, cbkv, cwo, cbo,
                          ln2_g, ln2_b,
                          fw1, fb1, fw2, fb2,
                          ln3_g, ln3_b,
                          o_ref):
    f32, bf16 = jnp.float32, jnp.bfloat16

    xq = xq_ref[0].astype(f32)        # (tq, E)  query-tile of decoder input
    npm = npm_ref[0]                  # (tq, 1)  f32, broadcast against (tq, E)

    # -- masked self-attention (K/V from full decoder seq) -> LN -> * npm -----
    h = _attention_block(xq, xfull_ref[0], smask_ref[0],
                         swq[...], sbq[...], skv[...], sbkv[...],
                         swo[...], sbo[...], num_heads, head_dim)
    x1 = _ln(h, ln1_g[...], ln1_b[...], eps) * npm

    # -- cross-attention over encoder output -> LN -> * npm -------------------
    h = _attention_block(x1, enc_ref[0], emask_ref[0],
                         cwq[...], cbq[...], ckv[...], cbkv[...],
                         cwo[...], cbo[...], num_heads, head_dim)
    x2 = _ln(h, ln2_g[...], ln2_b[...], eps) * npm

    # -- feed-forward (Linear -> ReLU -> Linear) -> LN -> * npm ---------------
    hid = jnp.dot(x2.astype(bf16), fw1[...], preferred_element_type=f32) + fb1[...]
    hid = jnp.maximum(hid, 0.0)
    y = jnp.dot(hid.astype(bf16), fw2[...], preferred_element_type=f32) + fb2[...]
    x3 = _ln(y + x2, ln3_g[...], ln3_b[...], eps) * npm

    o_ref[0] = x3.astype(o_ref.dtype)


# ----------------------------------------------------------------------------
# Wrapper: one pallas_call for the whole layer
# ----------------------------------------------------------------------------

def decoder_layer(params, x, attention_mask, enc_x, enc_mask, non_pad_mask,
                  num_heads, eps=1e-5):
    B, Lq, E = x.shape
    Lk = enc_x.shape[1]
    F = params["ff"]["w1"].shape[1]
    head_dim = E // num_heads
    scale = 1.0 / sqrt(head_dim)

    f32, bf16 = jnp.float32, jnp.bfloat16

    # ---- query-tile size: whole seq if small, else a 256/128 multiple -------
    if Lq <= 256:
        tq = Lq
    elif Lq % 256 == 0:
        tq = 256
    elif Lq % 128 == 0:
        tq = 128
    else:
        tq = Lq   # TODO(synk): pad Lq for unaligned lengths instead
    n_qt = Lq // tq

    # ---- boundary casts (halve activation / mask DMA bytes) -----------------
    x_b = x.astype(bf16)
    enc_b = enc_x.astype(bf16)
    self_mask = attention_mask.astype(bf16)      # 0/1 exact in bf16
    enc_mask_b = enc_mask.astype(bf16)
    npm = non_pad_mask.astype(f32)               # (B, Lq, 1)

    def prep_mha(p):
        # fold 1/sqrt(head_dim) into q projection; fuse K/V weights (E, 2E)
        wq = (p["wq"] * scale).astype(bf16)
        bq = (p["bq"] * scale).astype(f32)
        wkv = jnp.concatenate([p["wk"], p["wv"]], axis=1).astype(bf16)
        bkv = jnp.concatenate([p["bk"], p["bv"]], axis=1).astype(f32)
        return [wq, bq, wkv, bkv, p["wo"].astype(bf16), p["bo"].astype(f32)]

    ffp = params["ff"]
    inputs = (
        [x_b, x_b, enc_b, self_mask, enc_mask_b, npm]
        + prep_mha(params["mask_attention"])
        + [params["ln1_g"].astype(f32), params["ln1_b"].astype(f32)]
        + prep_mha(params["attention"])
        + [params["ln2_g"].astype(f32), params["ln2_b"].astype(f32)]
        + [ffp["w1"].astype(bf16), ffp["b1"].astype(f32),
           ffp["w2"].astype(bf16), ffp["b2"].astype(f32)]
        + [params["ln3_g"].astype(f32), params["ln3_b"].astype(f32)]
    )

    # ---- BlockSpecs ----------------------------------------------------------
    def qtile(shape):        # tiles over (batch, q-tile)
        return pl.BlockSpec(shape, lambda b, t: (b, t, 0))

    def perbatch(shape):     # full-sequence per-batch blocks (K/V sources)
        return pl.BlockSpec(shape, lambda b, t: (b, 0, 0))

    def const(shape):        # grid-invariant weights: single resident buffer
        return pl.BlockSpec(shape, lambda b, t: (0,) * len(shape),
                            pipeline_mode=pl.Buffered(1))

    mha_specs = [const((E, E)), const((1, E)),       # wq, bq
                 const((E, 2 * E)), const((1, 2 * E)),  # fused wkv, bkv
                 const((E, E)), const((1, E))]       # wo, bo
    ln_specs = [const((1, E)), const((1, E))]

    in_specs = (
        [qtile((1, tq, E)), perbatch((1, Lq, E)), perbatch((1, Lk, E)),
         qtile((1, tq, Lq)), qtile((1, tq, Lk)), qtile((1, tq, 1))]
        + mha_specs + ln_specs
        + mha_specs + ln_specs
        + [const((E, F)), const((1, F)), const((F, E)), const((1, E))]
        + ln_specs
    )

    # ---- explicit VMEM budget (weights resident + double-buffered blocks) ---
    weight_bytes = sum(int(a.size) * a.dtype.itemsize for a in inputs[6:])
    act_block_bytes = ((tq * E + Lq * E + Lk * E + tq * Lq + tq * Lk) * 2
                       + tq * 4 + tq * E * x.dtype.itemsize)
    score_bytes = 2 * num_heads * tq * max(Lq, Lk) * 4   # scores + probs (f32)
    vmem_est = 2 * act_block_bytes + weight_bytes + score_bytes + (8 << 20)
    vmem_limit = int(min(max(vmem_est, 32 << 20), 64 << 20))

    # ---- advisory cost estimate for XLA's scheduler --------------------------
    def attn_flops(lq, lk):
        return 2 * lq * E * E + 4 * lk * E * E + 4 * lq * lk * E + 2 * lq * E * E
    flops = B * (attn_flops(Lq, Lq) + attn_flops(Lq, Lk) + 4 * Lq * E * F)
    transcendentals = B * num_heads * (Lq * Lq + Lq * Lk)
    bytes_accessed = (sum(int(a.size) * a.dtype.itemsize for a in inputs)
                      + B * Lq * E * x.dtype.itemsize)
    cost = pl.CostEstimate(flops=int(flops),
                           transcendentals=int(transcendentals),
                           bytes_accessed=int(bytes_accessed))

    kernel = functools.partial(_decoder_layer_kernel, num_heads, head_dim, eps)
    return pl.pallas_call(
        kernel,
        out_shape=jax.ShapeDtypeStruct((B, Lq, E), x.dtype),
        grid=(B, n_qt),
        in_specs=in_specs,
        out_specs=qtile((1, tq, E)),
        compiler_params=pltpu.CompilerParams(
            dimension_semantics=("parallel", "parallel"),
            vmem_limit_bytes=vmem_limit),
        cost_estimate=cost,
    )(*inputs)


# ----------------------------------------------------------------------------
# Pure-JAX reference (f32) for a correctness check
# ----------------------------------------------------------------------------

def reference_decoder_layer(params, x, attention_mask, enc_x, enc_mask,
                            non_pad_mask, num_heads, eps=1e-5):
    def mha(xq, xkv, mask, p):
        B, Lq, E = xq.shape
        Lk = xkv.shape[1]
        dh = E // num_heads
        q = xq @ p["wq"] + p["bq"]
        k = xkv @ p["wk"] + p["bk"]
        v = xkv @ p["wv"] + p["bv"]
        q = q.reshape(B, Lq, num_heads, dh).transpose(0, 2, 1, 3)
        k = k.reshape(B, Lk, num_heads, dh).transpose(0, 2, 1, 3)
        v = v.reshape(B, Lk, num_heads, dh).transpose(0, 2, 1, 3)
        s = jnp.einsum("bhqd,bhkd->bhqk", q, k) / jnp.sqrt(jnp.float32(dh))
        s = jnp.where(mask[:, None] > 0, s, -1e9)
        a = jax.nn.softmax(s, axis=-1)
        ctx = jnp.einsum("bhqk,bhkd->bhqd", a, v)
        ctx = ctx.transpose(0, 2, 1, 3).reshape(B, Lq, E)
        return ctx @ p["wo"] + p["bo"] + xq

    def ln(x, g, b):
        m = x.mean(-1, keepdims=True)
        v = ((x - m) ** 2).mean(-1, keepdims=True)
        return (x - m) / jnp.sqrt(v + eps) * g + b

    h = mha(x, x, attention_mask, params["mask_attention"])
    x = ln(h, params["ln1_g"], params["ln1_b"]) * non_pad_mask
    h = mha(x, enc_x, enc_mask, params["attention"])
    x = ln(h, params["ln2_g"], params["ln2_b"]) * non_pad_mask
    ffp = params["ff"]
    h = jnp.maximum(x @ ffp["w1"] + ffp["b1"], 0.0) @ ffp["w2"] + ffp["b2"] + x
    x = ln(h, params["ln3_g"], params["ln3_b"]) * non_pad_mask
    return x


# ----------------------------------------------------------------------------
# Deterministic parameter construction
# ----------------------------------------------------------------------------

def init_params(key, emb_dim, ff_dim):
    def lin(k, fan_in, fan_out):
        kw, kb = jax.random.split(k)
        w = jax.random.normal(kw, (fan_in, fan_out), jnp.float32) * 0.05
        b = jax.random.normal(kb, (1, fan_out), jnp.float32) * 0.01
        return w, b

    keys = jax.random.split(key, 12)

    def mha_params(ks):
        wq, bq = lin(ks[0], emb_dim, emb_dim)
        wk, bk = lin(ks[1], emb_dim, emb_dim)
        wv, bv = lin(ks[2], emb_dim, emb_dim)
        wo, bo = lin(ks[3], emb_dim, emb_dim)
        return dict(wq=wq, bq=bq, wk=wk, bk=bk, wv=wv, bv=bv, wo=wo, bo=bo)

    w1, b1 = lin(keys[8], emb_dim, ff_dim)
    w2, b2 = lin(keys[9], ff_dim, emb_dim)

    ones = jnp.ones((1, emb_dim), jnp.float32)
    zeros = jnp.zeros((1, emb_dim), jnp.float32)
    return {
        "mask_attention": mha_params(keys[0:4]),
        "attention": mha_params(keys[4:8]),
        "ff": dict(w1=w1, b1=b1, w2=w2, b2=b2),
        "ln1_g": ones, "ln1_b": zeros,
        "ln2_g": ones, "ln2_b": zeros,
        "ln3_g": ones, "ln3_b": zeros,
    }


# ----------------------------------------------------------------------------
# Demo
# ----------------------------------------------------------------------------

if __name__ == "__main__":
    B, L_DEC, L_ENC = 2, 8, 8
    EMB, HEADS, FF = 32, 4, 64

    key = jax.random.PRNGKey(0)
    k_x, k_enc, k_p = jax.random.split(key, 3)

    x = jax.random.normal(k_x, (B, L_DEC, EMB), jnp.float32)
    enc_x = jax.random.normal(k_enc, (B, L_ENC, EMB), jnp.float32)

    # causal self-attention mask (1 = attend), full encoder mask
    causal = jnp.tril(jnp.ones((L_DEC, L_DEC), jnp.float32))
    attention_mask = jnp.broadcast_to(causal, (B, L_DEC, L_DEC))
    enc_mask = jnp.ones((B, L_DEC, L_ENC), jnp.float32)

    # non-pad mask: zero out the last decoder position of batch 1
    non_pad_mask = jnp.ones((B, L_DEC, 1), jnp.float32)
    non_pad_mask = non_pad_mask.at[1, -1, 0].set(0.0)

    params = init_params(k_p, EMB, FF)

    out = decoder_layer(params, x, attention_mask, enc_x, enc_mask,
                        non_pad_mask, HEADS)
    out = jax.block_until_ready(out)

    assert out.shape == (B, L_DEC, EMB)
    assert bool(jnp.all(jnp.isfinite(out)))
    # masked (padded) positions must be exactly zero after the final mask mul
    assert float(jnp.abs(out[1, -1]).max()) == 0.0

    # loose tolerance vs f32 reference (kernel uses bf16 boundary activations,
    # bf16 MXU inputs and approx reciprocal; LN output is unit-scale so 0.2
    # abs is a safe bound)
    ref = reference_decoder_layer(params, x, attention_mask, enc_x, enc_mask,
                                  non_pad_mask, HEADS)
    max_err = float(jnp.max(jnp.abs(out - ref)))
    assert max_err < 0.2, f"max_err={max_err}"

    print("KERNEL_OK")
</pallas_src>

<mosaic_0001>
module attributes {stable_mosaic.version = 11 : i64} {
  func.func @_decoder_layer_kernel(%arg0: i32, %arg1: i32, %arg2: memref<1x8x32xbf16, #tpu.memory_space<vmem>>, %arg3: memref<1x8x32xbf16, #tpu.memory_space<vmem>>, %arg4: memref<1x8x32xbf16, #tpu.memory_space<vmem>>, %arg5: memref<1x8x8xbf16, #tpu.memory_space<vmem>>, %arg6: memref<1x8x8xbf16, #tpu.memory_space<vmem>>, %arg7: memref<1x8x1xf32, #tpu.memory_space<vmem>>, %arg8: memref<32x32xbf16, #tpu.memory_space<vmem>>, %arg9: memref<1x32xf32, #tpu.memory_space<vmem>>, %arg10: memref<32x64xbf16, #tpu.memory_space<vmem>>, %arg11: memref<1x64xf32, #tpu.memory_space<vmem>>, %arg12: memref<32x32xbf16, #tpu.memory_space<vmem>>, %arg13: memref<1x32xf32, #tpu.memory_space<vmem>>, %arg14: memref<1x32xf32, #tpu.memory_space<vmem>>, %arg15: memref<1x32xf32, #tpu.memory_space<vmem>>, %arg16: memref<32x32xbf16, #tpu.memory_space<vmem>>, %arg17: memref<1x32xf32, #tpu.memory_space<vmem>>, %arg18: memref<32x64xbf16, #tpu.memory_space<vmem>>, %arg19: memref<1x64xf32, #tpu.memory_space<vmem>>, %arg20: memref<32x32xbf16, #tpu.memory_space<vmem>>, %arg21: memref<1x32xf32, #tpu.memory_space<vmem>>, %arg22: memref<1x32xf32, #tpu.memory_space<vmem>>, %arg23: memref<1x32xf32, #tpu.memory_space<vmem>>, %arg24: memref<32x64xbf16, #tpu.memory_space<vmem>>, %arg25: memref<1x64xf32, #tpu.memory_space<vmem>>, %arg26: memref<64x32xbf16, #tpu.memory_space<vmem>>, %arg27: memref<1x32xf32, #tpu.memory_space<vmem>>, %arg28: memref<1x32xf32, #tpu.memory_space<vmem>>, %arg29: memref<1x32xf32, #tpu.memory_space<vmem>>, %arg30: memref<1x8x32xf32, #tpu.memory_space<vmem>>) attributes {dimension_semantics = [#tpu.dimension_semantics<parallel>, #tpu.dimension_semantics<parallel>], iteration_bounds = array<i64: 2, 1>, scalar_prefetch = 0 : i64, scratch_operands = 0 : i64, tpu.core_type = #tpu.core_type<tc>, window_params = [{transform_indices = @transform_0, window_bounds = array<i64: 1, 8, 32>}, {transform_indices = @transform_1, window_bounds = array<i64: 1, 8, 32>}, {transform_indices = @transform_2, window_bounds = array<i64: 1, 8, 32>}, {transform_indices = @transform_3, window_bounds = array<i64: 1, 8, 8>}, {transform_indices = @transform_4, window_bounds = array<i64: 1, 8, 8>}, {transform_indices = @transform_5, window_bounds = array<i64: 1, 8, 1>}, {pipeline_mode = #tpu.pipeline_mode<synchronous>, transform_indices = @transform_6, window_bounds = array<i64: 32, 32>}, {pipeline_mode = #tpu.pipeline_mode<synchronous>, transform_indices = @transform_7, window_bounds = array<i64: 1, 32>}, {pipeline_mode = #tpu.pipeline_mode<synchronous>, transform_indices = @transform_8, window_bounds = array<i64: 32, 64>}, {pipeline_mode = #tpu.pipeline_mode<synchronous>, transform_indices = @transform_9, window_bounds = array<i64: 1, 64>}, {pipeline_mode = #tpu.pipeline_mode<synchronous>, transform_indices = @transform_10, window_bounds = array<i64: 32, 32>}, {pipeline_mode = #tpu.pipeline_mode<synchronous>, transform_indices = @transform_11, window_bounds = array<i64: 1, 32>}, {pipeline_mode = #tpu.pipeline_mode<synchronous>, transform_indices = @transform_12, window_bounds = array<i64: 1, 32>}, {pipeline_mode = #tpu.pipeline_mode<synchronous>, transform_indices = @transform_13, window_bounds = array<i64: 1, 32>}, {pipeline_mode = #tpu.pipeline_mode<synchronous>, transform_indices = @transform_14, window_bounds = array<i64: 32, 32>}, {pipeline_mode = #tpu.pipeline_mode<synchronous>, transform_indices = @transform_15, window_bounds = array<i64: 1, 32>}, {pipeline_mode = #tpu.pipeline_mode<synchronous>, transform_indices = @transform_16, window_bounds = array<i64: 32, 64>}, {pipeline_mode = #tpu.pipeline_mode<synchronous>, transform_indices = @transform_17, window_bounds = array<i64: 1, 64>}, {pipeline_mode = #tpu.pipeline_mode<synchronous>, transform_indices = @transform_18, window_bounds = array<i64: 32, 32>}, {pipeline_mode = #tpu.pipeline_mode<synchronous>, transform_indices = @transform_19, window_bounds = array<i64: 1, 32>}, {pipeline_mode = #tpu.pipeline_mode<synchronous>, transform_indices = @transform_20, window_bounds = array<i64: 1, 32>}, {pipeline_mode = #tpu.pipeline_mode<synchronous>, transform_indices = @transform_21, window_bounds = array<i64: 1, 32>}, {pipeline_mode = #tpu.pipeline_mode<synchronous>, transform_indices = @transform_22, window_bounds = array<i64: 32, 64>}, {pipeline_mode = #tpu.pipeline_mode<synchronous>, transform_indices = @transform_23, window_bounds = array<i64: 1, 64>}, {pipeline_mode = #tpu.pipeline_mode<synchronous>, transform_indices = @transform_24, window_bounds = array<i64: 64, 32>}, {pipeline_mode = #tpu.pipeline_mode<synchronous>, transform_indices = @transform_25, window_bounds = array<i64: 1, 32>}, {pipeline_mode = #tpu.pipeline_mode<synchronous>, transform_indices = @transform_26, window_bounds = array<i64: 1, 32>}, {pipeline_mode = #tpu.pipeline_mode<synchronous>, transform_indices = @transform_27, window_bounds = array<i64: 1, 32>}, {transform_indices = @transform_28, window_bounds = array<i64: 1, 8, 32>}]} {
    %c0 = arith.constant 0 : index
    %c0_0 = arith.constant 0 : index
    %c0_1 = arith.constant 0 : index
    %0 = vector.load %arg2[%c0, %c0_0, %c0_1] : memref<1x8x32xbf16, #tpu.memory_space<vmem>>, vector<1x8x32xbf16>
    %1 = vector.shape_cast %0 : vector<1x8x32xbf16> to vector<8x32xbf16>
    %2 = arith.extf %1 : vector<8x32xbf16> to vector<8x32xf32>
    %c0_2 = arith.constant 0 : index
    %c0_3 = arith.constant 0 : index
    %c0_4 = arith.constant 0 : index
    %3 = vector.load %arg7[%c0_2, %c0_3, %c0_4] : memref<1x8x1xf32, #tpu.memory_space<vmem>>, vector<1x8x1xf32>
    %4 = vector.shape_cast %3 : vector<1x8x1xf32> to vector<8x1xf32>
    %c0_5 = arith.constant 0 : index
    %c0_6 = arith.constant 0 : index
    %c0_7 = arith.constant 0 : index
    %5 = vector.load %arg3[%c0_5, %c0_6, %c0_7] : memref<1x8x32xbf16, #tpu.memory_space<vmem>>, vector<1x8x32xbf16>
    %6 = vector.shape_cast %5 : vector<1x8x32xbf16> to vector<8x32xbf16>
    %c0_8 = arith.constant 0 : index
    %c0_9 = arith.constant 0 : index
    %c0_10 = arith.constant 0 : index
    %7 = vector.load %arg5[%c0_8, %c0_9, %c0_10] : memref<1x8x8xbf16, #tpu.memory_space<vmem>>, vector<1x8x8xbf16>
    %8 = vector.shape_cast %7 : vector<1x8x8xbf16> to vector<8x8xbf16>
    %c0_11 = arith.constant 0 : index
    %c0_12 = arith.constant 0 : index
    %9 = vector.load %arg8[%c0_11, %c0_12] : memref<32x32xbf16, #tpu.memory_space<vmem>>, vector<32x32xbf16>
    %c0_13 = arith.constant 0 : index
    %c0_14 = arith.constant 0 : index
    %10 = vector.load %arg9[%c0_13, %c0_14] : memref<1x32xf32, #tpu.memory_space<vmem>>, vector<1x32xf32>
    %c0_15 = arith.constant 0 : index
    %c0_16 = arith.constant 0 : index
    %11 = vector.load %arg10[%c0_15, %c0_16] : memref<32x64xbf16, #tpu.memory_space<vmem>>, vector<32x64xbf16>
    %c0_17 = arith.constant 0 : index
    %c0_18 = arith.constant 0 : index
    %12 = vector.load %arg11[%c0_17, %c0_18] : memref<1x64xf32, #tpu.memory_space<vmem>>, vector<1x64xf32>
    %c0_19 = arith.constant 0 : index
    %c0_20 = arith.constant 0 : index
    %13 = vector.load %arg12[%c0_19, %c0_20] : memref<32x32xbf16, #tpu.memory_space<vmem>>, vector<32x32xbf16>
    %c0_21 = arith.constant 0 : index
    %c0_22 = arith.constant 0 : index
    %14 = vector.load %arg13[%c0_21, %c0_22] : memref<1x32xf32, #tpu.memory_space<vmem>>, vector<1x32xf32>
    %15 = arith.truncf %2 : vector<8x32xf32> to vector<8x32xbf16>
    %cst = arith.constant dense<0.000000e+00> : vector<8x32xf32>
    %16 = tpu.matmul %15, %9, %cst {dimension_numbers = #tpu.dot_dimension_numbers<[1], [0], [0], [1], [0, 0, 1, 1], [], []>} : vector<8x32xbf16>, vector<32x32xbf16>, vector<8x32xf32> -> vector<8x32xf32>
    %17 = vector.broadcast %10 : vector<1x32xf32> to vector<8x32xf32>
    %18 = arith.addf %16, %17 : vector<8x32xf32>
    %cst_23 = arith.constant dense<0.000000e+00> : vector<8x64xf32>
    %19 = tpu.matmul %6, %11, %cst_23 {dimension_numbers = #tpu.dot_dimension_numbers<[1], [0], [0], [1], [0, 0, 1, 1], [], []>} : vector<8x32xbf16>, vector<32x64xbf16>, vector<8x64xf32> -> vector<8x64xf32>
    %20 = vector.broadcast %12 : vector<1x64xf32> to vector<8x64xf32>
    %21 = arith.addf %19, %20 : vector<8x64xf32>
    %22 = vector.extract_strided_slice %21 {offsets = [0, 0], sizes = [8, 32], strides = [1, 1]} : vector<8x64xf32> to vector<8x32xf32>
    %23 = vector.extract_strided_slice %21 {offsets = [0, 32], sizes = [8, 32], strides = [1, 1]} : vector<8x64xf32> to vector<8x32xf32>
    %24 = vector.shape_cast %18 : vector<8x32xf32> to vector<8x4x8xf32>
    %25 = arith.truncf %24 : vector<8x4x8xf32> to vector<8x4x8xbf16>
    %26 = vector.shape_cast %22 : vector<8x32xf32> to vector<8x4x8xf32>
    %27 = arith.truncf %26 : vector<8x4x8xf32> to vector<8x4x8xbf16>
    %28 = vector.shape_cast %23 : vector<8x32xf32> to vector<8x4x8xf32>
    %29 = arith.truncf %28 : vector<8x4x8xf32> to vector<8x4x8xbf16>
    "tpu.trace_start"() <{level = 10 : i32, message = "qhd,khd->hqk"}> : () -> ()
    %cst_24 = arith.constant dense<0.000000e+00> : vector<4x8x8xf32>
    %30 = tpu.matmul %25, %27, %cst_24 {dimension_numbers = #tpu.dot_dimension_numbers<[2], [2], [0], [0], [0, 1, 0, 0, 1, 0], [1], [1]>} : vector<8x4x8xbf16>, vector<8x4x8xbf16>, vector<4x8x8xf32> -> vector<4x8x8xf32>
    %cst_25 = arith.constant 0.000000e+00 : bf16
    "tpu.trace_stop"() : () -> ()
    %31 = vector.broadcast %cst_25 : bf16 to vector<8x8xbf16>
    %32 = arith.cmpf ogt, %8, %31 : vector<8x8xbf16>
    %cst_26 = arith.constant 0.000000e+00 : f32
    %cst_27 = arith.constant -1.000000e+09 : f32
    %33 = vector.broadcast %cst_26 : f32 to vector<8x8xf32>
    %34 = vector.broadcast %cst_27 : f32 to vector<8x8xf32>
    %35 = arith.select %32, %33, %34 : vector<8x8xi1>, vector<8x8xf32>
    %36 = vector.shape_cast %35 : vector<8x8xf32> to vector<1x8x8xf32>
    %37 = vector.broadcast %36 : vector<1x8x8xf32> to vector<4x8x8xf32>
    %38 = arith.addf %30, %37 : vector<4x8x8xf32>
    %cst_28 = arith.constant dense<0xFF800000> : vector<4x8xf32>
    %39 = vector.multi_reduction <maximumf>, %38, %cst_28 [2] : vector<4x8x8xf32> to vector<4x8xf32>
    %40 = vector.shape_cast %39 : vector<4x8xf32> to vector<4x8x1xf32>
    %41 = vector.broadcast %40 : vector<4x8x1xf32> to vector<4x8x8xf32>
    %42 = arith.subf %38, %41 : vector<4x8x8xf32>
    %43 = math.exp %42 : vector<4x8x8xf32>
    %cst_29 = arith.constant dense<0.000000e+00> : vector<4x8xf32>
    %44 = vector.multi_reduction <add>, %43, %cst_29 [2] : vector<4x8x8xf32> to vector<4x8xf32>
    %45 = vector.shape_cast %44 : vector<4x8xf32> to vector<4x8x1xf32>
    %46 = tpu.reciprocal %45 {approx = true} : vector<4x8x1xf32> -> vector<4x8x1xf32>
    %47 = vector.broadcast %46 : vector<4x8x1xf32> to vector<4x8x8xf32>
    %48 = arith.mulf %43, %47 : vector<4x8x8xf32>
    %49 = arith.truncf %48 : vector<4x8x8xf32> to vector<4x8x8xbf16>
    "tpu.trace_start"() <{level = 10 : i32, message = "hqk,khd->qhd"}> : () -> ()
    %cst_30 = arith.constant dense<0.000000e+00> : vector<4x8x8xf32>
    %50 = tpu.matmul %29, %49, %cst_30 {dimension_numbers = #tpu.dot_dimension_numbers<[0], [2], [2], [1], [0, 1, 0, 2, 1, 1], [1], [0]>} : vector<8x4x8xbf16>, vector<4x8x8xbf16>, vector<4x8x8xf32> -> vector<4x8x8xf32>
    %51 = tpu.transpose %50, [2, 0, 1] : vector<4x8x8xf32> -> vector<8x4x8xf32>
    "tpu.trace_stop"() : () -> ()
    %52 = vector.shape_cast %51 : vector<8x4x8xf32> to vector<8x32xf32>
    %53 = arith.truncf %52 : vector<8x32xf32> to vector<8x32xbf16>
    %cst_31 = arith.constant dense<0.000000e+00> : vector<8x32xf32>
    %54 = tpu.matmul %53, %13, %cst_31 {dimension_numbers = #tpu.dot_dimension_numbers<[1], [0], [0], [1], [0, 0, 1, 1], [], []>} : vector<8x32xbf16>, vector<32x32xbf16>, vector<8x32xf32> -> vector<8x32xf32>
    %55 = vector.broadcast %14 : vector<1x32xf32> to vector<8x32xf32>
    %56 = arith.addf %54, %55 : vector<8x32xf32>
    %57 = arith.addf %56, %2 : vector<8x32xf32>
    %c0_32 = arith.constant 0 : index
    %c0_33 = arith.constant 0 : index
    %58 = vector.load %arg14[%c0_32, %c0_33] : memref<1x32xf32, #tpu.memory_space<vmem>>, vector<1x32xf32>
    %c0_34 = arith.constant 0 : index
    %c0_35 = arith.constant 0 : index
    %59 = vector.load %arg15[%c0_34, %c0_35] : memref<1x32xf32, #tpu.memory_space<vmem>>, vector<1x32xf32>
    %cst_36 = arith.constant dense<0.000000e+00> : vector<8xf32>
    %60 = vector.multi_reduction <add>, %57, %cst_36 [1] : vector<8x32xf32> to vector<8xf32>
    %61 = vector.shape_cast %60 : vector<8xf32> to vector<8x1xf32>
    %cst_37 = arith.constant 3.200000e+01 : f32
    %62 = vector.broadcast %cst_37 : f32 to vector<8x1xf32>
    %63 = arith.divf %61, %62 : vector<8x1xf32>
    %64 = vector.broadcast %63 : vector<8x1xf32> to vector<8x32xf32>
    %65 = arith.subf %57, %64 : vector<8x32xf32>
    %66 = arith.mulf %65, %65 : vector<8x32xf32>
    %cst_38 = arith.constant dense<0.000000e+00> : vector<8xf32>
    %67 = vector.multi_reduction <add>, %66, %cst_38 [1] : vector<8x32xf32> to vector<8xf32>
    %68 = vector.shape_cast %67 : vector<8xf32> to vector<8x1xf32>
    %cst_39 = arith.constant 3.200000e+01 : f32
    %69 = vector.broadcast %cst_39 : f32 to vector<8x1xf32>
    %70 = arith.divf %68, %69 : vector<8x1xf32>
    %cst_40 = arith.constant 9.99999974E-6 : f32
    %71 = vector.broadcast %cst_40 : f32 to vector<8x1xf32>
    %72 = arith.addf %70, %71 : vector<8x1xf32>
    %73 = math.rsqrt %72 : vector<8x1xf32>
    %74 = vector.broadcast %73 : vector<8x1xf32> to vector<8x32xf32>
    %75 = arith.mulf %65, %74 : vector<8x32xf32>
    %76 = vector.broadcast %58 : vector<1x32xf32> to vector<8x32xf32>
    %77 = arith.mulf %75, %76 : vector<8x32xf32>
    %78 = vector.broadcast %59 : vector<1x32xf32> to vector<8x32xf32>
    %79 = arith.addf %77, %78 : vector<8x32xf32>
    %80 = vector.broadcast %4 : vector<8x1xf32> to vector<8x32xf32>
    %81 = arith.mulf %79, %80 : vector<8x32xf32>
    %c0_41 = arith.constant 0 : index
    %c0_42 = arith.constant 0 : index
    %c0_43 = arith.constant 0 : index
    %82 = vector.load %arg4[%c0_41, %c0_42, %c0_43] : memref<1x8x32xbf16, #tpu.memory_space<vmem>>, vector<1x8x32xbf16>
    %83 = vector.shape_cast %82 : vector<1x8x32xbf16> to vector<8x32xbf16>
    %c0_44 = arith.constant 0 : index
    %c0_45 = arith.constant 0 : index
    %c0_46 = arith.constant 0 : index
    %84 = vector.load %arg6[%c0_44, %c0_45, %c0_46] : memref<1x8x8xbf16, #tpu.memory_space<vmem>>, vector<1x8x8xbf16>
    %85 = vector.shape_cast %84 : vector<1x8x8xbf16> to vector<8x8xbf16>
    %c0_47 = arith.constant 0 : index
    %c0_48 = arith.constant 0 : index
    %86 = vector.load %arg16[%c0_47, %c0_48] : memref<32x32xbf16, #tpu.memory_space<vmem>>, vector<32x32xbf16>
    %c0_49 = arith.constant 0 : index
    %c0_50 = arith.constant 0 : index
    %87 = vector.load %arg17[%c0_49, %c0_50] : memref<1x32xf32, #tpu.memory_space<vmem>>, vector<1x32xf32>
    %c0_51 = arith.constant 0 : index
    %c0_52 = arith.constant 0 : index
    %88 = vector.load %arg18[%c0_51, %c0_52] : memref<32x64xbf16, #tpu.memory_space<vmem>>, vector<32x64xbf16>
    %c0_53 = arith.constant 0 : index
    %c0_54 = arith.constant 0 : index
    %89 = vector.load %arg19[%c0_53, %c0_54] : memref<1x64xf32, #tpu.memory_space<vmem>>, vector<1x64xf32>
    %c0_55 = arith.constant 0 : index
    %c0_56 = arith.constant 0 : index
    %90 = vector.load %arg20[%c0_55, %c0_56] : memref<32x32xbf16, #tpu.memory_space<vmem>>, vector<32x32xbf16>
    %c0_57 = arith.constant 0 : index
    %c0_58 = arith.constant 0 : index
    %91 = vector.load %arg21[%c0_57, %c0_58] : memref<1x32xf32, #tpu.memory_space<vmem>>, vector<1x32xf32>
    %92 = arith.truncf %81 : vector<8x32xf32> to vector<8x32xbf16>
    %cst_59 = arith.constant dense<0.000000e+00> : vector<8x32xf32>
    %93 = tpu.matmul %92, %86, %cst_59 {dimension_numbers = #tpu.dot_dimension_numbers<[1], [0], [0], [1], [0, 0, 1, 1], [], []>} : vector<8x32xbf16>, vector<32x32xbf16>, vector<8x32xf32> -> vector<8x32xf32>
    %94 = vector.broadcast %87 : vector<1x32xf32> to vector<8x32xf32>
    %95 = arith.addf %93, %94 : vector<8x32xf32>
    %cst_60 = arith.constant dense<0.000000e+00> : vector<8x64xf32>
    %96 = tpu.matmul %83, %88, %cst_60 {dimension_numbers = #tpu.dot_dimension_numbers<[1], [0], [0], [1], [0, 0, 1, 1], [], []>} : vector<8x32xbf16>, vector<32x64xbf16>, vector<8x64xf32> -> vector<8x64xf32>
    %97 = vector.broadcast %89 : vector<1x64xf32> to vector<8x64xf32>
    %98 = arith.addf %96, %97 : vector<8x64xf32>
    %99 = vector.extract_strided_slice %98 {offsets = [0, 0], sizes = [8, 32], strides = [1, 1]} : vector<8x64xf32> to vector<8x32xf32>
    %100 = vector.extract_strided_slice %98 {offsets = [0, 32], sizes = [8, 32], strides = [1, 1]} : vector<8x64xf32> to vector<8x32xf32>
    %101 = vector.shape_cast %95 : vector<8x32xf32> to vector<8x4x8xf32>
    %102 = arith.truncf %101 : vector<8x4x8xf32> to vector<8x4x8xbf16>
    %103 = vector.shape_cast %99 : vector<8x32xf32> to vector<8x4x8xf32>
    %104 = arith.truncf %103 : vector<8x4x8xf32> to vector<8x4x8xbf16>
    %105 = vector.shape_cast %100 : vector<8x32xf32> to vector<8x4x8xf32>
    %106 = arith.truncf %105 : vector<8x4x8xf32> to vector<8x4x8xbf16>
    "tpu.trace_start"() <{level = 10 : i32, message = "qhd,khd->hqk"}> : () -> ()
    %cst_61 = arith.constant dense<0.000000e+00> : vector<4x8x8xf32>
    %107 = tpu.matmul %102, %104, %cst_61 {dimension_numbers = #tpu.dot_dimension_numbers<[2], [2], [0], [0], [0, 1, 0, 0, 1, 0], [1], [1]>} : vector<8x4x8xbf16>, vector<8x4x8xbf16>, vector<4x8x8xf32> -> vector<4x8x8xf32>
    %cst_62 = arith.constant 0.000000e+00 : bf16
    "tpu.trace_stop"() : () -> ()
    %108 = vector.broadcast %cst_62 : bf16 to vector<8x8xbf16>
    %109 = arith.cmpf ogt, %85, %108 : vector<8x8xbf16>
    %cst_63 = arith.constant 0.000000e+00 : f32
    %cst_64 = arith.constant -1.000000e+09 : f32
    %110 = vector.broadcast %cst_63 : f32 to vector<8x8xf32>
    %111 = vector.broadcast %cst_64 : f32 to vector<8x8xf32>
    %112 = arith.select %109, %110, %111 : vector<8x8xi1>, vector<8x8xf32>
    %113 = vector.shape_cast %112 : vector<8x8xf32> to vector<1x8x8xf32>
    %114 = vector.broadcast %113 : vector<1x8x8xf32> to vector<4x8x8xf32>
    %115 = arith.addf %107, %114 : vector<4x8x8xf32>
    %cst_65 = arith.constant dense<0xFF800000> : vector<4x8xf32>
    %116 = vector.multi_reduction <maximumf>, %115, %cst_65 [2] : vector<4x8x8xf32> to vector<4x8xf32>
    %117 = vector.shape_cast %116 : vector<4x8xf32> to vector<4x8x1xf32>
    %118 = vector.broadcast %117 : vector<4x8x1xf32> to vector<4x8x8xf32>
    %119 = arith.subf %115, %118 : vector<4x8x8xf32>
    %120 = math.exp %119 : vector<4x8x8xf32>
    %cst_66 = arith.constant dense<0.000000e+00> : vector<4x8xf32>
    %121 = vector.multi_reduction <add>, %120, %cst_66 [2] : vector<4x8x8xf32> to vector<4x8xf32>
    %122 = vector.shape_cast %121 : vector<4x8xf32> to vector<4x8x1xf32>
    %123 = tpu.reciprocal %122 {approx = true} : vector<4x8x1xf32> -> vector<4x8x1xf32>
    %124 = vector.broadcast %123 : vector<4x8x1xf32> to vector<4x8x8xf32>
    %125 = arith.mulf %120, %124 : vector<4x8x8xf32>
    %126 = arith.truncf %125 : vector<4x8x8xf32> to vector<4x8x8xbf16>
    "tpu.trace_start"() <{level = 10 : i32, message = "hqk,khd->qhd"}> : () -> ()
    %cst_67 = arith.constant dense<0.000000e+00> : vector<4x8x8xf32>
    %127 = tpu.matmul %106, %126, %cst_67 {dimension_numbers = #tpu.dot_dimension_numbers<[0], [2], [2], [1], [0, 1, 0, 2, 1, 1], [1], [0]>} : vector<8x4x8xbf16>, vector<4x8x8xbf16>, vector<4x8x8xf32> -> vector<4x8x8xf32>
    %128 = tpu.transpose %127, [2, 0, 1] : vector<4x8x8xf32> -> vector<8x4x8xf32>
    "tpu.trace_stop"() : () -> ()
    %129 = vector.shape_cast %128 : vector<8x4x8xf32> to vector<8x32xf32>
    %130 = arith.truncf %129 : vector<8x32xf32> to vector<8x32xbf16>
    %cst_68 = arith.constant dense<0.000000e+00> : vector<8x32xf32>
    %131 = tpu.matmul %130, %90, %cst_68 {dimension_numbers = #tpu.dot_dimension_numbers<[1], [0], [0], [1], [0, 0, 1, 1], [], []>} : vector<8x32xbf16>, vector<32x32xbf16>, vector<8x32xf32> -> vector<8x32xf32>
    %132 = vector.broadcast %91 : vector<1x32xf32> to vector<8x32xf32>
    %133 = arith.addf %131, %132 : vector<8x32xf32>
    %134 = arith.addf %133, %81 : vector<8x32xf32>
    %c0_69 = arith.constant 0 : index
    %c0_70 = arith.constant 0 : index
    %135 = vector.load %arg22[%c0_69, %c0_70] : memref<1x32xf32, #tpu.memory_space<vmem>>, vector<1x32xf32>
    %c0_71 = arith.constant 0 : index
    %c0_72 = arith.constant 0 : index
    %136 = vector.load %arg23[%c0_71, %c0_72] : memref<1x32xf32, #tpu.memory_space<vmem>>, vector<1x32xf32>
    %cst_73 = arith.constant dense<0.000000e+00> : vector<8xf32>
    %137 = vector.multi_reduction <add>, %134, %cst_73 [1] : vector<8x32xf32> to vector<8xf32>
    %138 = vector.shape_cast %137 : vector<8xf32> to vector<8x1xf32>
    %cst_74 = arith.constant 3.200000e+01 : f32
    %139 = vector.broadcast %cst_74 : f32 to vector<8x1xf32>
    %140 = arith.divf %138, %139 : vector<8x1xf32>
    %141 = vector.broadcast %140 : vector<8x1xf32> to vector<8x32xf32>
    %142 = arith.subf %134, %141 : vector<8x32xf32>
    %143 = arith.mulf %142, %142 : vector<8x32xf32>
    %cst_75 = arith.constant dense<0.000000e+00> : vector<8xf32>
    %144 = vector.multi_reduction <add>, %143, %cst_75 [1] : vector<8x32xf32> to vector<8xf32>
    %145 = vector.shape_cast %144 : vector<8xf32> to vector<8x1xf32>
    %cst_76 = arith.constant 3.200000e+01 : f32
    %146 = vector.broadcast %cst_76 : f32 to vector<8x1xf32>
    %147 = arith.divf %145, %146 : vector<8x1xf32>
    %cst_77 = arith.constant 9.99999974E-6 : f32
    %148 = vector.broadcast %cst_77 : f32 to vector<8x1xf32>
    %149 = arith.addf %147, %148 : vector<8x1xf32>
    %150 = math.rsqrt %149 : vector<8x1xf32>
    %151 = vector.broadcast %150 : vector<8x1xf32> to vector<8x32xf32>
    %152 = arith.mulf %142, %151 : vector<8x32xf32>
    %153 = vector.broadcast %135 : vector<1x32xf32> to vector<8x32xf32>
    %154 = arith.mulf %152, %153 : vector<8x32xf32>
    %155 = vector.broadcast %136 : vector<1x32xf32> to vector<8x32xf32>
    %156 = arith.addf %154, %155 : vector<8x32xf32>
    %157 = vector.broadcast %4 : vector<8x1xf32> to vector<8x32xf32>
    %158 = arith.mulf %156, %157 : vector<8x32xf32>
    %159 = arith.truncf %158 : vector<8x32xf32> to vector<8x32xbf16>
    %c0_78 = arith.constant 0 : index
    %c0_79 = arith.constant 0 : index
    %160 = vector.load %arg24[%c0_78, %c0_79] : memref<32x64xbf16, #tpu.memory_space<vmem>>, vector<32x64xbf16>
    %cst_80 = arith.constant dense<0.000000e+00> : vector<8x64xf32>
    %161 = tpu.matmul %159, %160, %cst_80 {dimension_numbers = #tpu.dot_dimension_numbers<[1], [0], [0], [1], [0, 0, 1, 1], [], []>} : vector<8x32xbf16>, vector<32x64xbf16>, vector<8x64xf32> -> vector<8x64xf32>
    %c0_81 = arith.constant 0 : index
    %c0_82 = arith.constant 0 : index
    %162 = vector.load %arg25[%c0_81, %c0_82] : memref<1x64xf32, #tpu.memory_space<vmem>>, vector<1x64xf32>
    %163 = vector.broadcast %162 : vector<1x64xf32> to vector<8x64xf32>
    %164 = arith.addf %161, %163 : vector<8x64xf32>
    %cst_83 = arith.constant 0.000000e+00 : f32
    %165 = vector.broadcast %cst_83 : f32 to vector<8x64xf32>
    %166 = arith.maximumf %164, %165 : vector<8x64xf32>
    %167 = arith.truncf %166 : vector<8x64xf32> to vector<8x64xbf16>
    %c0_84 = arith.constant 0 : index
    %c0_85 = arith.constant 0 : index
    %168 = vector.load %arg26[%c0_84, %c0_85] : memref<64x32xbf16, #tpu.memory_space<vmem>>, vector<64x32xbf16>
    %cst_86 = arith.constant dense<0.000000e+00> : vector<8x32xf32>
    %169 = tpu.matmul %167, %168, %cst_86 {dimension_numbers = #tpu.dot_dimension_numbers<[1], [0], [0], [1], [0, 0, 1, 1], [], []>} : vector<8x64xbf16>, vector<64x32xbf16>, vector<8x32xf32> -> vector<8x32xf32>
    %c0_87 = arith.constant 0 : index
    %c0_88 = arith.constant 0 : index
    %170 = vector.load %arg27[%c0_87, %c0_88] : memref<1x32xf32, #tpu.memory_space<vmem>>, vector<1x32xf32>
    %171 = vector.broadcast %170 : vector<1x32xf32> to vector<8x32xf32>
    %172 = arith.addf %169, %171 : vector<8x32xf32>
    %173 = arith.addf %172, %158 : vector<8x32xf32>
    %c0_89 = arith.constant 0 : index
    %c0_90 = arith.constant 0 : index
    %174 = vector.load %arg28[%c0_89, %c0_90] : memref<1x32xf32, #tpu.memory_space<vmem>>, vector<1x32xf32>
    %c0_91 = arith.constant 0 : index
    %c0_92 = arith.constant 0 : index
    %175 = vector.load %arg29[%c0_91, %c0_92] : memref<1x32xf32, #tpu.memory_space<vmem>>, vector<1x32xf32>
    %cst_93 = arith.constant dense<0.000000e+00> : vector<8xf32>
    %176 = vector.multi_reduction <add>, %173, %cst_93 [1] : vector<8x32xf32> to vector<8xf32>
    %177 = vector.shape_cast %176 : vector<8xf32> to vector<8x1xf32>
    %cst_94 = arith.constant 3.200000e+01 : f32
    %178 = vector.broadcast %cst_94 : f32 to vector<8x1xf32>
    %179 = arith.divf %177, %178 : vector<8x1xf32>
    %180 = vector.broadcast %179 : vector<8x1xf32> to vector<8x32xf32>
    %181 = arith.subf %173, %180 : vector<8x32xf32>
    %182 = arith.mulf %181, %181 : vector<8x32xf32>
    %cst_95 = arith.constant dense<0.000000e+00> : vector<8xf32>
    %183 = vector.multi_reduction <add>, %182, %cst_95 [1] : vector<8x32xf32> to vector<8xf32>
    %184 = vector.shape_cast %183 : vector<8xf32> to vector<8x1xf32>
    %cst_96 = arith.constant 3.200000e+01 : f32
    %185 = vector.broadcast %cst_96 : f32 to vector<8x1xf32>
    %186 = arith.divf %184, %185 : vector<8x1xf32>
    %cst_97 = arith.constant 9.99999974E-6 : f32
    %187 = vector.broadcast %cst_97 : f32 to vector<8x1xf32>
    %188 = arith.addf %186, %187 : vector<8x1xf32>
    %189 = math.rsqrt %188 : vector<8x1xf32>
    %190 = vector.broadcast %189 : vector<8x1xf32> to vector<8x32xf32>
    %191 = arith.mulf %181, %190 : vector<8x32xf32>
    %192 = vector.broadcast %174 : vector<1x32xf32> to vector<8x32xf32>
    %193 = arith.mulf %191, %192 : vector<8x32xf32>
    %194 = vector.broadcast %175 : vector<1x32xf32> to vector<8x32xf32>
    %195 = arith.addf %193, %194 : vector<8x32xf32>
    %196 = vector.broadcast %4 : vector<8x1xf32> to vector<8x32xf32>
    %197 = arith.mulf %195, %196 : vector<8x32xf32>
    %c0_98 = arith.constant 0 : index
    %c0_99 = arith.constant 0 : index
    %c0_100 = arith.constant 0 : index
    %198 = vector.load %arg30[%c0_98, %c0_99, %c0_100] : memref<1x8x32xf32, #tpu.memory_space<vmem>>, vector<1x8x32xf32>
    %199 = vector.shape_cast %198 : vector<1x8x32xf32> to vector<8x32xf32>
    %200 = vector.shape_cast %197 : vector<8x32xf32> to vector<1x8x32xf32>
    tpu.vector_store %arg30[%c0_98, %c0_99, %c0_100], %200 {strides = array<i32>} : memref<1x8x32xf32, #tpu.memory_space<vmem>>, vector<1x8x32xf32>,
    return
  }
  func.func @transform_0(%arg0: i32, %arg1: i32) -> (i32, i32, i32) {
    %c0_i32 = arith.constant 0 : i32
    %c0_i32_0 = arith.constant 0 : i32
    return %arg0, %arg1, %c0_i32 : i32, i32, i32
  }
  func.func @transform_1(%arg0: i32, %arg1: i32) -> (i32, i32, i32) {
    %c0_i32 = arith.constant 0 : i32
    %c0_i32_0 = arith.constant 0 : i32
    %c0_i32_1 = arith.constant 0 : i32
    return %arg0, %c0_i32, %c0_i32_0 : i32, i32, i32
  }
  func.func @transform_2(%arg0: i32, %arg1: i32) -> (i32, i32, i32) {
    %c0_i32 = arith.constant 0 : i32
    %c0_i32_0 = arith.constant 0 : i32
    %c0_i32_1 = arith.constant 0 : i32
    return %arg0, %c0_i32, %c0_i32_0 : i32, i32, i32
  }
  func.func @transform_3(%arg0: i32, %arg1: i32) -> (i32, i32, i32) {
    %c0_i32 = arith.constant 0 : i32
    %c0_i32_0 = arith.constant 0 : i32
    return %arg0, %arg1, %c0_i32 : i32, i32, i32
  }
  func.func @transform_4(%arg0: i32, %arg1: i32) -> (i32, i32, i32) {
    %c0_i32 = arith.constant 0 : i32
    %c0_i32_0 = arith.constant 0 : i32
    return %arg0, %arg1, %c0_i32 : i32, i32, i32
  }
  func.func @transform_5(%arg0: i32, %arg1: i32) -> (i32, i32, i32) {
    %c0_i32 = arith.constant 0 : i32
    %c0_i32_0 = arith.constant 0 : i32
    return %arg0, %arg1, %c0_i32 : i32, i32, i32
  }
  func.func @transform_6(%arg0: i32, %arg1: i32) -> (i32, i32) {
    %c0_i32 = arith.constant 0 : i32
    %c0_i32_0 = arith.constant 0 : i32
    %c0_i32_1 = arith.constant 0 : i32
    return %c0_i32, %c0_i32_0 : i32, i32
  }
  func.func @transform_7(%arg0: i32, %arg1: i32) -> (i32, i32) {
    %c0_i32 = arith.constant 0 : i32
    %c0_i32_0 = arith.constant 0 : i32
    %c0_i32_1 = arith.constant 0 : i32
    return %c0_i32, %c0_i32_0 : i32, i32
  }
  func.func @transform_8(%arg0: i32, %arg1: i32) -> (i32, i32) {
    %c0_i32 = arith.constant 0 : i32
    %c0_i32_0 = arith.constant 0 : i32
    %c0_i32_1 = arith.constant 0 : i32
    return %c0_i32, %c0_i32_0 : i32, i32
  }
  func.func @transform_9(%arg0: i32, %arg1: i32) -> (i32, i32) {
    %c0_i32 = arith.constant 0 : i32
    %c0_i32_0 = arith.constant 0 : i32
    %c0_i32_1 = arith.constant 0 : i32
    return %c0_i32, %c0_i32_0 : i32, i32
  }
  func.func @transform_10(%arg0: i32, %arg1: i32) -> (i32, i32) {
    %c0_i32 = arith.constant 0 : i32
    %c0_i32_0 = arith.constant 0 : i32
    %c0_i32_1 = arith.constant 0 : i32
    return %c0_i32, %c0_i32_0 : i32, i32
  }
  func.func @transform_11(%arg0: i32, %arg1: i32) -> (i32, i32) {
    %c0_i32 = arith.constant 0 : i32
    %c0_i32_0 = arith.constant 0 : i32
    %c0_i32_1 = arith.constant 0 : i32
    return %c0_i32, %c0_i32_0 : i32, i32
  }
  func.func @transform_12(%arg0: i32, %arg1: i32) -> (i32, i32) {
    %c0_i32 = arith.constant 0 : i32
    %c0_i32_0 = arith.constant 0 : i32
    %c0_i32_1 = arith.constant 0 : i32
    return %c0_i32, %c0_i32_0 : i32, i32
  }
  func.func @transform_13(%arg0: i32, %arg1: i32) -> (i32, i32) {
    %c0_i32 = arith.constant 0 : i32
    %c0_i32_0 = arith.constant 0 : i32
    %c0_i32_1 = arith.constant 0 : i32
    return %c0_i32, %c0_i32_0 : i32, i32
  }
  func.func @transform_14(%arg0: i32, %arg1: i32) -> (i32, i32) {
    %c0_i32 = arith.constant 0 : i32
    %c0_i32_0 = arith.constant 0 : i32
    %c0_i32_1 = arith.constant 0 : i32
    return %c0_i32, %c0_i32_0 : i32, i32
  }
  func.func @transform_15(%arg0: i32, %arg1: i32) -> (i32, i32) {
    %c0_i32 = arith.constant 0 : i32
    %c0_i32_0 = arith.constant 0 : i32
    %c0_i32_1 = arith.constant 0 : i32
    return %c0_i32, %c0_i32_0 : i32, i32
  }
  func.func @transform_16(%arg0: i32, %arg1: i32) -> (i32, i32) {
    %c0_i32 = arith.constant 0 : i32
    %c0_i32_0 = arith.constant 0 : i32
    %c0_i32_1 = arith.constant 0 : i32
    return %c0_i32, %c0_i32_0 : i32, i32
  }
  func.func @transform_17(%arg0: i32, %arg1: i32) -> (i32, i32) {
    %c0_i32 = arith.constant 0 : i32
    %c0_i32_0 = arith.constant 0 : i32
    %c0_i32_1 = arith.constant 0 : i32
    return %c0_i32, %c0_i32_0 : i32, i32
  }
  func.func @transform_18(%arg0: i32, %arg1: i32) -> (i32, i32) {
    %c0_i32 = arith.constant 0 : i32
    %c0_i32_0 = arith.constant 0 : i32
    %c0_i32_1 = arith.constant 0 : i32
    return %c0_i32, %c0_i32_0 : i32, i32
  }
  func.func @transform_19(%arg0: i32, %arg1: i32) -> (i32, i32) {
    %c0_i32 = arith.constant 0 : i32
    %c0_i32_0 = arith.constant 0 : i32
    %c0_i32_1 = arith.constant 0 : i32
    return %c0_i32, %c0_i32_0 : i32, i32
  }
  func.func @transform_20(%arg0: i32, %arg1: i32) -> (i32, i32) {
    %c0_i32 = arith.constant 0 : i32
    %c0_i32_0 = arith.constant 0 : i32
    %c0_i32_1 = arith.constant 0 : i32
    return %c0_i32, %c0_i32_0 : i32, i32
  }
  func.func @transform_21(%arg0: i32, %arg1: i32) -> (i32, i32) {
    %c0_i32 = arith.constant 0 : i32
    %c0_i32_0 = arith.constant 0 : i32
    %c0_i32_1 = arith.constant 0 : i32
    return %c0_i32, %c0_i32_0 : i32, i32
  }
  func.func @transform_22(%arg0: i32, %arg1: i32) -> (i32, i32) {
    %c0_i32 = arith.constant 0 : i32
    %c0_i32_0 = arith.constant 0 : i32
    %c0_i32_1 = arith.constant 0 : i32
    return %c0_i32, %c0_i32_0 : i32, i32
  }
  func.func @transform_23(%arg0: i32, %arg1: i32) -> (i32, i32) {
    %c0_i32 = arith.constant 0 : i32
    %c0_i32_0 = arith.constant 0 : i32
    %c0_i32_1 = arith.constant 0 : i32
    return %c0_i32, %c0_i32_0 : i32, i32
  }
  func.func @transform_24(%arg0: i32, %arg1: i32) -> (i32, i32) {
    %c0_i32 = arith.constant 0 : i32
    %c0_i32_0 = arith.constant 0 : i32
    %c0_i32_1 = arith.constant 0 : i32
    return %c0_i32, %c0_i32_0 : i32, i32
  }
  func.func @transform_25(%arg0: i32, %arg1: i32) -> (i32, i32) {
    %c0_i32 = arith.constant 0 : i32
    %c0_i32_0 = arith.constant 0 : i32
    %c0_i32_1 = arith.constant 0 : i32
    return %c0_i32, %c0_i32_0 : i32, i32
  }
  func.func @transform_26(%arg0: i32, %arg1: i32) -> (i32, i32) {
    %c0_i32 = arith.constant 0 : i32
    %c0_i32_0 = arith.constant 0 : i32
    %c0_i32_1 = arith.constant 0 : i32
    return %c0_i32, %c0_i32_0 : i32, i32
  }
  func.func @transform_27(%arg0: i32, %arg1: i32) -> (i32, i32) {
    %c0_i32 = arith.constant 0 : i32
    %c0_i32_0 = arith.constant 0 : i32
    %c0_i32_1 = arith.constant 0 : i32
    return %c0_i32, %c0_i32_0 : i32, i32
  }
  func.func @transform_28(%arg0: i32, %arg1: i32) -> (i32, i32, i32) {
    %c0_i32 = arith.constant 0 : i32
    %c0_i32_0 = arith.constant 0 : i32
    return %arg0, %arg1, %c0_i32 : i32, i32, i32
  }
}

</mosaic_0001>

<llo_original>
// kernel: tpu_custom_call.1
$region0: #{tpu_custom_call.1}
  #allocation0 [shape = 'u32[]', space=smem, size = 0x4, offset = 0x4, fixed_abs, tag = 'smem constant byte address 0x4 - core index']
  #allocation1 [shape = 'u32[72,128]{1,0:T(1,128)}', space=vmem, size = 0x9000, scoped, tag = 'internal scratch']
  %s0 = inlined_call_operand.hbm [shape: bf16[2,8,32], index: 0, kind: input, shape index: {}]
  %s1 = inlined_call_operand.hbm [shape: bf16[2,8,32], index: 1, kind: input, shape index: {}]
  %s2 = inlined_call_operand.hbm [shape: bf16[2,8,32], index: 2, kind: input, shape index: {}]
  %s3 = inlined_call_operand.hbm [shape: bf16[2,8,8], index: 3, kind: input, shape index: {}]
  %s4 = inlined_call_operand.hbm [shape: bf16[2,8,8], index: 4, kind: input, shape index: {}]
  %s5 = inlined_call_operand.vmem [shape: f32[2,8,1], index: 5, kind: input, shape index: {}]
  %s6 = inlined_call_operand.vmem [shape: bf16[32,32], index: 6, kind: input, shape index: {}]
  %s7 = inlined_call_operand.hbm [shape: f32[1,32], index: 7, kind: input, shape index: {}]
  %s8 = inlined_call_operand.vmem [shape: bf16[32,64], index: 8, kind: input, shape index: {}]
  %s9 = inlined_call_operand.hbm [shape: f32[1,64], index: 9, kind: input, shape index: {}]
  %s10 = inlined_call_operand.vmem [shape: bf16[32,32], index: 10, kind: input, shape index: {}]
  %s11 = inlined_call_operand.hbm [shape: f32[1,32], index: 11, kind: input, shape index: {}]
  %s12 = inlined_call_operand.hbm [shape: f32[1,32], index: 12, kind: input, shape index: {}]
  %s13 = inlined_call_operand.hbm [shape: f32[1,32], index: 13, kind: input, shape index: {}]
  %s14 = inlined_call_operand.vmem [shape: bf16[32,32], index: 14, kind: input, shape index: {}]
  %s15 = inlined_call_operand.hbm [shape: f32[1,32], index: 15, kind: input, shape index: {}]
  %s16 = inlined_call_operand.vmem [shape: bf16[32,64], index: 16, kind: input, shape index: {}]
  %s17 = inlined_call_operand.vmem [shape: f32[1,64], index: 17, kind: input, shape index: {}]
  %s18 = inlined_call_operand.hbm [shape: bf16[32,32], index: 18, kind: input, shape index: {}]
  %s19 = inlined_call_operand.vmem [shape: f32[1,32], index: 19, kind: input, shape index: {}]
  %s20 = inlined_call_operand.vmem [shape: f32[1,32], index: 20, kind: input, shape index: {}]
  %s21 = inlined_call_operand.vmem [shape: f32[1,32], index: 21, kind: input, shape index: {}]
  %s22 = inlined_call_operand.hbm [shape: bf16[32,64], index: 22, kind: input, shape index: {}]
  %s23 = inlined_call_operand.vmem [shape: f32[1,64], index: 23, kind: input, shape index: {}]
  %s24 = inlined_call_operand.vmem [shape: bf16[64,32], index: 24, kind: input, shape index: {}]
  %s25 = inlined_call_operand.vmem [shape: f32[1,32], index: 25, kind: input, shape index: {}]
  %s26 = inlined_call_operand.vmem [shape: f32[1,32], index: 26, kind: input, shape index: {}]
  %s27 = inlined_call_operand.vmem [shape: f32[1,32], index: 27, kind: input, shape index: {}]
  %s28 = inlined_call_operand.hbm [shape: f32[2,8,32], index: 28, kind: output, shape index: {}]
  %s29 = sld [smem:[#allocation0]]
  $region197: #{tpu_custom_call.1} parent=0
    _
  %s31 = ssub.s32 1, %s29
  %s32 = scalar_select 0, %s31, %s29
  $region1: #{tpu_custom_call.1} parent=0
    #allocation2 [shape = 'u8[4096]{0}', space=vmem, size = 0x1000, scoped, tag = 'input window, operand 0']
    #allocation3 [shape = 's32[2]{0}', space=sflag, size = 0x8, scoped, tag = 'scoped memory for tpu_custom_call.1']
    #allocation4 [shape = 's32[2]{0}', space=sflag, size = 0x8, scoped, tag = 'scoped memory for tpu_custom_call.1']
    #allocation5 [shape = 'u8[4096]{0}', space=vmem, size = 0x1000, scoped, tag = 'input window, operand 1']
    #allocation6 [shape = 's32[2]{0}', space=sflag, size = 0x8, scoped, tag = 'scoped memory for tpu_custom_call.1']
    #allocation7 [shape = 'u8[4096]{0}', space=vmem, size = 0x1000, scoped, tag = 'input window, operand 2']
    #allocation8 [shape = 'u8[4096]{0}', space=vmem, size = 0x1000, scoped, tag = 'input window, operand 3']
    #allocation9 [shape = 's32[2]{0}', space=sflag, size = 0x8, scoped, tag = 'scoped memory for tpu_custom_call.1']
    #allocation10 [shape = 'u8[4096]{0}', space=vmem, size = 0x1000, scoped, tag = 'input window, operand 4']
    #allocation11 [shape = 'u8[512]{0}', space=vmem, size = 0x400, scoped, tag = 'input window, operand 7, single buffered']
    #allocation12 [shape = 's32[1]{0}', space=sflag, size = 0x4, scoped, tag = 'scoped memory for tpu_custom_call.1']
    #allocation13 [shape = 'u8[512]{0}', space=vmem, size = 0x400, scoped, tag = 'input window, operand 9, single buffered']
    #allocation14 [shape = 'u8[512]{0}', space=vmem, size = 0x400, scoped, tag = 'input window, operand 11, single buffered']
    #allocation15 [shape = 's32[1]{0}', space=sflag, size = 0x4, scoped, tag = 'scoped memory for tpu_custom_call.1']
    #allocation16 [shape = 'u8[512]{0}', space=vmem, size = 0x400, scoped, tag = 'input window, operand 12, single buffered']
    #allocation17 [shape = 'u8[512]{0}', space=vmem, size = 0x400, scoped, tag = 'input window, operand 13, single buffered']
    #allocation18 [shape = 's32[1]{0}', space=sflag, size = 0x4, scoped, tag = 'scoped memory for tpu_custom_call.1']
    #allocation19 [shape = 'u8[512]{0}', space=vmem, size = 0x400, scoped, tag = 'input window, operand 15, single buffered']
    #allocation20 [shape = 'u8[8192]{0}', space=vmem, size = 0x2000, scoped, tag = 'input window, operand 18, single buffered']
    #allocation21 [shape = 's32[1]{0}', space=sflag, size = 0x4, scoped, tag = 'scoped memory for tpu_custom_call.1']
    #allocation22 [shape = 'u8[8192]{0}', space=vmem, size = 0x2000, scoped, tag = 'input window, operand 22, single buffered']
    #allocation23 [shape = 'u8[8192]{0}', space=vmem, size = 0x2000, scoped, tag = 'output window, operand 0']
    %33 = vsyncpa [#allocation3], 0
    %s34 = scalar_lea.sflag [#allocation3], 1
    %35 = vsyncpa %s34, 0
    %36 = vsyncpa [#allocation6], 0
    %s37 = scalar_lea.sflag [#allocation6], 1
    %38 = vsyncpa %s37, 0
    %39 = vsyncpa [#allocation9], 0
    %s40 = scalar_lea.sflag [#allocation9], 1
    %41 = vsyncpa %s40, 0
    %42 = vsyncpa [#allocation12], 0
    %43 = vsyncpa [#allocation15], 0
    %44 = vsyncpa [#allocation18], 0
    %45 = vsyncpa [#allocation21], 0
    %46 = vsyncpa [#allocation4], 0
    %s47 = scalar_lea.sflag [#allocation4], 1
    %48 = vsyncpa %s47, 0
    loop: start=0, step=1, limit=4
    $region2: #{tpu_custom_call.1} parent=1 // loop_pre_header
      _
    $region3: #{tpu_custom_call.1} parent=1 // loop_header
      %s50 = sphi 0, %s54
      %p51 = scmp.ge.s32.totalorder %s50, 4
      %s57 = sphi 0, %s69
      %s58 = sphi 0, %s65
      %s59 = sphi 0, %s57
      %s60 = sphi 0, %s58
      %s61 = sphi 0, %s59
      %s62 = sphi 0, %s60
      %s74 = sphi 0, %s76
      %s77 = sphi 0, %s74
      %s78 = sphi 0, %s77
      %s94 = sphi 0, %s78
      %s100 = sphi 0, %s102
      %s103 = sphi 0, %s100
      %s104 = sphi 0, %s103
      %s120 = sphi 0, %s104
      %s126 = sphi 0, %s128
      %s129 = sphi 0, %s126
      %s130 = sphi 0, %s129
      %s146 = sphi 0, %s130
      %s154 = sphi 0, %s156
      %s157 = sphi 0, %s154
      %s158 = sphi 0, %s157
      %s174 = sphi 0, %s158
      %s182 = sphi 0, %s184
      %s185 = sphi 0, %s182
      %s186 = sphi 0, %s185
      %s202 = sphi 0, %s186
      %s210 = sphi 0, %s212
      %s213 = sphi 0, %s210
      %s214 = sphi 0, %s213
      %s230 = sphi 0, %s214
      %s234 = sphi 0, %s234
      %s236 = sphi 0, %s234
      %s237 = sphi 0, %s236
      %s251 = sphi 0, %s237
      %s255 = sphi 0, %s255
      %s257 = sphi 0, %s255
      %s258 = sphi 0, %s257
      %s272 = sphi 0, %s258
      %s276 = sphi 0, %s276
      %s278 = sphi 0, %s276
      %s279 = sphi 0, %s278
      %s293 = sphi 0, %s279
      %s297 = sphi 0, %s297
      %s299 = sphi 0, %s297
      %s300 = sphi 0, %s299
      %s314 = sphi 0, %s300
      %s318 = sphi 0, %s318
      %s320 = sphi 0, %s318
      %s321 = sphi 0, %s320
      %s335 = sphi 0, %s321
      %s339 = sphi 0, %s339
      %s341 = sphi 0, %s339
      %s342 = sphi 0, %s341
      %s356 = sphi 0, %s342
      %s360 = sphi 0, %s360
      %s362 = sphi 0, %s360
      %s363 = sphi 0, %s362
      %s377 = sphi 0, %s363
      %s381 = sphi 0, %s381
      %s383 = sphi 0, %s381
      %s384 = sphi 0, %s383
      %s398 = sphi 0, %s384
      %s402 = sphi 0, %s402
      %s404 = sphi 0, %s402
      %s405 = sphi 0, %s404
      %s419 = sphi 0, %s405
      %s423 = sphi 0, %s423
      %s425 = sphi 0, %s423
      %s426 = sphi 0, %s425
      %s440 = sphi 0, %s426
      %s444 = sphi 0, %s444
      %s446 = sphi 0, %s444
      %s447 = sphi 0, %s446
      %s461 = sphi 0, %s447
      %s465 = sphi 0, %s465
      %s467 = sphi 0, %s465
      %s468 = sphi 0, %s467
      %s482 = sphi 0, %s468
      %s486 = sphi 0, %s486
      %s488 = sphi 0, %s486
      %s489 = sphi 0, %s488
      %s503 = sphi 0, %s489
      %s507 = sphi 0, %s507
      %s509 = sphi 0, %s507
      %s510 = sphi 0, %s509
      %s524 = sphi 0, %s510
      %s528 = sphi 0, %s528
      %s530 = sphi 0, %s528
      %s531 = sphi 0, %s530
      %s545 = sphi 0, %s531
      %s549 = sphi 0, %s549
      %s551 = sphi 0, %s549
      %s552 = sphi 0, %s551
      %s566 = sphi 0, %s552
      %s570 = sphi 0, %s570
      %s572 = sphi 0, %s570
      %s573 = sphi 0, %s572
      %s587 = sphi 0, %s573
      %s591 = sphi 0, %s591
      %s593 = sphi 0, %s591
      %s594 = sphi 0, %s593
      %s608 = sphi 0, %s594
      %s612 = sphi 0, %s612
      %s614 = sphi 0, %s612
      %s615 = sphi 0, %s614
      %s629 = sphi 0, %s615
      %s633 = sphi 0, %s633
      %s635 = sphi 0, %s633
      %s636 = sphi 0, %s635
      %s650 = sphi 0, %s636
      %s654 = sphi 0, %s654
      %s656 = sphi 0, %s654
      %s657 = sphi 0, %s656
      %s671 = sphi 0, %s657
      %s675 = sphi 0, %s675
      %s677 = sphi 0, %s675
      %s678 = sphi 0, %s677
      %s692 = sphi 0, %s678
      %s700 = sphi 0, %s702
      %s703 = sphi 0, %s700
      %s704 = sphi 0, %s703
      %s720 = sphi 0, %s704
    $region4: #{tpu_custom_call.1} parent=1 // loop_header_branch
      %53 = sbr.rel (%p51) target = $region8
    $region5: #{tpu_custom_call.1} parent=1 // loop_body
      %s55 = ssub.s32 %s50, 1
      %s56 = ssub.s32 %s50, 2
      %s63 = sadd.s32 1, %s58
      %p64 = scmp.ge.s32.totalorder %s63, 1
      %s65 = scalar_select %p64, 0, %s63
      %s66 = sadd.s32 1, %s57
      %s67 = scalar_select %p64, %s66, %s57
      %p68 = scmp.ge.s32.totalorder %s67, 2
      %s69 = scalar_select %p68, 0, %s67
      %s70 = ssub.s32 %s57, %s69
      %s71 = ssub.s32 %s58, %s65
      %s72 = sor.u32 %s70, %s71
      %p73 = scmp.eq.s32.totalorder %s72, 0
      %s75 = sadd.s32 %s74, 1
      %s76 = scalar_select %p73, %s74, %s75
      %p79 = pneg %p73
      %p80 = scmp.eq.s32.totalorder %s50, 1
      %p81 = por %p79, %p80
      %p82 = scmp.ne.s32.totalorder %s74, %s77
      %p83 = scmp.eq.s32.totalorder %s50, 0
      %p84 = por %p82, %p83
      %p85 = scmp.ne.s32.totalorder %s74, %s77
      %p86 = scmp.eq.s32.totalorder %s55, 1
      %p87 = por %p85, %p86
      %p88 = scmp.ne.s32.totalorder %s77, %s78
      %p89 = scmp.eq.s32.totalorder %s55, 0
      %p90 = por %p88, %p89
      %p91 = scmp.ne.s32.totalorder %s77, %s78
      %p92 = scmp.eq.s32.totalorder %s56, 1
      %p93 = por %p91, %p92
      %p95 = scmp.ne.s32.totalorder %s78, %s94
      %p96 = scmp.eq.s32.totalorder %s56, 0
      %p97 = por %p95, %p96
      %s98 = ssub.s32 %s57, %s69
      %p99 = scmp.eq.s32.totalorder %s98, 0
      %s101 = sadd.s32 %s100, 1
      %s102 = scalar_select %p99, %s100, %s101
      %p105 = pneg %p99
      %p106 = scmp.eq.s32.totalorder %s50, 1
      %p107 = por %p105, %p106
      %p108 = scmp.ne.s32.totalorder %s100, %s103
      %p109 = scmp.eq.s32.totalorder %s50, 0
      %p110 = por %p108, %p109
      %p111 = scmp.ne.s32.totalorder %s100, %s103
      %p112 = scmp.eq.s32.totalorder %s55, 1
      %p113 = por %p111, %p112
      %p114 = scmp.ne.s32.totalorder %s103, %s104
      %p115 = scmp.eq.s32.totalorder %s55, 0
      %p116 = por %p114, %p115
      %p117 = scmp.ne.s32.totalorder %s103, %s104
      %p118 = scmp.eq.s32.totalorder %s56, 1
      %p119 = por %p117, %p118
      %p121 = scmp.ne.s32.totalorder %s104, %s120
      %p122 = scmp.eq.s32.totalorder %s56, 0
      %p123 = por %p121, %p122
      %s124 = ssub.s32 %s57, %s69
      %p125 = scmp.eq.s32.totalorder %s124, 0
      %s127 = sadd.s32 %s126, 1
      %s128 = scalar_select %p125, %s126, %s127
      %p131 = pneg %p125
      %p132 = scmp.eq.s32.totalorder %s50, 1
      %p133 = por %p131, %p132
      %p134 = scmp.ne.s32.totalorder %s126, %s129
      %p135 = scmp.eq.s32.totalorder %s50, 0
      %p136 = por %p134, %p135
      %p137 = scmp.ne.s32.totalorder %s126, %s129
      %p138 = scmp.eq.s32.totalorder %s55, 1
      %p139 = por %p137, %p138
      %p140 = scmp.ne.s32.totalorder %s129, %s130
      %p141 = scmp.eq.s32.totalorder %s55, 0
      %p142 = por %p140, %p141
      %p143 = scmp.ne.s32.totalorder %s129, %s130
      %p144 = scmp.eq.s32.totalorder %s56, 1
      %p145 = por %p143, %p144
      %p147 = scmp.ne.s32.totalorder %s130, %s146
      %p148 = scmp.eq.s32.totalorder %s56, 0
      %p149 = por %p147, %p148
      %s150 = ssub.s32 %s57, %s69
      %s151 = ssub.s32 %s58, %s65
      %s152 = sor.u32 %s150, %s151
      %p153 = scmp.eq.s32.totalorder %s152, 0
      %s155 = sadd.s32 %s154, 1
      %s156 = scalar_select %p153, %s154, %s155
      %p159 = pneg %p153
      %p160 = scmp.eq.s32.totalorder %s50, 1
      %p161 = por %p159, %p160
      %p162 = scmp.ne.s32.totalorder %s154, %s157
      %p163 = scmp.eq.s32.totalorder %s50, 0
      %p164 = por %p162, %p163
      %p165 = scmp.ne.s32.totalorder %s154, %s157
      %p166 = scmp.eq.s32.totalorder %s55, 1
      %p167 = por %p165, %p166
      %p168 = scmp.ne.s32.totalorder %s157, %s158
      %p169 = scmp.eq.s32.totalorder %s55, 0
      %p170 = por %p168, %p169
      %p171 = scmp.ne.s32.totalorder %s157, %s158
      %p172 = scmp.eq.s32.totalorder %s56, 1
      %p173 = por %p171, %p172
      %p175 = scmp.ne.s32.totalorder %s158, %s174
      %p176 = scmp.eq.s32.totalorder %s56, 0
      %p177 = por %p175, %p176
      %s178 = ssub.s32 %s57, %s69
      %s179 = ssub.s32 %s58, %s65
      %s180 = sor.u32 %s178, %s179
      %p181 = scmp.eq.s32.totalorder %s180, 0
      %s183 = sadd.s32 %s182, 1
      %s184 = scalar_select %p181, %s182, %s183
      %p187 = pneg %p181
      %p188 = scmp.eq.s32.totalorder %s50, 1
      %p189 = por %p187, %p188
      %p190 = scmp.ne.s32.totalorder %s182, %s185
      %p191 = scmp.eq.s32.totalorder %s50, 0
      %p192 = por %p190, %p191
      %p193 = scmp.ne.s32.totalorder %s182, %s185
      %p194 = scmp.eq.s32.totalorder %s55, 1
      %p195 = por %p193, %p194
      %p196 = scmp.ne.s32.totalorder %s185, %s186
      %p197 = scmp.eq.s32.totalorder %s55, 0
      %p198 = por %p196, %p197
      %p199 = scmp.ne.s32.totalorder %s185, %s186
      %p200 = scmp.eq.s32.totalorder %s56, 1
      %p201 = por %p199, %p200
      %p203 = scmp.ne.s32.totalorder %s186, %s202
      %p204 = scmp.eq.s32.totalorder %s56, 0
      %p205 = por %p203, %p204
      %s206 = ssub.s32 %s57, %s69
      %s207 = ssub.s32 %s58, %s65
      %s208 = sor.u32 %s206, %s207
      %p209 = scmp.eq.s32.totalorder %s208, 0
      %s211 = sadd.s32 %s210, 1
      %s212 = scalar_select %p209, %s210, %s211
      %p215 = pneg %p209
      %p216 = scmp.eq.s32.totalorder %s50, 1
      %p217 = por %p215, %p216
      %p218 = scmp.ne.s32.totalorder %s210, %s213
      %p219 = scmp.eq.s32.totalorder %s50, 0
      %p220 = por %p218, %p219
      %p221 = scmp.ne.s32.totalorder %s210, %s213
      %p222 = scmp.eq.s32.totalorder %s55, 1
      %p223 = por %p221, %p222
      %p224 = scmp.ne.s32.totalorder %s213, %s214
      %p225 = scmp.eq.s32.totalorder %s55, 0
      %p226 = por %p224, %p225
      %p227 = scmp.ne.s32.totalorder %s213, %s214
      %p228 = scmp.eq.s32.totalorder %s56, 1
      %p229 = por %p227, %p228
      %p231 = scmp.ne.s32.totalorder %s214, %s230
      %p232 = scmp.eq.s32.totalorder %s56, 0
      %p233 = por %p231, %p232
      %s235 = sadd.s32 %s234, 1
      %p238 = scmp.eq.s32.totalorder %s50, 1
      %p239 = scmp.ne.s32.totalorder %s234, %s236
      %p240 = scmp.eq.s32.totalorder %s50, 0
      %p241 = por %p239, %p240
      %p242 = scmp.ne.s32.totalorder %s234, %s236
      %p243 = scmp.eq.s32.totalorder %s55, 1
      %p244 = por %p242, %p243
      %p245 = scmp.ne.s32.totalorder %s236, %s237
      %p246 = scmp.eq.s32.totalorder %s55, 0
      %p247 = por %p245, %p246
      %p248 = scmp.ne.s32.totalorder %s236, %s237
      %p249 = scmp.eq.s32.totalorder %s56, 1
      %p250 = por %p248, %p249
      %p252 = scmp.ne.s32.totalorder %s237, %s251
      %p253 = scmp.eq.s32.totalorder %s56, 0
      %p254 = por %p252, %p253
      %s256 = sadd.s32 %s255, 1
      %p259 = scmp.eq.s32.totalorder %s50, 1
      %p260 = scmp.ne.s32.totalorder %s255, %s257
      %p261 = scmp.eq.s32.totalorder %s50, 0
      %p262 = por %p260, %p261
      %p263 = scmp.ne.s32.totalorder %s255, %s257
      %p264 = scmp.eq.s32.totalorder %s55, 1
      %p265 = por %p263, %p264
      %p266 = scmp.ne.s32.totalorder %s257, %s258
      %p267 = scmp.eq.s32.totalorder %s55, 0
      %p268 = por %p266, %p267
      %p269 = scmp.ne.s32.totalorder %s257, %s258
      %p270 = scmp.eq.s32.totalorder %s56, 1
      %p271 = por %p269, %p270
      %p273 = scmp.ne.s32.totalorder %s258, %s272
      %p274 = scmp.eq.s32.totalorder %s56, 0
      %p275 = por %p273, %p274
      %s277 = sadd.s32 %s276, 1
      %p280 = scmp.eq.s32.totalorder %s50, 1
      %p281 = scmp.ne.s32.totalorder %s276, %s278
      %p282 = scmp.eq.s32.totalorder %s50, 0
      %p283 = por %p281, %p282
      %p284 = scmp.ne.s32.totalorder %s276, %s278
      %p285 = scmp.eq.s32.totalorder %s55, 1
      %p286 = por %p284, %p285
      %p287 = scmp.ne.s32.totalorder %s278, %s279
      %p288 = scmp.eq.s32.totalorder %s55, 0
      %p289 = por %p287, %p288
      %p290 = scmp.ne.s32.totalorder %s278, %s279
      %p291 = scmp.eq.s32.totalorder %s56, 1
      %p292 = por %p290, %p291
      %p294 = scmp.ne.s32.totalorder %s279, %s293
      %p295 = scmp.eq.s32.totalorder %s56, 0
      %p296 = por %p294, %p295
      %s298 = sadd.s32 %s297, 1
      %p301 = scmp.eq.s32.totalorder %s50, 1
      %p302 = scmp.ne.s32.totalorder %s297, %s299
      %p303 = scmp.eq.s32.totalorder %s50, 0
      %p304 = por %p302, %p303
      %p305 = scmp.ne.s32.totalorder %s297, %s299
      %p306 = scmp.eq.s32.totalorder %s55, 1
      %p307 = por %p305, %p306
      %p308 = scmp.ne.s32.totalorder %s299, %s300
      %p309 = scmp.eq.s32.totalorder %s55, 0
      %p310 = por %p308, %p309
      %p311 = scmp.ne.s32.totalorder %s299, %s300
      %p312 = scmp.eq.s32.totalorder %s56, 1
      %p313 = por %p311, %p312
      %p315 = scmp.ne.s32.totalorder %s300, %s314
      %p316 = scmp.eq.s32.totalorder %s56, 0
      %p317 = por %p315, %p316
      %s319 = sadd.s32 %s318, 1
      %p322 = scmp.eq.s32.totalorder %s50, 1
      %p323 = scmp.ne.s32.totalorder %s318, %s320
      %p324 = scmp.eq.s32.totalorder %s50, 0
      %p325 = por %p323, %p324
      %p326 = scmp.ne.s32.totalorder %s318, %s320
      %p327 = scmp.eq.s32.totalorder %s55, 1
      %p328 = por %p326, %p327
      %p329 = scmp.ne.s32.totalorder %s320, %s321
      %p330 = scmp.eq.s32.totalorder %s55, 0
      %p331 = por %p329, %p330
      %p332 = scmp.ne.s32.totalorder %s320, %s321
      %p333 = scmp.eq.s32.totalorder %s56, 1
      %p334 = por %p332, %p333
      %p336 = scmp.ne.s32.totalorder %s321, %s335
      %p337 = scmp.eq.s32.totalorder %s56, 0
      %p338 = por %p336, %p337
      %s340 = sadd.s32 %s339, 1
      %p343 = scmp.eq.s32.totalorder %s50, 1
      %p344 = scmp.ne.s32.totalorder %s339, %s341
      %p345 = scmp.eq.s32.totalorder %s50, 0
      %p346 = por %p344, %p345
      %p347 = scmp.ne.s32.totalorder %s339, %s341
      %p348 = scmp.eq.s32.totalorder %s55, 1
      %p349 = por %p347, %p348
      %p350 = scmp.ne.s32.totalorder %s341, %s342
      %p351 = scmp.eq.s32.totalorder %s55, 0
      %p352 = por %p350, %p351
      %p353 = scmp.ne.s32.totalorder %s341, %s342
      %p354 = scmp.eq.s32.totalorder %s56, 1
      %p355 = por %p353, %p354
      %p357 = scmp.ne.s32.totalorder %s342, %s356
      %p358 = scmp.eq.s32.totalorder %s56, 0
      %p359 = por %p357, %p358
      %s361 = sadd.s32 %s360, 1
      %p364 = scmp.eq.s32.totalorder %s50, 1
      %p365 = scmp.ne.s32.totalorder %s360, %s362
      %p366 = scmp.eq.s32.totalorder %s50, 0
      %p367 = por %p365, %p366
      %p368 = scmp.ne.s32.totalorder %s360, %s362
      %p369 = scmp.eq.s32.totalorder %s55, 1
      %p370 = por %p368, %p369
      %p371 = scmp.ne.s32.totalorder %s362, %s363
      %p372 = scmp.eq.s32.totalorder %s55, 0
      %p373 = por %p371, %p372
      %p374 = scmp.ne.s32.totalorder %s362, %s363
      %p375 = scmp.eq.s32.totalorder %s56, 1
      %p376 = por %p374, %p375
      %p378 = scmp.ne.s32.totalorder %s363, %s377
      %p379 = scmp.eq.s32.totalorder %s56, 0
      %p380 = por %p378, %p379
      %s382 = sadd.s32 %s381, 1
      %p385 = scmp.eq.s32.totalorder %s50, 1
      %p386 = scmp.ne.s32.totalorder %s381, %s383
      %p387 = scmp.eq.s32.totalorder %s50, 0
      %p388 = por %p386, %p387
      %p389 = scmp.ne.s32.totalorder %s381, %s383
      %p390 = scmp.eq.s32.totalorder %s55, 1
      %p391 = por %p389, %p390
      %p392 = scmp.ne.s32.totalorder %s383, %s384
      %p393 = scmp.eq.s32.totalorder %s55, 0
      %p394 = por %p392, %p393
      %p395 = scmp.ne.s32.totalorder %s383, %s384
      %p396 = scmp.eq.s32.totalorder %s56, 1
      %p397 = por %p395, %p396
      %p399 = scmp.ne.s32.totalorder %s384, %s398
      %p400 = scmp.eq.s32.totalorder %s56, 0
      %p401 = por %p399, %p400
      %s403 = sadd.s32 %s402, 1
      %p406 = scmp.eq.s32.totalorder %s50, 1
      %p407 = scmp.ne.s32.totalorder %s402, %s404
      %p408 = scmp.eq.s32.totalorder %s50, 0
      %p409 = por %p407, %p408
      %p410 = scmp.ne.s32.totalorder %s402, %s404
      %p411 = scmp.eq.s32.totalorder %s55, 1
      %p412 = por %p410, %p411
      %p413 = scmp.ne.s32.totalorder %s404, %s405
      %p414 = scmp.eq.s32.totalorder %s55, 0
      %p415 = por %p413, %p414
      %p416 = scmp.ne.s32.totalorder %s404, %s405
      %p417 = scmp.eq.s32.totalorder %s56, 1
      %p418 = por %p416, %p417
      %p420 = scmp.ne.s32.totalorder %s405, %s419
      %p421 = scmp.eq.s32.totalorder %s56, 0
      %p422 = por %p420, %p421
      %s424 = sadd.s32 %s423, 1
      %p427 = scmp.eq.s32.totalorder %s50, 1
      %p428 = scmp.ne.s32.totalorder %s423, %s425
      %p429 = scmp.eq.s32.totalorder %s50, 0
      %p430 = por %p428, %p429
      %p431 = scmp.ne.s32.totalorder %s423, %s425
      %p432 = scmp.eq.s32.totalorder %s55, 1
      %p433 = por %p431, %p432
      %p434 = scmp.ne.s32.totalorder %s425, %s426
      %p435 = scmp.eq.s32.totalorder %s55, 0
      %p436 = por %p434, %p435
      %p437 = scmp.ne.s32.totalorder %s425, %s426
      %p438 = scmp.eq.s32.totalorder %s56, 1
      %p439 = por %p437, %p438
      %p441 = scmp.ne.s32.totalorder %s426, %s440
      %p442 = scmp.eq.s32.totalorder %s56, 0
      %p443 = por %p441, %p442
      %s445 = sadd.s32 %s444, 1
      %p448 = scmp.eq.s32.totalorder %s50, 1
      %p449 = scmp.ne.s32.totalorder %s444, %s446
      %p450 = scmp.eq.s32.totalorder %s50, 0
      %p451 = por %p449, %p450
      %p452 = scmp.ne.s32.totalorder %s444, %s446
      %p453 = scmp.eq.s32.totalorder %s55, 1
      %p454 = por %p452, %p453
      %p455 = scmp.ne.s32.totalorder %s446, %s447
      %p456 = scmp.eq.s32.totalorder %s55, 0
      %p457 = por %p455, %p456
      %p458 = scmp.ne.s32.totalorder %s446, %s447
      %p459 = scmp.eq.s32.totalorder %s56, 1
      %p460 = por %p458, %p459
      %p462 = scmp.ne.s32.totalorder %s447, %s461
      %p463 = scmp.eq.s32.totalorder %s56, 0
      %p464 = por %p462, %p463
      %s466 = sadd.s32 %s465, 1
      %p469 = scmp.eq.s32.totalorder %s50, 1
      %p470 = scmp.ne.s32.totalorder %s465, %s467
      %p471 = scmp.eq.s32.totalorder %s50, 0
      %p472 = por %p470, %p471
      %p473 = scmp.ne.s32.totalorder %s465, %s467
      %p474 = scmp.eq.s32.totalorder %s55, 1
      %p475 = por %p473, %p474
      %p476 = scmp.ne.s32.totalorder %s467, %s468
      %p477 = scmp.eq.s32.totalorder %s55, 0
      %p478 = por %p476, %p477
      %p479 = scmp.ne.s32.totalorder %s467, %s468
      %p480 = scmp.eq.s32.totalorder %s56, 1
      %p481 = por %p479, %p480
      %p483 = scmp.ne.s32.totalorder %s468, %s482
      %p484 = scmp.eq.s32.totalorder %s56, 0
      %p485 = por %p483, %p484
      %s487 = sadd.s32 %s486, 1
      %p490 = scmp.eq.s32.totalorder %s50, 1
      %p491 = scmp.ne.s32.totalorder %s486, %s488
      %p492 = scmp.eq.s32.totalorder %s50, 0
      %p493 = por %p491, %p492
      %p494 = scmp.ne.s32.totalorder %s486, %s488
      %p495 = scmp.eq.s32.totalorder %s55, 1
      %p496 = por %p494, %p495
      %p497 = scmp.ne.s32.totalorder %s488, %s489
      %p498 = scmp.eq.s32.totalorder %s55, 0
      %p499 = por %p497, %p498
      %p500 = scmp.ne.s32.totalorder %s488, %s489
      %p501 = scmp.eq.s32.totalorder %s56, 1
      %p502 = por %p500, %p501
      %p504 = scmp.ne.s32.totalorder %s489, %s503
      %p505 = scmp.eq.s32.totalorder %s56, 0
      %p506 = por %p504, %p505
      %s508 = sadd.s32 %s507, 1
      %p511 = scmp.eq.s32.totalorder %s50, 1
      %p512 = scmp.ne.s32.totalorder %s507, %s509
      %p513 = scmp.eq.s32.totalorder %s50, 0
      %p514 = por %p512, %p513
      %p515 = scmp.ne.s32.totalorder %s507, %s509
      %p516 = scmp.eq.s32.totalorder %s55, 1
      %p517 = por %p515, %p516
      %p518 = scmp.ne.s32.totalorder %s509, %s510
      %p519 = scmp.eq.s32.totalorder %s55, 0
      %p520 = por %p518, %p519
      %p521 = scmp.ne.s32.totalorder %s509, %s510
      %p522 = scmp.eq.s32.totalorder %s56, 1
      %p523 = por %p521, %p522
      %p525 = scmp.ne.s32.totalorder %s510, %s524
      %p526 = scmp.eq.s32.totalorder %s56, 0
      %p527 = por %p525, %p526
      %s529 = sadd.s32 %s528, 1
      %p532 = scmp.eq.s32.totalorder %s50, 1
      %p533 = scmp.ne.s32.totalorder %s528, %s530
      %p534 = scmp.eq.s32.totalorder %s50, 0
      %p535 = por %p533, %p534
      %p536 = scmp.ne.s32.totalorder %s528, %s530
      %p537 = scmp.eq.s32.totalorder %s55, 1
      %p538 = por %p536, %p537
      %p539 = scmp.ne.s32.totalorder %s530, %s531
      %p540 = scmp.eq.s32.totalorder %s55, 0
      %p541 = por %p539, %p540
      %p542 = scmp.ne.s32.totalorder %s530, %s531
      %p543 = scmp.eq.s32.totalorder %s56, 1
      %p544 = por %p542, %p543
      %p546 = scmp.ne.s32.totalorder %s531, %s545
      %p547 = scmp.eq.s32.totalorder %s56, 0
      %p548 = por %p546, %p547
      %s550 = sadd.s32 %s549, 1
      %p553 = scmp.eq.s32.totalorder %s50, 1
      %p554 = scmp.ne.s32.totalorder %s549, %s551
      %p555 = scmp.eq.s32.totalorder %s50, 0
      %p556 = por %p554, %p555
      %p557 = scmp.ne.s32.totalorder %s549, %s551
      %p558 = scmp.eq.s32.totalorder %s55, 1
      %p559 = por %p557, %p558
      %p560 = scmp.ne.s32.totalorder %s551, %s552
      %p561 = scmp.eq.s32.totalorder %s55, 0
      %p562 = por %p560, %p561
      %p563 = scmp.ne.s32.totalorder %s551, %s552
      %p564 = scmp.eq.s32.totalorder %s56, 1
      %p565 = por %p563, %p564
      %p567 = scmp.ne.s32.totalorder %s552, %s566
      %p568 = scmp.eq.s32.totalorder %s56, 0
      %p569 = por %p567, %p568
      %s571 = sadd.s32 %s570, 1
      %p574 = scmp.eq.s32.totalorder %s50, 1
      %p575 = scmp.ne.s32.totalorder %s570, %s572
      %p576 = scmp.eq.s32.totalorder %s50, 0
      %p577 = por %p575, %p576
      %p578 = scmp.ne.s32.totalorder %s570, %s572
      %p579 = scmp.eq.s32.totalorder %s55, 1
      %p580 = por %p578, %p579
      %p581 = scmp.ne.s32.totalorder %s572, %s573
      %p582 = scmp.eq.s32.totalorder %s55, 0
      %p583 = por %p581, %p582
      %p584 = scmp.ne.s32.totalorder %s572, %s573
      %p585 = scmp.eq.s32.totalorder %s56, 1
      %p586 = por %p584, %p585
      %p588 = scmp.ne.s32.totalorder %s573, %s587
      %p589 = scmp.eq.s32.totalorder %s56, 0
      %p590 = por %p588, %p589
      %s592 = sadd.s32 %s591, 1
      %p595 = scmp.eq.s32.totalorder %s50, 1
      %p596 = scmp.ne.s32.totalorder %s591, %s593
      %p597 = scmp.eq.s32.totalorder %s50, 0
      %p598 = por %p596, %p597
      %p599 = scmp.ne.s32.totalorder %s591, %s593
      %p600 = scmp.eq.s32.totalorder %s55, 1
      %p601 = por %p599, %p600
      %p602 = scmp.ne.s32.totalorder %s593, %s594
      %p603 = scmp.eq.s32.totalorder %s55, 0
      %p604 = por %p602, %p603
      %p605 = scmp.ne.s32.totalorder %s593, %s594
      %p606 = scmp.eq.s32.totalorder %s56, 1
      %p607 = por %p605, %p606
      %p609 = scmp.ne.s32.totalorder %s594, %s608
      %p610 = scmp.eq.s32.totalorder %s56, 0
      %p611 = por %p609, %p610
      %s613 = sadd.s32 %s612, 1
      %p616 = scmp.eq.s32.totalorder %s50, 1
      %p617 = scmp.ne.s32.totalorder %s612, %s614
      %p618 = scmp.eq.s32.totalorder %s50, 0
      %p619 = por %p617, %p618
      %p620 = scmp.ne.s32.totalorder %s612, %s614
      %p621 = scmp.eq.s32.totalorder %s55, 1
      %p622 = por %p620, %p621
      %p623 = scmp.ne.s32.totalorder %s614, %s615
      %p624 = scmp.eq.s32.totalorder %s55, 0
      %p625 = por %p623, %p624
      %p626 = scmp.ne.s32.totalorder %s614, %s615
      %p627 = scmp.eq.s32.totalorder %s56, 1
      %p628 = por %p626, %p627
      %p630 = scmp.ne.s32.totalorder %s615, %s629
      %p631 = scmp.eq.s32.totalorder %s56, 0
      %p632 = por %p630, %p631
      %s634 = sadd.s32 %s633, 1
      %p637 = scmp.eq.s32.totalorder %s50, 1
      %p638 = scmp.ne.s32.totalorder %s633, %s635
      %p639 = scmp.eq.s32.totalorder %s50, 0
      %p640 = por %p638, %p639
      %p641 = scmp.ne.s32.totalorder %s633, %s635
      %p642 = scmp.eq.s32.totalorder %s55, 1
      %p643 = por %p641, %p642
      %p644 = scmp.ne.s32.totalorder %s635, %s636
      %p645 = scmp.eq.s32.totalorder %s55, 0
      %p646 = por %p644, %p645
      %p647 = scmp.ne.s32.totalorder %s635, %s636
      %p648 = scmp.eq.s32.totalorder %s56, 1
      %p649 = por %p647, %p648
      %p651 = scmp.ne.s32.totalorder %s636, %s650
      %p652 = scmp.eq.s32.totalorder %s56, 0
      %p653 = por %p651, %p652
      %s655 = sadd.s32 %s654, 1
      %p658 = scmp.eq.s32.totalorder %s50, 1
      %p659 = scmp.ne.s32.totalorder %s654, %s656
      %p660 = scmp.eq.s32.totalorder %s50, 0
      %p661 = por %p659, %p660
      %p662 = scmp.ne.s32.totalorder %s654, %s656
      %p663 = scmp.eq.s32.totalorder %s55, 1
      %p664 = por %p662, %p663
      %p665 = scmp.ne.s32.totalorder %s656, %s657
      %p666 = scmp.eq.s32.totalorder %s55, 0
      %p667 = por %p665, %p666
      %p668 = scmp.ne.s32.totalorder %s656, %s657
      %p669 = scmp.eq.s32.totalorder %s56, 1
      %p670 = por %p668, %p669
      %p672 = scmp.ne.s32.totalorder %s657, %s671
      %p673 = scmp.eq.s32.totalorder %s56, 0
      %p674 = por %p672, %p673
      %s676 = sadd.s32 %s675, 1
      %p679 = scmp.eq.s32.totalorder %s50, 1
      %p680 = scmp.ne.s32.totalorder %s675, %s677
      %p681 = scmp.eq.s32.totalorder %s50, 0
      %p682 = por %p680, %p681
      %p683 = scmp.ne.s32.totalorder %s675, %s677
      %p684 = scmp.eq.s32.totalorder %s55, 1
      %p685 = por %p683, %p684
      %p686 = scmp.ne.s32.totalorder %s677, %s678
      %p687 = scmp.eq.s32.totalorder %s55, 0
      %p688 = por %p686, %p687
      %p689 = scmp.ne.s32.totalorder %s677, %s678
      %p690 = scmp.eq.s32.totalorder %s56, 1
      %p691 = por %p689, %p690
      %p693 = scmp.ne.s32.totalorder %s678, %s692
      %p694 = scmp.eq.s32.totalorder %s56, 0
      %p695 = por %p693, %p694
      %s696 = ssub.s32 %s57, %s69
      %s697 = ssub.s32 %s58, %s65
      %s698 = sor.u32 %s696, %s697
      %p699 = scmp.eq.s32.totalorder %s698, 0
      %s701 = sadd.s32 %s700, 1
      %s702 = scalar_select %p699, %s700, %s701
      %p705 = pneg %p699
      %p706 = scmp.eq.s32.totalorder %s50, 1
      %p707 = por %p705, %p706
      %p708 = scmp.ne.s32.totalorder %s700, %s703
      %p709 = scmp.eq.s32.totalorder %s50, 0
      %p710 = por %p708, %p709
      %p711 = scmp.ne.s32.totalorder %s700, %s703
      %p712 = scmp.eq.s32.totalorder %s55, 1
      %p713 = por %p711, %p712
      %p714 = scmp.ne.s32.totalorder %s703, %s704
      %p715 = scmp.eq.s32.totalorder %s55, 0
      %p716 = por %p714, %p715
      %p717 = scmp.ne.s32.totalorder %s703, %s704
      %p718 = scmp.eq.s32.totalorder %s56, 1
      %p719 = por %p717, %p718
      %p721 = scmp.ne.s32.totalorder %s704, %s720
      %p722 = scmp.eq.s32.totalorder %s56, 0
      %p723 = por %p721, %p722
      %p724 = scmp.le.s32.totalorder 1, %s50
      %p725 = scmp.lt.s32.totalorder %s50, 3
      %p726 = pnand %p724, %p725
      %p727 = pneg %p726
      // Predicated region
      $region9: #{tpu_custom_call.1} parent=5 // pred_check
        _
      $region10: #{tpu_custom_call.1} parent=5 // pred_check_branch
        %729 = sbr.rel (%p726) target = $region12
      $region11: #{tpu_custom_call.1} parent=5 // pred_region
        %s730 = ssub.s32 %s50, 1
        // Predicated region
        $region13: #{tpu_custom_call.1} parent=11 // pred_check
          %p731 = pneg %p247
        $region14: #{tpu_custom_call.1} parent=11 // pred_check_branch
          %733 = sbr.rel (%p731) target = $region16
        $region15: #{tpu_custom_call.1} parent=11 // pred_region
          _
        $region16: #{tpu_custom_call.1} parent=11 // pred_fallthru
          _
        // Predicated region
        $region17: #{tpu_custom_call.1} parent=11 // pred_check
          %p734 = pneg %p268
        $region18: #{tpu_custom_call.1} parent=11 // pred_check_branch
          %736 = sbr.rel (%p734) target = $region20
        $region19: #{tpu_custom_call.1} parent=11 // pred_region
          %738 = vsyncadd [#allocation12], 0
          %s740 = sshll.u32 %s7, 4
          %s741 = int_to_ptr.hbm [resolvable:$true] %s740
          %s742 = sshll.u32 [#allocation11], 4
          %s743 = int_to_ptr.vmem [resolvable:$true] %s742
          %745 = dma.hbm_to_vmem [thread:$0]  %s741, 16, %s743, [#allocation12]
        $region20: #{tpu_custom_call.1} parent=11 // pred_fallthru
          _
        // Predicated region
        $region21: #{tpu_custom_call.1} parent=11 // pred_check
          %p746 = pneg %p289
        $region22: #{tpu_custom_call.1} parent=11 // pred_check_branch
          %748 = sbr.rel (%p746) target = $region24
        $region23: #{tpu_custom_call.1} parent=11 // pred_region
          _
        $region24: #{tpu_custom_call.1} parent=11 // pred_fallthru
          _
        // Predicated region
        $region25: #{tpu_custom_call.1} parent=11 // pred_check
          %p749 = pneg %p310
        $region26: #{tpu_custom_call.1} parent=11 // pred_check_branch
          %751 = sbr.rel (%p749) target = $region28
        $region27: #{tpu_custom_call.1} parent=11 // pred_region
          %753 = vsyncadd [#allocation12], 0
          %s755 = sshll.u32 %s9, 4
          %s756 = int_to_ptr.hbm [resolvable:$true] %s755
          %s757 = sshll.u32 [#allocation13], 4
          %s758 = int_to_ptr.vmem [resolvable:$true] %s757
          %760 = dma.hbm_to_vmem [thread:$0]  %s756, 16, %s758, [#allocation12]
        $region28: #{tpu_custom_call.1} parent=11 // pred_fallthru
          _
        // Predicated region
        $region29: #{tpu_custom_call.1} parent=11 // pred_check
          %p761 = pneg %p331
        $region30: #{tpu_custom_call.1} parent=11 // pred_check_branch
          %763 = sbr.rel (%p761) target = $region32
        $region31: #{tpu_custom_call.1} parent=11 // pred_region
          _
        $region32: #{tpu_custom_call.1} parent=11 // pred_fallthru
          _
        // Predicated region
        $region33: #{tpu_custom_call.1} parent=11 // pred_check
          %p764 = pneg %p352
        $region34: #{tpu_custom_call.1} parent=11 // pred_check_branch
          %766 = sbr.rel (%p764) target = $region36
        $region35: #{tpu_custom_call.1} parent=11 // pred_region
          %768 = vsyncadd [#allocation15], 0
          %s770 = sshll.u32 %s11, 4
          %s771 = int_to_ptr.hbm [resolvable:$true] %s770
          %s772 = sshll.u32 [#allocation14], 4
          %s773 = int_to_ptr.vmem [resolvable:$true] %s772
          %775 = dma.hbm_to_vmem [thread:$0]  %s771, 16, %s773, [#allocation15]
        $region36: #{tpu_custom_call.1} parent=11 // pred_fallthru
          _
        // Predicated region
        $region37: #{tpu_custom_call.1} parent=11 // pred_check
          %p776 = pneg %p373
        $region38: #{tpu_custom_call.1} parent=11 // pred_check_branch
          %778 = sbr.rel (%p776) target = $region40
        $region39: #{tpu_custom_call.1} parent=11 // pred_region
          %780 = vsyncadd [#allocation15], 0
          %s782 = sshll.u32 %s12, 4
          %s783 = int_to_ptr.hbm [resolvable:$true] %s782
          %s784 = sshll.u32 [#allocation16], 4
          %s785 = int_to_ptr.vmem [resolvable:$true] %s784
          %787 = dma.hbm_to_vmem [thread:$0]  %s783, 16, %s785, [#allocation15]
        $region40: #{tpu_custom_call.1} parent=11 // pred_fallthru
          _
        // Predicated region
        $region41: #{tpu_custom_call.1} parent=11 // pred_check
          %p788 = pneg %p394
        $region42: #{tpu_custom_call.1} parent=11 // pred_check_branch
          %790 = sbr.rel (%p788) target = $region44
        $region43: #{tpu_custom_call.1} parent=11 // pred_region
          %792 = vsyncadd [#allocation18], 0
          %s794 = sshll.u32 %s13, 4
          %s795 = int_to_ptr.hbm [resolvable:$true] %s794
          %s796 = sshll.u32 [#allocation17], 4
          %s797 = int_to_ptr.vmem [resolvable:$true] %s796
          %799 = dma.hbm_to_vmem [thread:$0]  %s795, 16, %s797, [#allocation18]
        $region44: #{tpu_custom_call.1} parent=11 // pred_fallthru
          _
        // Predicated region
        $region45: #{tpu_custom_call.1} parent=11 // pred_check
          %p800 = pneg %p415
        $region46: #{tpu_custom_call.1} parent=11 // pred_check_branch
          %802 = sbr.rel (%p800) target = $region48
        $region47: #{tpu_custom_call.1} parent=11 // pred_region
          _
        $region48: #{tpu_custom_call.1} parent=11 // pred_fallthru
          _
        // Predicated region
        $region49: #{tpu_custom_call.1} parent=11 // pred_check
          %p803 = pneg %p436
        $region50: #{tpu_custom_call.1} parent=11 // pred_check_branch
          %805 = sbr.rel (%p803) target = $region52
        $region51: #{tpu_custom_call.1} parent=11 // pred_region
          %807 = vsyncadd [#allocation18], 0
          %s809 = sshll.u32 %s15, 4
          %s810 = int_to_ptr.hbm [resolvable:$true] %s809
          %s811 = sshll.u32 [#allocation19], 4
          %s812 = int_to_ptr.vmem [resolvable:$true] %s811
          %814 = dma.hbm_to_vmem [thread:$0]  %s810, 16, %s812, [#allocation18]
        $region52: #{tpu_custom_call.1} parent=11 // pred_fallthru
          _
        // Predicated region
        $region53: #{tpu_custom_call.1} parent=11 // pred_check
          %p815 = pneg %p457
        $region54: #{tpu_custom_call.1} parent=11 // pred_check_branch
          %817 = sbr.rel (%p815) target = $region56
        $region55: #{tpu_custom_call.1} parent=11 // pred_region
          _
        $region56: #{tpu_custom_call.1} parent=11 // pred_fallthru
          _
        // Predicated region
        $region57: #{tpu_custom_call.1} parent=11 // pred_check
          %p818 = pneg %p478
        $region58: #{tpu_custom_call.1} parent=11 // pred_check_branch
          %820 = sbr.rel (%p818) target = $region60
        $region59: #{tpu_custom_call.1} parent=11 // pred_region
          _
        $region60: #{tpu_custom_call.1} parent=11 // pred_fallthru
          _
        // Predicated region
        $region61: #{tpu_custom_call.1} parent=11 // pred_check
          %p821 = pneg %p499
        $region62: #{tpu_custom_call.1} parent=11 // pred_check_branch
          %823 = sbr.rel (%p821) target = $region64
        $region63: #{tpu_custom_call.1} parent=11 // pred_region
          %825 = vsyncadd [#allocation21], 0
          %s826 = sshll.u32 %s18, 4
          %s827 = int_to_ptr.hbm [resolvable:$true] %s826
          %s828 = sshll.u32 [#allocation20], 4
          %s829 = int_to_ptr.vmem [resolvable:$true] %s828
          %834 = dma.hbm_to_vmem [thread:$0]  %s827, 256, %s829, [#allocation21], 64, 64, 4
        $region64: #{tpu_custom_call.1} parent=11 // pred_fallthru
          _
        // Predicated region
        $region65: #{tpu_custom_call.1} parent=11 // pred_check
          %p835 = pneg %p520
        $region66: #{tpu_custom_call.1} parent=11 // pred_check_branch
          %837 = sbr.rel (%p835) target = $region68
        $region67: #{tpu_custom_call.1} parent=11 // pred_region
          _
        $region68: #{tpu_custom_call.1} parent=11 // pred_fallthru
          _
        // Predicated region
        $region69: #{tpu_custom_call.1} parent=11 // pred_check
          %p838 = pneg %p541
        $region70: #{tpu_custom_call.1} parent=11 // pred_check_branch
          %840 = sbr.rel (%p838) target = $region72
        $region71: #{tpu_custom_call.1} parent=11 // pred_region
          _
        $region72: #{tpu_custom_call.1} parent=11 // pred_fallthru
          _
        // Predicated region
        $region73: #{tpu_custom_call.1} parent=11 // pred_check
          %p841 = pneg %p562
        $region74: #{tpu_custom_call.1} parent=11 // pred_check_branch
          %843 = sbr.rel (%p841) target = $region76
        $region75: #{tpu_custom_call.1} parent=11 // pred_region
          _
        $region76: #{tpu_custom_call.1} parent=11 // pred_fallthru
          _
        // Predicated region
        $region77: #{tpu_custom_call.1} parent=11 // pred_check
          %p844 = pneg %p583
        $region78: #{tpu_custom_call.1} parent=11 // pred_check_branch
          %846 = sbr.rel (%p844) target = $region80
        $region79: #{tpu_custom_call.1} parent=11 // pred_region
          %848 = vsyncadd [#allocation21], 0
          %s849 = sshll.u32 %s22, 4
          %s850 = int_to_ptr.hbm [resolvable:$true] %s849
          %s851 = sshll.u32 [#allocation22], 4
          %s852 = int_to_ptr.vmem [resolvable:$true] %s851
          %857 = dma.hbm_to_vmem [thread:$0]  %s850, 256, %s852, [#allocation21], 64, 64, 4
        $region80: #{tpu_custom_call.1} parent=11 // pred_fallthru
          _
        // Predicated region
        $region81: #{tpu_custom_call.1} parent=11 // pred_check
          %p858 = pneg %p604
        $region82: #{tpu_custom_call.1} parent=11 // pred_check_branch
          %860 = sbr.rel (%p858) target = $region84
        $region83: #{tpu_custom_call.1} parent=11 // pred_region
          _
        $region84: #{tpu_custom_call.1} parent=11 // pred_fallthru
          _
        // Predicated region
        $region85: #{tpu_custom_call.1} parent=11 // pred_check
          %p861 = pneg %p625
        $region86: #{tpu_custom_call.1} parent=11 // pred_check_branch
          %863 = sbr.rel (%p861) target = $region88
        $region87: #{tpu_custom_call.1} parent=11 // pred_region
          _
        $region88: #{tpu_custom_call.1} parent=11 // pred_fallthru
          _
        // Predicated region
        $region89: #{tpu_custom_call.1} parent=11 // pred_check
          %p864 = pneg %p646
        $region90: #{tpu_custom_call.1} parent=11 // pred_check_branch
          %866 = sbr.rel (%p864) target = $region92
        $region91: #{tpu_custom_call.1} parent=11 // pred_region
          _
        $region92: #{tpu_custom_call.1} parent=11 // pred_fallthru
          _
        // Predicated region
        $region93: #{tpu_custom_call.1} parent=11 // pred_check
          %p867 = pneg %p667
        $region94: #{tpu_custom_call.1} parent=11 // pred_check_branch
          %869 = sbr.rel (%p867) target = $region96
        $region95: #{tpu_custom_call.1} parent=11 // pred_region
          _
        $region96: #{tpu_custom_call.1} parent=11 // pred_fallthru
          _
        // Predicated region
        $region97: #{tpu_custom_call.1} parent=11 // pred_check
          %p870 = pneg %p688
        $region98: #{tpu_custom_call.1} parent=11 // pred_check_branch
          %872 = sbr.rel (%p870) target = $region100
        $region99: #{tpu_custom_call.1} parent=11 // pred_region
          _
        $region100: #{tpu_custom_call.1} parent=11 // pred_fallthru
          _
      $region12: #{tpu_custom_call.1} parent=5 // pred_fallthru
        _
      %p873 = scmp.lt.s32.totalorder %s50, 2
      // Predicated region
      $region101: #{tpu_custom_call.1} parent=5 // pred_check
        %p874 = pneg %p873
      $region102: #{tpu_custom_call.1} parent=5 // pred_check_branch
        %876 = sbr.rel (%p874) target = $region104
      $region103: #{tpu_custom_call.1} parent=5 // pred_region
        // Predicated region
        $region105: #{tpu_custom_call.1} parent=103 // pred_check
          %p877 = pneg %p84
        $region106: #{tpu_custom_call.1} parent=103 // pred_check_branch
          %879 = sbr.rel (%p877) target = $region108
        $region107: #{tpu_custom_call.1} parent=103 // pred_region
          %s880 = sand.u32 %s74, 1
          %s881 = scalar_lea.sflag [#allocation3], %s880
          %s882 = sand.u32 %s74, 1
          %s883 = smul.addr %s882, 4
          %s884 = scalar_lea.vmem [#allocation2], %s883
          %886 = vsyncadd %s881, 0
          %s887 = sadd.s32 %s58, %s57
          %s888 = smul.addr %s887, 4
          %s889 = scalar_lea.hbm %s0, %s888
          %s891 = sshll.u32 %s889, 4
          %s892 = int_to_ptr.hbm [resolvable:$true] %s891
          %s893 = sshll.u32 %s884, 4
          %s894 = int_to_ptr.vmem [resolvable:$true] %s893
          %896 = dma.hbm_to_vmem [thread:$0]  %s892, 64, %s894, %s881
        $region108: #{tpu_custom_call.1} parent=103 // pred_fallthru
          _
        // Predicated region
        $region109: #{tpu_custom_call.1} parent=103 // pred_check
          %p897 = pneg %p110
        $region110: #{tpu_custom_call.1} parent=103 // pred_check_branch
          %899 = sbr.rel (%p897) target = $region112
        $region111: #{tpu_custom_call.1} parent=103 // pred_region
          %s900 = sand.u32 %s50, 1
          %s901 = scalar_lea.sflag [#allocation6], %s900
          %s902 = sand.u32 %s100, 1
          %s903 = smul.addr %s902, 4
          %s904 = scalar_lea.vmem [#allocation5], %s903
          %906 = vsyncadd %s901, 0
          %s907 = smul.addr %s57, 4
          %s908 = scalar_lea.hbm %s1, %s907
          %s910 = sshll.u32 %s908, 4
          %s911 = int_to_ptr.hbm [resolvable:$true] %s910
          %s912 = sshll.u32 %s904, 4
          %s913 = int_to_ptr.vmem [resolvable:$true] %s912
          %915 = dma.hbm_to_vmem [thread:$0]  %s911, 64, %s913, %s901
        $region112: #{tpu_custom_call.1} parent=103 // pred_fallthru
          _
        // Predicated region
        $region113: #{tpu_custom_call.1} parent=103 // pred_check
          %p916 = pneg %p136
        $region114: #{tpu_custom_call.1} parent=103 // pred_check_branch
          %918 = sbr.rel (%p916) target = $region116
        $region115: #{tpu_custom_call.1} parent=103 // pred_region
          %s919 = sand.u32 %s50, 1
          %s920 = scalar_lea.sflag [#allocation6], %s919
          %s921 = sand.u32 %s126, 1
          %s922 = smul.addr %s921, 4
          %s923 = scalar_lea.vmem [#allocation7], %s922
          %925 = vsyncadd %s920, 0
          %s926 = smul.addr %s57, 4
          %s927 = scalar_lea.hbm %s2, %s926
          %s929 = sshll.u32 %s927, 4
          %s930 = int_to_ptr.hbm [resolvable:$true] %s929
          %s931 = sshll.u32 %s923, 4
          %s932 = int_to_ptr.vmem [resolvable:$true] %s931
          %934 = dma.hbm_to_vmem [thread:$0]  %s930, 64, %s932, %s920
        $region116: #{tpu_custom_call.1} parent=103 // pred_fallthru
          _
        // Predicated region
        $region117: #{tpu_custom_call.1} parent=103 // pred_check
          %p935 = pneg %p164
        $region118: #{tpu_custom_call.1} parent=103 // pred_check_branch
          %937 = sbr.rel (%p935) target = $region120
        $region119: #{tpu_custom_call.1} parent=103 // pred_region
          %s938 = sand.u32 %s50, 1
          %s939 = scalar_lea.sflag [#allocation9], %s938
          %s940 = sand.u32 %s154, 1
          %s941 = smul.addr %s940, 4
          %s942 = scalar_lea.vmem [#allocation8], %s941
          %944 = vsyncadd %s939, 0
          %s945 = sadd.s32 %s58, %s57
          %s946 = smul.addr %s945, 4
          %s947 = scalar_lea.hbm %s3, %s946
          %s949 = sshll.u32 %s947, 4
          %s950 = int_to_ptr.hbm [resolvable:$true] %s949
          %s951 = sshll.u32 %s942, 4
          %s952 = int_to_ptr.vmem [resolvable:$true] %s951
          %954 = dma.hbm_to_vmem [thread:$0]  %s950, 64, %s952, %s939
        $region120: #{tpu_custom_call.1} parent=103 // pred_fallthru
          _
        // Predicated region
        $region121: #{tpu_custom_call.1} parent=103 // pred_check
          %p955 = pneg %p192
        $region122: #{tpu_custom_call.1} parent=103 // pred_check_branch
          %957 = sbr.rel (%p955) target = $region124
        $region123: #{tpu_custom_call.1} parent=103 // pred_region
          %s958 = sand.u32 %s50, 1
          %s959 = scalar_lea.sflag [#allocation9], %s958
          %s960 = sand.u32 %s182, 1
          %s961 = smul.addr %s960, 4
          %s962 = scalar_lea.vmem [#allocation10], %s961
          %964 = vsyncadd %s959, 0
          %s965 = sadd.s32 %s58, %s57
          %s966 = smul.addr %s965, 4
          %s967 = scalar_lea.hbm %s4, %s966
          %s969 = sshll.u32 %s967, 4
          %s970 = int_to_ptr.hbm [resolvable:$true] %s969
          %s971 = sshll.u32 %s962, 4
          %s972 = int_to_ptr.vmem [resolvable:$true] %s971
          %974 = dma.hbm_to_vmem [thread:$0]  %s970, 64, %s972, %s959
        $region124: #{tpu_custom_call.1} parent=103 // pred_fallthru
          _
        // Predicated region
        $region125: #{tpu_custom_call.1} parent=103 // pred_check
          %p975 = pneg %p220
        $region126: #{tpu_custom_call.1} parent=103 // pred_check_branch
          %977 = sbr.rel (%p975) target = $region128
        $region127: #{tpu_custom_call.1} parent=103 // pred_region
          %p978 = scmp.lt.s32.totalorder %s57, 1
          %s979 = scalar_select %p978, %s57, 1
          %p980 = scmp.lt.s32.totalorder %s58, 0
          %s981 = scalar_select %p980, %s58, 0
          %s982 = sadd.s32 %s981, %s979
          %s983 = smul.addr %s982, 8
          %s984 = scalar_lea.vmem %s5, %s983
        $region128: #{tpu_custom_call.1} parent=103 // pred_fallthru
          _
      $region104: #{tpu_custom_call.1} parent=5 // pred_fallthru
        _
      %p985 = scmp.le.s32.totalorder 1, %s50
      %p986 = scmp.lt.s32.totalorder %s50, 3
      %p987 = pnand %p985, %p986
      %p988 = pneg %p987
      // Predicated region
      $region129: #{tpu_custom_call.1} parent=5 // pred_check
        _
      $region130: #{tpu_custom_call.1} parent=5 // pred_check_branch
        %990 = sbr.rel (%p987) target = $region132
      $region131: #{tpu_custom_call.1} parent=5 // pred_region
        %s991 = ssub.s32 %s50, 1
        %s992 = sand.u32 %s77, 1
        %s993 = scalar_lea.sflag [#allocation3], %s992
        %s994 = sand.u32 %s77, 1
        %s995 = smul.addr %s994, 4
        %s996 = scalar_lea.vmem [#allocation2], %s995
        // Predicated region
        $region133: #{tpu_custom_call.1} parent=131 // pred_check
          %p997 = pneg %p90
        $region134: #{tpu_custom_call.1} parent=131 // pred_check_branch
          %999 = sbr.rel (%p997) target = $region136
        $region135: #{tpu_custom_call.1} parent=131 // pred_region
          %1001 = dma.done %s993, 64
        $region136: #{tpu_custom_call.1} parent=131 // pred_fallthru
          _
        %s1002 = sand.u32 %s55, 1
        %s1003 = scalar_lea.sflag [#allocation6], %s1002
        %s1004 = sand.u32 %s103, 1
        %s1005 = smul.addr %s1004, 4
        %s1006 = scalar_lea.vmem [#allocation5], %s1005
        // Predicated region
        $region137: #{tpu_custom_call.1} parent=131 // pred_check
          %p1007 = pneg %p116
        $region138: #{tpu_custom_call.1} parent=131 // pred_check_branch
          %1009 = sbr.rel (%p1007) target = $region140
        $region139: #{tpu_custom_call.1} parent=131 // pred_region
          %1011 = dma.done %s1003, 64
        $region140: #{tpu_custom_call.1} parent=131 // pred_fallthru
          _
        %s1012 = sand.u32 %s55, 1
        %s1013 = scalar_lea.sflag [#allocation6], %s1012
        %s1014 = sand.u32 %s129, 1
        %s1015 = smul.addr %s1014, 4
        %s1016 = scalar_lea.vmem [#allocation7], %s1015
        // Predicated region
        $region141: #{tpu_custom_call.1} parent=131 // pred_check
          %p1017 = pneg %p142
        $region142: #{tpu_custom_call.1} parent=131 // pred_check_branch
          %1019 = sbr.rel (%p1017) target = $region144
        $region143: #{tpu_custom_call.1} parent=131 // pred_region
          %1021 = dma.done %s1013, 64
        $region144: #{tpu_custom_call.1} parent=131 // pred_fallthru
          _
        %s1022 = sand.u32 %s55, 1
        %s1023 = scalar_lea.sflag [#allocation9], %s1022
        %s1024 = sand.u32 %s157, 1
        %s1025 = smul.addr %s1024, 4
        %s1026 = scalar_lea.vmem [#allocation8], %s1025
        // Predicated region
        $region145: #{tpu_custom_call.1} parent=131 // pred_check
          %p1027 = pneg %p170
        $region146: #{tpu_custom_call.1} parent=131 // pred_check_branch
          %1029 = sbr.rel (%p1027) target = $region148
        $region147: #{tpu_custom_call.1} parent=131 // pred_region
          %1031 = dma.done %s1023, 64
        $region148: #{tpu_custom_call.1} parent=131 // pred_fallthru
          _
        %s1032 = sand.u32 %s55, 1
        %s1033 = scalar_lea.sflag [#allocation9], %s1032
        %s1034 = sand.u32 %s185, 1
        %s1035 = smul.addr %s1034, 4
        %s1036 = scalar_lea.vmem [#allocation10], %s1035
        // Predicated region
        $region149: #{tpu_custom_call.1} parent=131 // pred_check
          %p1037 = pneg %p198
        $region150: #{tpu_custom_call.1} parent=131 // pred_check_branch
          %1039 = sbr.rel (%p1037) target = $region152
        $region151: #{tpu_custom_call.1} parent=131 // pred_region
          %1041 = dma.done %s1033, 64
        $region152: #{tpu_custom_call.1} parent=131 // pred_fallthru
          _
        // Predicated region
        $region153: #{tpu_custom_call.1} parent=131 // pred_check
          %p1042 = pneg %p268
        $region154: #{tpu_custom_call.1} parent=131 // pred_check_branch
          %1044 = sbr.rel (%p1042) target = $region156
        $region155: #{tpu_custom_call.1} parent=131 // pred_region
          %1046 = dma.done [#allocation12], 16
        $region156: #{tpu_custom_call.1} parent=131 // pred_fallthru
          _
        // Predicated region
        $region157: #{tpu_custom_call.1} parent=131 // pred_check
          %p1047 = pneg %p310
        $region158: #{tpu_custom_call.1} parent=131 // pred_check_branch
          %1049 = sbr.rel (%p1047) target = $region160
        $region159: #{tpu_custom_call.1} parent=131 // pred_region
          %1051 = dma.done [#allocation12], 16
        $region160: #{tpu_custom_call.1} parent=131 // pred_fallthru
          _
        // Predicated region
        $region161: #{tpu_custom_call.1} parent=131 // pred_check
          %p1052 = pneg %p352
        $region162: #{tpu_custom_call.1} parent=131 // pred_check_branch
          %1054 = sbr.rel (%p1052) target = $region164
        $region163: #{tpu_custom_call.1} parent=131 // pred_region
          %1056 = dma.done [#allocation15], 16
        $region164: #{tpu_custom_call.1} parent=131 // pred_fallthru
          _
        // Predicated region
        $region165: #{tpu_custom_call.1} parent=131 // pred_check
          %p1057 = pneg %p373
        $region166: #{tpu_custom_call.1} parent=131 // pred_check_branch
          %1059 = sbr.rel (%p1057) target = $region168
        $region167: #{tpu_custom_call.1} parent=131 // pred_region
          %1061 = dma.done [#allocation15], 16
        $region168: #{tpu_custom_call.1} parent=131 // pred_fallthru
          _
        // Predicated region
        $region169: #{tpu_custom_call.1} parent=131 // pred_check
          %p1062 = pneg %p394
        $region170: #{tpu_custom_call.1} parent=131 // pred_check_branch
          %1064 = sbr.rel (%p1062) target = $region172
        $region171: #{tpu_custom_call.1} parent=131 // pred_region
          %1066 = dma.done [#allocation18], 16
        $region172: #{tpu_custom_call.1} parent=131 // pred_fallthru
          _
        // Predicated region
        $region173: #{tpu_custom_call.1} parent=131 // pred_check
          %p1067 = pneg %p436
        $region174: #{tpu_custom_call.1} parent=131 // pred_check_branch
          %1069 = sbr.rel (%p1067) target = $region176
        $region175: #{tpu_custom_call.1} parent=131 // pred_region
          %1071 = dma.done [#allocation18], 16
        $region176: #{tpu_custom_call.1} parent=131 // pred_fallthru
          _
        // Predicated region
        $region177: #{tpu_custom_call.1} parent=131 // pred_check
          %p1072 = pneg %p499
        $region178: #{tpu_custom_call.1} parent=131 // pred_check_branch
          %1074 = sbr.rel (%p1072) target = $region180
        $region179: #{tpu_custom_call.1} parent=131 // pred_region
          %1076 = dma.done [#allocation21], 256
        $region180: #{tpu_custom_call.1} parent=131 // pred_fallthru
          _
        // Predicated region
        $region181: #{tpu_custom_call.1} parent=131 // pred_check
          %p1077 = pneg %p583
        $region182: #{tpu_custom_call.1} parent=131 // pred_check_branch
          %1079 = sbr.rel (%p1077) target = $region184
        $region183: #{tpu_custom_call.1} parent=131 // pred_region
          %1081 = dma.done [#allocation21], 256
        $region184: #{tpu_custom_call.1} parent=131 // pred_fallthru
          _
        %s1082 = sand.u32 %s77, 1
        %s1083 = scalar_lea.sflag [#allocation3], %s1082
        %s1084 = sand.u32 %s77, 1
        %s1085 = smul.addr %s1084, 4
        %s1086 = scalar_lea.vmem [#allocation2], %s1085
        %p1087 = pneg %p90
        %p1088 = pneg %p87
        %s1089 = sand.u32 %s55, 1
        %s1090 = scalar_lea.sflag [#allocation6], %s1089
        %s1091 = sand.u32 %s103, 1
        %s1092 = smul.addr %s1091, 4
        %s1093 = scalar_lea.vmem [#allocation5], %s1092
        %p1094 = pneg %p116
        %p1095 = pneg %p113
        %s1096 = sand.u32 %s55, 1
        %s1097 = scalar_lea.sflag [#allocation6], %s1096
        %s1098 = sand.u32 %s129, 1
        %s1099 = smul.addr %s1098, 4
        %s1100 = scalar_lea.vmem [#allocation7], %s1099
        %p1101 = pneg %p142
        %p1102 = pneg %p139
        %s1103 = sand.u32 %s55, 1
        %s1104 = scalar_lea.sflag [#allocation9], %s1103
        %s1105 = sand.u32 %s157, 1
        %s1106 = smul.addr %s1105, 4
        %s1107 = scalar_lea.vmem [#allocation8], %s1106
        %p1108 = pneg %p170
        %p1109 = pneg %p167
        %s1110 = sand.u32 %s55, 1
        %s1111 = scalar_lea.sflag [#allocation9], %s1110
        %s1112 = sand.u32 %s185, 1
        %s1113 = smul.addr %s1112, 4
        %s1114 = scalar_lea.vmem [#allocation10], %s1113
        %p1115 = pneg %p198
        %p1116 = pneg %p195
        %p1117 = scmp.lt.s32.totalorder %s59, 1
        %s1118 = scalar_select %p1117, %s59, 1
        %p1119 = scmp.lt.s32.totalorder %s60, 0
        %s1120 = scalar_select %p1119, %s60, 0
        %s1121 = sadd.s32 %s1120, %s1118
        %s1122 = smul.addr %s1121, 8
        %s1123 = scalar_lea.vmem %s5, %s1122
        %p1124 = pneg %p226
        %p1125 = pneg %p223
        %p1126 = pneg %p247
        %p1127 = pneg %p244
        %p1128 = pneg %p268
        %p1129 = pneg %p265
        %p1130 = pneg %p289
        %p1131 = pneg %p286
        %p1132 = pneg %p310
        %p1133 = pneg %p307
        %p1134 = pneg %p331
        %p1135 = pneg %p328
        %p1136 = pneg %p352
        %p1137 = pneg %p349
        %p1138 = pneg %p373
        %p1139 = pneg %p370
        %p1140 = pneg %p394
        %p1141 = pneg %p391
        %p1142 = pneg %p415
        %p1143 = pneg %p412
        %p1144 = pneg %p436
        %p1145 = pneg %p433
        %p1146 = pneg %p457
        %p1147 = pneg %p454
        %p1148 = pneg %p478
        %p1149 = pneg %p475
        %p1150 = pneg %p499
        %p1151 = pneg %p496
        %p1152 = pneg %p520
        %p1153 = pneg %p517
        %p1154 = pneg %p541
        %p1155 = pneg %p538
        %p1156 = pneg %p562
        %p1157 = pneg %p559
        %p1158 = pneg %p583
        %p1159 = pneg %p580
        %p1160 = pneg %p604
        %p1161 = pneg %p601
        %p1162 = pneg %p625
        %p1163 = pneg %p622
        %p1164 = pneg %p646
        %p1165 = pneg %p643
        %p1166 = pneg %p667
        %p1167 = pneg %p664
        %p1168 = pneg %p688
        %p1169 = pneg %p685
        %p1170 = pneg %p716
        %p1171 = pneg %p713
        %s1172 = sand.u32 %s703, 1
        %s1173 = scalar_lea.sflag [#allocation4], %s1172
        %s1174 = sand.u32 %s703, 1
        %s1175 = smul.addr %s1174, 8
        %s1176 = scalar_lea.vmem [#allocation23], %s1175
        %p1177 = scmp.lt.s32.totalorder %s59, 1
        %s1178 = scalar_select %p1177, %s59, 1
        %p1179 = scmp.lt.s32.totalorder %s60, 0
        %s1180 = scalar_select %p1179, %s60, 0
        %s1181 = sadd.s32 %s1180, %s1178
        %s1182 = smul.addr %s1181, 8
        %s1183 = scalar_lea.vmem %s5, %s1182
        %v1185 = vld [vmem:[%s996] sm:$0xf]
        %v1186 = vunpack.c.l.bf16 %v1185
        %v1187 = vld [vmem:[%s1183] sm:$0xff]
        %v1188 = vld [vmem:[%s1006] sm:$0xf]
        %v1189 = vld [vmem:[%s1026] sm:$0xf]
        %v1190 = vld [vmem:[%s6] sm:$0xf]
        %v1191 = vld [vmem:[%s6 + $0x4] sm:$0xf]
        %v1192 = vld [vmem:[%s6 + $0x8] sm:$0xf]
        %v1193 = vld [vmem:[%s6 + $0xc] sm:$0xf]
        %v1194 = vld [vmem:[#allocation11] sm:$0x1]
        %v1195 = vld [vmem:[%s8] sm:$0xf]
        %v1196 = vld [vmem:[%s8 + $0x4] sm:$0xf]
        %v1197 = vld [vmem:[%s8 + $0x8] sm:$0xf]
        %v1198 = vld [vmem:[%s8 + $0xc] sm:$0xf]
        %v1199 = vld [vmem:[#allocation13] sm:$0x1]
        %v1200 = vld [vmem:[%s10] sm:$0xf]
        %v1201 = vld [vmem:[%s10 + $0x4] sm:$0xf]
        %v1202 = vld [vmem:[%s10 + $0x8] sm:$0xf]
        %v1203 = vld [vmem:[%s10 + $0xc] sm:$0xf]
        %v1204 = vld [vmem:[#allocation14] sm:$0x1]
        %v1206 = vperm.slane %v1194, 0
        %v1212 = vunpack.c.l.b16 %v1190
        %v1213 = vunpack.c.l.b16 %v1191
        %v1214 = vunpack.c.l.b16 %v1192
        %v1215 = vunpack.c.l.b16 %v1193
        %v1216 = vpack.c.b16 %v1213, %v1212
        %v1217 = vpack.c.b16 %v1215, %v1214
        %vm1220 = vcmask 261120
        %v1222 = vsel %vm1220, %v1185, 0
        %1224 = vmatpush.bf16.msra.mxu0 0
        %1225 = vmatpush.bf16.msra.mxu0 0
        %1226 = vmatpush.bf16.msra.mxu0 0
        %1227 = vmatpush.bf16.msra.mxu0 0
        %1228 = vmatpush.bf16.msra.mxu0 0
        %1229 = vmatpush.bf16.msra.mxu0 0
        %1230 = vmatpush.bf16.msra.mxu0 %v1217
        %1231 = vmatpush.bf16.msra.mxu0 %v1216
        %1232 = vmatmul.bf16.gmra.mxu0 %v1222
        %v1233 = vpop.f32.mrf.mxu0
        %v1234 = vadd.f32 %v1206, %v1233
        %v1235 = vpop.f32.mrf.mxu0
        %1236 = vdwg.mxu0
        %v1238 = vperm.slane %v1199, 0
        %v1244 = vunpack.c.l.b16 %v1195
        %v1245 = vunpack.c.l.b16 %v1196
        %v1246 = vunpack.c.l.b16 %v1197
        %v1247 = vunpack.c.l.b16 %v1198
        %v1248 = vpack.c.b16 %v1245, %v1244
        %v1249 = vpack.c.b16 %v1247, %v1246
        %v1253 = vsel %vm1220, %v1188, 0
        %1255 = vmatpush.bf16.msra.mxu0 0
        %1256 = vmatpush.bf16.msra.mxu0 0
        %1257 = vmatpush.bf16.msra.mxu0 0
        %1258 = vmatpush.bf16.msra.mxu0 0
        %1259 = vmatpush.bf16.msra.mxu0 0
        %1260 = vmatpush.bf16.msra.mxu0 0
        %1261 = vmatpush.bf16.msra.mxu0 %v1249
        %1262 = vmatpush.bf16.msra.mxu0 %v1248
        %1263 = vmatmul.bf16.gmra.mxu0 %v1253
        %v1264 = vpop.f32.mrf.mxu0
        %v1265 = vadd.f32 %v1238, %v1264
        %v1266 = vpop.f32.mrf.mxu0
        %1267 = vdwg.mxu0
        %1269 = vrot.lane.b32.xlu0 %v1234, 120
        %v1270 = vpop.permute.xlu0 %1269
        %1272 = vrot.lane.b32.xlu0 %v1234, 112
        %v1273 = vpop.permute.xlu0 %1272
        %1275 = vrot.lane.b32.xlu0 %v1234, 104
        %v1276 = vpop.permute.xlu0 %1275
        %v1278 = vrot.slane %v1273, 4
        %vm1279 = vcmask 1047556
        %v1280 = vsel %vm1279, %v1278, %v1234
        %v1281 = vrot.slane %v1234, 4
        %v1282 = vsel %vm1279, %v1273, %v1281
        %v1284 = vunpack.c.l.s4 1983009808
        %v1285 = vunpack.c.0.s8 %v1284
        %v1286 = vperm.slane %v1280, %v1285
        %v1288 = vunpack.c.l.s4 1983009808
        %v1289 = vunpack.c.0.s8 %v1288
        %v1290 = vperm.slane %v1282, %v1289
        %v1291 = vrot.slane %v1276, 4
        %v1292 = vsel %vm1279, %v1291, %v1270
        %v1293 = vrot.slane %v1270, 4
        %v1294 = vsel %vm1279, %v1276, %v1293
        %v1296 = vunpack.c.l.s4 1983009808
        %v1297 = vunpack.c.0.s8 %v1296
        %v1298 = vperm.slane %v1292, %v1297
        %v1300 = vunpack.c.l.s4 1983009808
        %v1301 = vunpack.c.0.s8 %v1300
        %v1302 = vperm.slane %v1294, %v1301
        %v1303 = vrot.slane %v1298, 4
        %v1304 = vsel %vm1279, %v1303, %v1286
        %v1305 = vrot.slane %v1286, 4
        %v1306 = vsel %vm1279, %v1298, %v1305
        %v1308 = vunpack.c.l.s4 1934713408
        %v1309 = vunpack.c.0.s8 %v1308
        %v1310 = vperm.slane %v1304, %v1309
        %v1312 = vunpack.c.l.s4 1934713408
        %v1313 = vunpack.c.0.s8 %v1312
        %v1314 = vperm.slane %v1306, %v1313
        %v1315 = vrot.slane %v1302, 4
        %v1316 = vsel %vm1279, %v1315, %v1290
        %v1317 = vrot.slane %v1290, 4
        %v1318 = vsel %vm1279, %v1302, %v1317
        %v1320 = vunpack.c.l.s4 1934713408
        %v1321 = vunpack.c.0.s8 %v1320
        %v1322 = vperm.slane %v1316, %v1321
        %v1324 = vunpack.c.l.s4 1934713408
        %v1325 = vunpack.c.0.s8 %v1324
        %v1326 = vperm.slane %v1318, %v1325
        %v1327 = vrot.slane %v1310, 4
        %v1328 = vsel %vm1279, 0.0, %v1327
        %v1329 = vrot.slane %v1314, 4
        %v1330 = vsel %vm1279, 0.0, %v1329
        %v1331 = vrot.slane %v1322, 4
        %v1332 = vsel %vm1279, 0.0, %v1331
        %v1333 = vrot.slane %v1326, 4
        %v1334 = vsel %vm1279, 0.0, %v1333
        %v1335 = vpack.c.bf16 %v1310, %v1310
        %v1336 = vpack.c.bf16 %v1328, %v1328
        %v1337 = vpack.c.bf16 %v1314, %v1314
        %v1338 = vpack.c.bf16 %v1330, %v1330
        %v1339 = vpack.c.bf16 %v1322, %v1322
        %v1340 = vpack.c.bf16 %v1332, %v1332
        %v1341 = vpack.c.bf16 %v1326, %v1326
        %v1342 = vpack.c.bf16 %v1334, %v1334
        %1344 = vrot.lane.b32.xlu0 %v1265, 120
        %v1345 = vpop.permute.xlu0 %1344
        %1347 = vrot.lane.b32.xlu0 %v1265, 112
        %v1348 = vpop.permute.xlu0 %1347
        %1350 = vrot.lane.b32.xlu0 %v1265, 104
        %v1351 = vpop.permute.xlu0 %1350
        %v1353 = vrot.slane %v1348, 4
        %v1354 = vsel %vm1279, %v1353, %v1265
        %v1355 = vrot.slane %v1265, 4
        %v1356 = vsel %vm1279, %v1348, %v1355
        %v1358 = vunpack.c.l.s4 1983009808
        %v1359 = vunpack.c.0.s8 %v1358
        %v1360 = vperm.slane %v1354, %v1359
        %v1362 = vunpack.c.l.s4 1983009808
        %v1363 = vunpack.c.0.s8 %v1362
        %v1364 = vperm.slane %v1356, %v1363
        %v1365 = vrot.slane %v1351, 4
        %v1366 = vsel %vm1279, %v1365, %v1345
        %v1367 = vrot.slane %v1345, 4
        %v1368 = vsel %vm1279, %v1351, %v1367
        %v1370 = vunpack.c.l.s4 1983009808
        %v1371 = vunpack.c.0.s8 %v1370
        %v1372 = vperm.slane %v1366, %v1371
        %v1374 = vunpack.c.l.s4 1983009808
        %v1375 = vunpack.c.0.s8 %v1374
        %v1376 = vperm.slane %v1368, %v1375
        %v1377 = vrot.slane %v1372, 4
        %v1378 = vsel %vm1279, %v1377, %v1360
        %v1379 = vrot.slane %v1360, 4
        %v1380 = vsel %vm1279, %v1372, %v1379
        %v1382 = vunpack.c.l.s4 1934713408
        %v1383 = vunpack.c.0.s8 %v1382
        %v1384 = vperm.slane %v1378, %v1383
        %v1386 = vunpack.c.l.s4 1934713408
        %v1387 = vunpack.c.0.s8 %v1386
        %v1388 = vperm.slane %v1380, %v1387
        %v1389 = vrot.slane %v1376, 4
        %v1390 = vsel %vm1279, %v1389, %v1364
        %v1391 = vrot.slane %v1364, 4
        %v1392 = vsel %vm1279, %v1376, %v1391
        %v1394 = vunpack.c.l.s4 1934713408
        %v1395 = vunpack.c.0.s8 %v1394
        %v1396 = vperm.slane %v1390, %v1395
        %v1398 = vunpack.c.l.s4 1934713408
        %v1399 = vunpack.c.0.s8 %v1398
        %v1400 = vperm.slane %v1392, %v1399
        %v1401 = vrot.slane %v1384, 4
        %v1402 = vsel %vm1279, 0.0, %v1401
        %v1403 = vrot.slane %v1388, 4
        %v1404 = vsel %vm1279, 0.0, %v1403
        %v1405 = vrot.slane %v1396, 4
        %v1406 = vsel %vm1279, 0.0, %v1405
        %v1407 = vrot.slane %v1400, 4
        %v1408 = vsel %vm1279, 0.0, %v1407
        %v1409 = vpack.c.bf16 %v1384, %v1384
        %v1410 = vpack.c.bf16 %v1402, %v1402
        %v1411 = vpack.c.bf16 %v1388, %v1388
        %v1412 = vpack.c.bf16 %v1404, %v1404
        %v1413 = vpack.c.bf16 %v1396, %v1396
        %v1414 = vpack.c.bf16 %v1406, %v1406
        %v1415 = vpack.c.bf16 %v1400, %v1400
        %v1416 = vpack.c.bf16 %v1408, %v1408
        %1417 = vrot.lane.b32.xlu0 %v1265, 96
        %v1418 = vpop.permute.xlu0 %1417
        %1419 = vrot.lane.b32.xlu0 %v1345, 96
        %v1420 = vpop.permute.xlu0 %1419
        %1421 = vrot.lane.b32.xlu0 %v1348, 96
        %v1422 = vpop.permute.xlu0 %1421
        %1423 = vrot.lane.b32.xlu0 %v1351, 96
        %v1424 = vpop.permute.xlu0 %1423
        %v1429 = vrot.slane %v1422, 4
        %v1430 = vsel %vm1279, %v1429, %v1418
        %v1431 = vrot.slane %v1418, 4
        %v1432 = vsel %vm1279, %v1422, %v1431
        %v1434 = vunpack.c.l.s4 1983009808
        %v1435 = vunpack.c.0.s8 %v1434
        %v1436 = vperm.slane %v1430, %v1435
        %v1438 = vunpack.c.l.s4 1983009808
        %v1439 = vunpack.c.0.s8 %v1438
        %v1440 = vperm.slane %v1432, %v1439
        %v1441 = vrot.slane %v1424, 4
        %v1442 = vsel %vm1279, %v1441, %v1420
        %v1443 = vrot.slane %v1420, 4
        %v1444 = vsel %vm1279, %v1424, %v1443
        %v1446 = vunpack.c.l.s4 1983009808
        %v1447 = vunpack.c.0.s8 %v1446
        %v1448 = vperm.slane %v1442, %v1447
        %v1450 = vunpack.c.l.s4 1983009808
        %v1451 = vunpack.c.0.s8 %v1450
        %v1452 = vperm.slane %v1444, %v1451
        %v1453 = vrot.slane %v1448, 4
        %v1454 = vsel %vm1279, %v1453, %v1436
        %v1455 = vrot.slane %v1436, 4
        %v1456 = vsel %vm1279, %v1448, %v1455
        %v1458 = vunpack.c.l.s4 1934713408
        %v1459 = vunpack.c.0.s8 %v1458
        %v1460 = vperm.slane %v1454, %v1459
        %v1462 = vunpack.c.l.s4 1934713408
        %v1463 = vunpack.c.0.s8 %v1462
        %v1464 = vperm.slane %v1456, %v1463
        %v1465 = vrot.slane %v1452, 4
        %v1466 = vsel %vm1279, %v1465, %v1440
        %v1467 = vrot.slane %v1440, 4
        %v1468 = vsel %vm1279, %v1452, %v1467
        %v1470 = vunpack.c.l.s4 1934713408
        %v1471 = vunpack.c.0.s8 %v1470
        %v1472 = vperm.slane %v1466, %v1471
        %v1474 = vunpack.c.l.s4 1934713408
        %v1475 = vunpack.c.0.s8 %v1474
        %v1476 = vperm.slane %v1468, %v1475
        %v1477 = vrot.slane %v1460, 4
        %v1478 = vsel %vm1279, 0.0, %v1477
        %v1479 = vrot.slane %v1464, 4
        %v1480 = vsel %vm1279, 0.0, %v1479
        %v1481 = vrot.slane %v1472, 4
        %v1482 = vsel %vm1279, 0.0, %v1481
        %v1483 = vrot.slane %v1476, 4
        %v1484 = vsel %vm1279, 0.0, %v1483
        %v1485 = vpack.c.bf16 %v1460, %v1460
        %v1486 = vpack.c.bf16 %v1478, %v1478
        %v1487 = vpack.c.bf16 %v1464, %v1464
        %v1488 = vpack.c.bf16 %v1480, %v1480
        %v1489 = vpack.c.bf16 %v1472, %v1472
        %v1490 = vpack.c.bf16 %v1482, %v1482
        %v1491 = vpack.c.bf16 %v1476, %v1476
        %v1492 = vpack.c.bf16 %v1484, %v1484
        %v1493 = vunpack.c.l.bf16 %v1189
        %vm1494 = vcmp.gt.f32.partialorder %v1493, 0.0
        %v1495 = vsel %vm1494, 0.0, -1e+09
        %v1496 = vrot.slane %v1339, 4
        %vm1497 = vcmask 1047556
        %v1498 = vsel %vm1497, %v1496, %v1335
        %v1500 = vunpack.c.l.s4 1983009808
        %v1501 = vunpack.c.0.s8 %v1500
        %v1502 = vperm.slane %v1498, %v1501
        %v1503 = vrot.slane %v1341, 4
        %v1504 = vsel %vm1497, %v1503, %v1337
        %v1506 = vunpack.c.l.s4 1983009808
        %v1507 = vunpack.c.0.s8 %v1506
        %v1508 = vperm.slane %v1504, %v1507
        %v1509 = vrot.slane %v1508, 4
        %v1510 = vsel %vm1497, %v1509, %v1502
        %v1512 = vunpack.c.l.s4 1934713408
        %v1513 = vunpack.c.0.s8 %v1512
        %v1514 = vperm.slane %v1510, %v1513
        %v1515 = vrot.slane %v1514, 4
        %v1516 = vsel %vm1497, 0, %v1515
        %v1517 = vrot.slane %v1340, 4
        %v1518 = vsel %vm1497, %v1517, %v1336
        %v1520 = vunpack.c.l.s4 1983009808
        %v1521 = vunpack.c.0.s8 %v1520
        %v1522 = vperm.slane %v1518, %v1521
        %v1523 = vrot.slane %v1342, 4
        %v1524 = vsel %vm1497, %v1523, %v1338
        %v1526 = vunpack.c.l.s4 1983009808
        %v1527 = vunpack.c.0.s8 %v1526
        %v1528 = vperm.slane %v1524, %v1527
        %v1529 = vrot.slane %v1528, 4
        %v1530 = vsel %vm1497, %v1529, %v1522
        %v1532 = vunpack.c.l.s4 1934713408
        %v1533 = vunpack.c.0.s8 %v1532
        %v1534 = vperm.slane %v1530, %v1533
        %v1535 = vrot.slane %v1534, 4
        %v1536 = vsel %vm1497, 0, %v1535
        %v1539 = vpack.i.b16 %v1534, %v1514
        %v1540 = vshrl.u32 %v1514, 16
        %v1541 = vshrl.u32 %v1534, 16
        %v1542 = vpack.i.b16 %v1541, %v1540
        %v1545 = vpack.i.b16 %v1536, %v1516
        %v1546 = vshrl.u32 %v1516, 16
        %v1547 = vshrl.u32 %v1536, 16
        %v1548 = vpack.i.b16 %v1547, %v1546
        %1549 = vxpose.xlu0.c.b16.start [1/8] %v1409, 128
        %1550 = vxpose.xlu0.c.b16.cont [2/8] 0, 128
        %1551 = vxpose.xlu0.c.b16.cont [3/8] 0, 128
        %1552 = vxpose.xlu0.c.b16.cont [4/8] 0, 128
        %1553 = vxpose.xlu0.c.b16.cont [5/8] 0, 128
        %1554 = vxpose.xlu0.c.b16.cont [6/8] 0, 128
        %1555 = vxpose.xlu0.c.b16.cont [7/8] 0, 128
        %1556 = vxpose.xlu0.c.b16.end [8/8] 0, 128
        %v1557 = vpop.trf.xlu0
        %v1558 = vpop.trf.xlu0
        %v1559 = vpop.trf.xlu0
        %v1560 = vpop.trf.xlu0
        %v1561 = vpop.trf.xlu0
        %v1562 = vpop.trf.xlu0
        %v1563 = vpop.trf.xlu0
        %v1564 = vpop.trf.xlu0
        %1565 = vxpose.xlu0.c.b16.start [1/8] %v1410, 128
        %1566 = vxpose.xlu0.c.b16.cont [2/8] 0, 128
        %1567 = vxpose.xlu0.c.b16.cont [3/8] 0, 128
        %1568 = vxpose.xlu0.c.b16.cont [4/8] 0, 128
        %1569 = vxpose.xlu0.c.b16.cont [5/8] 0, 128
        %1570 = vxpose.xlu0.c.b16.cont [6/8] 0, 128
        %1571 = vxpose.xlu0.c.b16.cont [7/8] 0, 128
        %1572 = vxpose.xlu0.c.b16.end [8/8] 0, 128
        %v1573 = vpop.trf.xlu0
        %v1574 = vpop.trf.xlu0
        %v1575 = vpop.trf.xlu0
        %v1576 = vpop.trf.xlu0
        %v1577 = vpop.trf.xlu0
        %v1578 = vpop.trf.xlu0
        %v1579 = vpop.trf.xlu0
        %v1580 = vpop.trf.xlu0
        %1581 = vxpose.xlu0.c.b16.start [1/8] %v1411, 128
        %1582 = vxpose.xlu0.c.b16.cont [2/8] 0, 128
        %1583 = vxpose.xlu0.c.b16.cont [3/8] 0, 128
        %1584 = vxpose.xlu0.c.b16.cont [4/8] 0, 128
        %1585 = vxpose.xlu0.c.b16.cont [5/8] 0, 128
        %1586 = vxpose.xlu0.c.b16.cont [6/8] 0, 128
        %1587 = vxpose.xlu0.c.b16.cont [7/8] 0, 128
        %1588 = vxpose.xlu0.c.b16.end [8/8] 0, 128
        %v1589 = vpop.trf.xlu0
        %v1590 = vpop.trf.xlu0
        %v1591 = vpop.trf.xlu0
        %v1592 = vpop.trf.xlu0
        %v1593 = vpop.trf.xlu0
        %v1594 = vpop.trf.xlu0
        %v1595 = vpop.trf.xlu0
        %v1596 = vpop.trf.xlu0
        %1597 = vxpose.xlu0.c.b16.start [1/8] %v1412, 128
        %1598 = vxpose.xlu0.c.b16.cont [2/8] 0, 128
        %1599 = vxpose.xlu0.c.b16.cont [3/8] 0, 128
        %1600 = vxpose.xlu0.c.b16.cont [4/8] 0, 128
        %1601 = vxpose.xlu0.c.b16.cont [5/8] 0, 128
        %1602 = vxpose.xlu0.c.b16.cont [6/8] 0, 128
        %1603 = vxpose.xlu0.c.b16.cont [7/8] 0, 128
        %1604 = vxpose.xlu0.c.b16.end [8/8] 0, 128
        %v1605 = vpop.trf.xlu0
        %v1606 = vpop.trf.xlu0
        %v1607 = vpop.trf.xlu0
        %v1608 = vpop.trf.xlu0
        %v1609 = vpop.trf.xlu0
        %v1610 = vpop.trf.xlu0
        %v1611 = vpop.trf.xlu0
        %v1612 = vpop.trf.xlu0
        %1613 = vxpose.xlu0.c.b16.start [1/8] %v1413, 128
        %1614 = vxpose.xlu0.c.b16.cont [2/8] 0, 128
        %1615 = vxpose.xlu0.c.b16.cont [3/8] 0, 128
        %1616 = vxpose.xlu0.c.b16.cont [4/8] 0, 128
        %1617 = vxpose.xlu0.c.b16.cont [5/8] 0, 128
        %1618 = vxpose.xlu0.c.b16.cont [6/8] 0, 128
        %1619 = vxpose.xlu0.c.b16.cont [7/8] 0, 128
        %1620 = vxpose.xlu0.c.b16.end [8/8] 0, 128
        %v1621 = vpop.trf.xlu0
        %v1622 = vpop.trf.xlu0
        %v1623 = vpop.trf.xlu0
        %v1624 = vpop.trf.xlu0
        %v1625 = vpop.trf.xlu0
        %v1626 = vpop.trf.xlu0
        %v1627 = vpop.trf.xlu0
        %v1628 = vpop.trf.xlu0
        %1629 = vxpose.xlu0.c.b16.start [1/8] %v1414, 128
        %1630 = vxpose.xlu0.c.b16.cont [2/8] 0, 128
        %1631 = vxpose.xlu0.c.b16.cont [3/8] 0, 128
        %1632 = vxpose.xlu0.c.b16.cont [4/8] 0, 128
        %1633 = vxpose.xlu0.c.b16.cont [5/8] 0, 128
        %1634 = vxpose.xlu0.c.b16.cont [6/8] 0, 128
        %1635 = vxpose.xlu0.c.b16.cont [7/8] 0, 128
        %1636 = vxpose.xlu0.c.b16.end [8/8] 0, 128
        %v1637 = vpop.trf.xlu0
        %v1638 = vpop.trf.xlu0
        %v1639 = vpop.trf.xlu0
        %v1640 = vpop.trf.xlu0
        %v1641 = vpop.trf.xlu0
        %v1642 = vpop.trf.xlu0
        %v1643 = vpop.trf.xlu0
        %v1644 = vpop.trf.xlu0
        %1645 = vxpose.xlu0.c.b16.start [1/8] %v1415, 128
        %1646 = vxpose.xlu0.c.b16.cont [2/8] 0, 128
        %1647 = vxpose.xlu0.c.b16.cont [3/8] 0, 128
        %1648 = vxpose.xlu0.c.b16.cont [4/8] 0, 128
        %1649 = vxpose.xlu0.c.b16.cont [5/8] 0, 128
        %1650 = vxpose.xlu0.c.b16.cont [6/8] 0, 128
        %1651 = vxpose.xlu0.c.b16.cont [7/8] 0, 128
        %1652 = vxpose.xlu0.c.b16.end [8/8] 0, 128
        %v1653 = vpop.trf.xlu0
        %v1654 = vpop.trf.xlu0
        %v1655 = vpop.trf.xlu0
        %v1656 = vpop.trf.xlu0
        %v1657 = vpop.trf.xlu0
        %v1658 = vpop.trf.xlu0
        %v1659 = vpop.trf.xlu0
        %v1660 = vpop.trf.xlu0
        %1661 = vxpose.xlu0.c.b16.start [1/8] %v1416, 128
        %1662 = vxpose.xlu0.c.b16.cont [2/8] 0, 128
        %1663 = vxpose.xlu0.c.b16.cont [3/8] 0, 128
        %1664 = vxpose.xlu0.c.b16.cont [4/8] 0, 128
        %1665 = vxpose.xlu0.c.b16.cont [5/8] 0, 128
        %1666 = vxpose.xlu0.c.b16.cont [6/8] 0, 128
        %1667 = vxpose.xlu0.c.b16.cont [7/8] 0, 128
        %1668 = vxpose.xlu0.c.b16.end [8/8] 0, 128
        %v1669 = vpop.trf.xlu0
        %v1670 = vpop.trf.xlu0
        %v1671 = vpop.trf.xlu0
        %v1672 = vpop.trf.xlu0
        %v1673 = vpop.trf.xlu0
        %v1674 = vpop.trf.xlu0
        %v1675 = vpop.trf.xlu0
        %v1676 = vpop.trf.xlu0
        %v1677 = vrot.slane %v1621, 4
        %v1678 = vsel %vm1497, %v1677, %v1557
        %v1680 = vunpack.c.l.s4 1983009808
        %v1681 = vunpack.c.0.s8 %v1680
        %v1682 = vperm.slane %v1678, %v1681
        %v1683 = vrot.slane %v1653, 4
        %v1684 = vsel %vm1497, %v1683, %v1589
        %v1686 = vunpack.c.l.s4 1983009808
        %v1687 = vunpack.c.0.s8 %v1686
        %v1688 = vperm.slane %v1684, %v1687
        %v1689 = vrot.slane %v1688, 4
        %v1690 = vsel %vm1497, %v1689, %v1682
        %v1691 = vrot.slane %v1682, 4
        %v1692 = vsel %vm1497, %v1688, %v1691
        %v1694 = vunpack.c.l.s4 1934713408
        %v1695 = vunpack.c.0.s8 %v1694
        %v1696 = vperm.slane %v1690, %v1695
        %v1698 = vunpack.c.l.s4 1934713408
        %v1699 = vunpack.c.0.s8 %v1698
        %v1700 = vperm.slane %v1692, %v1699
        %v1701 = vrot.slane %v1696, 4
        %v1702 = vsel %vm1497, 0, %v1701
        %v1703 = vrot.slane %v1700, 4
        %v1704 = vsel %vm1497, 0, %v1703
        %v1705 = vrot.slane %v1637, 4
        %v1706 = vsel %vm1497, %v1705, %v1573
        %v1708 = vunpack.c.l.s4 1983009808
        %v1709 = vunpack.c.0.s8 %v1708
        %v1710 = vperm.slane %v1706, %v1709
        %v1711 = vrot.slane %v1669, 4
        %v1712 = vsel %vm1497, %v1711, %v1605
        %v1714 = vunpack.c.l.s4 1983009808
        %v1715 = vunpack.c.0.s8 %v1714
        %v1716 = vperm.slane %v1712, %v1715
        %v1717 = vrot.slane %v1716, 4
        %v1718 = vsel %vm1497, %v1717, %v1710
        %v1719 = vrot.slane %v1710, 4
        %v1720 = vsel %vm1497, %v1716, %v1719
        %v1722 = vunpack.c.l.s4 1934713408
        %v1723 = vunpack.c.0.s8 %v1722
        %v1724 = vperm.slane %v1718, %v1723
        %v1726 = vunpack.c.l.s4 1934713408
        %v1727 = vunpack.c.0.s8 %v1726
        %v1728 = vperm.slane %v1720, %v1727
        %v1729 = vrot.slane %v1724, 4
        %v1730 = vsel %vm1497, 0, %v1729
        %v1731 = vrot.slane %v1728, 4
        %v1732 = vsel %vm1497, 0, %v1731
        %v1735 = vpack.i.b16 %v1724, %v1696
        %v1737 = vshrl.u32 %v1696, 16
        %v1738 = vshrl.u32 %v1724, 16
        %v1739 = vpack.i.b16 %v1738, %v1737
        %v1743 = vpack.i.b16 %v1730, %v1702
        %v1745 = vshrl.u32 %v1702, 16
        %v1746 = vshrl.u32 %v1730, 16
        %v1747 = vpack.i.b16 %v1746, %v1745
        %v1751 = vpack.i.b16 %v1728, %v1700
        %v1753 = vshrl.u32 %v1700, 16
        %v1754 = vshrl.u32 %v1728, 16
        %v1755 = vpack.i.b16 %v1754, %v1753
        %v1759 = vpack.i.b16 %v1732, %v1704
        %v1761 = vshrl.u32 %v1704, 16
        %v1762 = vshrl.u32 %v1732, 16
        %v1763 = vpack.i.b16 %v1762, %v1761
        %1765 = vxpose.xlu0.c.b16.start [1/8] %v1735, 128
        %1766 = vxpose.xlu0.c.b16.cont [2/8] 0, 128
        %1767 = vxpose.xlu0.c.b16.cont [3/8] 0, 128
        %1768 = vxpose.xlu0.c.b16.cont [4/8] 0, 128
        %1769 = vxpose.xlu0.c.b16.cont [5/8] 0, 128
        %1770 = vxpose.xlu0.c.b16.cont [6/8] 0, 128
        %1771 = vxpose.xlu0.c.b16.cont [7/8] 0, 128
        %1772 = vxpose.xlu0.c.b16.end [8/8] 0, 128
        %v1773 = vpop.trf.xlu0
        %v1774 = vpop.trf.xlu0
        %v1775 = vpop.trf.xlu0
        %v1776 = vpop.trf.xlu0
        %v1777 = vpop.trf.xlu0
        %v1778 = vpop.trf.xlu0
        %v1779 = vpop.trf.xlu0
        %v1780 = vpop.trf.xlu0
        %1781 = vxpose.xlu0.c.b16.start [1/8] %v1739, 128
        %1782 = vxpose.xlu0.c.b16.cont [2/8] 0, 128
        %1783 = vxpose.xlu0.c.b16.cont [3/8] 0, 128
        %1784 = vxpose.xlu0.c.b16.cont [4/8] 0, 128
        %1785 = vxpose.xlu0.c.b16.cont [5/8] 0, 128
        %1786 = vxpose.xlu0.c.b16.cont [6/8] 0, 128
        %1787 = vxpose.xlu0.c.b16.cont [7/8] 0, 128
        %1788 = vxpose.xlu0.c.b16.end [8/8] 0, 128
        %v1789 = vpop.trf.xlu0
        %v1790 = vpop.trf.xlu0
        %v1791 = vpop.trf.xlu0
        %v1792 = vpop.trf.xlu0
        %v1793 = vpop.trf.xlu0
        %v1794 = vpop.trf.xlu0
        %v1795 = vpop.trf.xlu0
        %v1796 = vpop.trf.xlu0
        %1797 = vxpose.xlu0.c.b16.start [1/8] %v1743, 128
        %1798 = vxpose.xlu0.c.b16.cont [2/8] 0, 128
        %1799 = vxpose.xlu0.c.b16.cont [3/8] 0, 128
        %1800 = vxpose.xlu0.c.b16.cont [4/8] 0, 128
        %1801 = vxpose.xlu0.c.b16.cont [5/8] 0, 128
        %1802 = vxpose.xlu0.c.b16.cont [6/8] 0, 128
        %1803 = vxpose.xlu0.c.b16.cont [7/8] 0, 128
        %1804 = vxpose.xlu0.c.b16.end [8/8] 0, 128
        %v1805 = vpop.trf.xlu0
        %v1806 = vpop.trf.xlu0
        %v1807 = vpop.trf.xlu0
        %v1808 = vpop.trf.xlu0
        %v1809 = vpop.trf.xlu0
        %v1810 = vpop.trf.xlu0
        %v1811 = vpop.trf.xlu0
        %v1812 = vpop.trf.xlu0
        %1813 = vxpose.xlu0.c.b16.start [1/8] %v1747, 128
        %1814 = vxpose.xlu0.c.b16.cont [2/8] 0, 128
        %1815 = vxpose.xlu0.c.b16.cont [3/8] 0, 128
        %1816 = vxpose.xlu0.c.b16.cont [4/8] 0, 128
        %1817 = vxpose.xlu0.c.b16.cont [5/8] 0, 128
        %1818 = vxpose.xlu0.c.b16.cont [6/8] 0, 128
        %1819 = vxpose.xlu0.c.b16.cont [7/8] 0, 128
        %1820 = vxpose.xlu0.c.b16.end [8/8] 0, 128
        %v1821 = vpop.trf.xlu0
        %v1822 = vpop.trf.xlu0
        %v1823 = vpop.trf.xlu0
        %v1824 = vpop.trf.xlu0
        %v1825 = vpop.trf.xlu0
        %v1826 = vpop.trf.xlu0
        %v1827 = vpop.trf.xlu0
        %v1828 = vpop.trf.xlu0
        %1829 = vxpose.xlu0.c.b16.start [1/8] %v1751, 128
        %1830 = vxpose.xlu0.c.b16.cont [2/8] 0, 128
        %1831 = vxpose.xlu0.c.b16.cont [3/8] 0, 128
        %1832 = vxpose.xlu0.c.b16.cont [4/8] 0, 128
        %1833 = vxpose.xlu0.c.b16.cont [5/8] 0, 128
        %1834 = vxpose.xlu0.c.b16.cont [6/8] 0, 128
        %1835 = vxpose.xlu0.c.b16.cont [7/8] 0, 128
        %1836 = vxpose.xlu0.c.b16.end [8/8] 0, 128
        %v1837 = vpop.trf.xlu0
        %v1838 = vpop.trf.xlu0
        %v1839 = vpop.trf.xlu0
        %v1840 = vpop.trf.xlu0
        %v1841 = vpop.trf.xlu0
        %v1842 = vpop.trf.xlu0
        %v1843 = vpop.trf.xlu0
        %v1844 = vpop.trf.xlu0
        %1845 = vxpose.xlu0.c.b16.start [1/8] %v1755, 128
        %1846 = vxpose.xlu0.c.b16.cont [2/8] 0, 128
        %1847 = vxpose.xlu0.c.b16.cont [3/8] 0, 128
        %1848 = vxpose.xlu0.c.b16.cont [4/8] 0, 128
        %1849 = vxpose.xlu0.c.b16.cont [5/8] 0, 128
        %1850 = vxpose.xlu0.c.b16.cont [6/8] 0, 128
        %1851 = vxpose.xlu0.c.b16.cont [7/8] 0, 128
        %1852 = vxpose.xlu0.c.b16.end [8/8] 0, 128
        %v1853 = vpop.trf.xlu0
        %v1854 = vpop.trf.xlu0
        %v1855 = vpop.trf.xlu0
        %v1856 = vpop.trf.xlu0
        %v1857 = vpop.trf.xlu0
        %v1858 = vpop.trf.xlu0
        %v1859 = vpop.trf.xlu0
        %v1860 = vpop.trf.xlu0
        %1861 = vxpose.xlu0.c.b16.start [1/8] %v1759, 128
        %1862 = vxpose.xlu0.c.b16.cont [2/8] 0, 128
        %1863 = vxpose.xlu0.c.b16.cont [3/8] 0, 128
        %1864 = vxpose.xlu0.c.b16.cont [4/8] 0, 128
        %1865 = vxpose.xlu0.c.b16.cont [5/8] 0, 128
        %1866 = vxpose.xlu0.c.b16.cont [6/8] 0, 128
        %1867 = vxpose.xlu0.c.b16.cont [7/8] 0, 128
        %1868 = vxpose.xlu0.c.b16.end [8/8] 0, 128
        %v1869 = vpop.trf.xlu0
        %v1870 = vpop.trf.xlu0
        %v1871 = vpop.trf.xlu0
        %v1872 = vpop.trf.xlu0
        %v1873 = vpop.trf.xlu0
        %v1874 = vpop.trf.xlu0
        %v1875 = vpop.trf.xlu0
        %v1876 = vpop.trf.xlu0
        %1877 = vxpose.xlu0.c.b16.start [1/8] %v1763, 128
        %1878 = vxpose.xlu0.c.b16.cont [2/8] 0, 128
        %1879 = vxpose.xlu0.c.b16.cont [3/8] 0, 128
        %1880 = vxpose.xlu0.c.b16.cont [4/8] 0, 128
        %1881 = vxpose.xlu0.c.b16.cont [5/8] 0, 128
        %1882 = vxpose.xlu0.c.b16.cont [6/8] 0, 128
        %1883 = vxpose.xlu0.c.b16.cont [7/8] 0, 128
        %1884 = vxpose.xlu0.c.b16.end [8/8] 0, 128
        %v1885 = vpop.trf.xlu0
        %v1886 = vpop.trf.xlu0
        %v1887 = vpop.trf.xlu0
        %v1888 = vpop.trf.xlu0
        %v1889 = vpop.trf.xlu0
        %v1890 = vpop.trf.xlu0
        %v1891 = vpop.trf.xlu0
        %v1892 = vpop.trf.xlu0
        %v1893 = vrot.slane %v1837, 4
        %v1894 = vsel %vm1497, %v1893, %v1773
        %v1896 = vunpack.c.l.s4 1983009808
        %v1897 = vunpack.c.0.s8 %v1896
        %v1898 = vperm.slane %v1894, %v1897
        %v1899 = vrot.slane %v1869, 4
        %v1900 = vsel %vm1497, %v1899, %v1805
        %v1902 = vunpack.c.l.s4 1983009808
        %v1903 = vunpack.c.0.s8 %v1902
        %v1904 = vperm.slane %v1900, %v1903
        %v1905 = vrot.slane %v1904, 4
        %v1906 = vsel %vm1497, %v1905, %v1898
        %v1908 = vunpack.c.l.s4 1934713408
        %v1909 = vunpack.c.0.s8 %v1908
        %v1910 = vperm.slane %v1906, %v1909
        %v1911 = vrot.slane %v1910, 4
        %v1912 = vsel %vm1497, 0, %v1911
        %v1913 = vrot.slane %v1853, 4
        %v1914 = vsel %vm1497, %v1913, %v1789
        %v1916 = vunpack.c.l.s4 1983009808
        %v1917 = vunpack.c.0.s8 %v1916
        %v1918 = vperm.slane %v1914, %v1917
        %v1919 = vrot.slane %v1885, 4
        %v1920 = vsel %vm1497, %v1919, %v1821
        %v1922 = vunpack.c.l.s4 1983009808
        %v1923 = vunpack.c.0.s8 %v1922
        %v1924 = vperm.slane %v1920, %v1923
        %v1925 = vrot.slane %v1924, 4
        %v1926 = vsel %vm1497, %v1925, %v1918
        %v1928 = vunpack.c.l.s4 1934713408
        %v1929 = vunpack.c.0.s8 %v1928
        %v1930 = vperm.slane %v1926, %v1929
        %v1931 = vrot.slane %v1930, 4
        %v1932 = vsel %vm1497, 0, %v1931
        %v1935 = vpack.i.b16 %v1930, %v1910
        %v1936 = vshrl.u32 %v1910, 16
        %v1937 = vshrl.u32 %v1930, 16
        %v1938 = vpack.i.b16 %v1937, %v1936
        %v1941 = vpack.i.b16 %v1932, %v1912
        %v1942 = vshrl.u32 %v1912, 16
        %v1943 = vshrl.u32 %v1932, 16
        %v1944 = vpack.i.b16 %v1943, %v1942
        %vm1945 = vcmask 64512
        %v1947 = vsel %vm1945, %v1539, 0
        %vm1949 = vcmask 1043456
        %v1951 = vsel %vm1949, %v1935, 0
        %1953 = vmatpush.bf16.msra.mxu0 0
        %1954 = vmatpush.bf16.msra.mxu0 0
        %1955 = vmatpush.bf16.msra.mxu0 0
        %1956 = vmatpush.bf16.msra.mxu0 0
        %1957 = vmatpush.bf16.msra.mxu0 0
        %1958 = vmatpush.bf16.msra.mxu0 0
        %1959 = vmatpush.bf16.msra.mxu0 0
        %1960 = vmatpush.bf16.msra.mxu0 %v1951
        %1961 = vmatmul.bf16.gmra.mxu0 %v1947
        %v1962 = vpop.f32.mrf.mxu0
        %v1963 = vadd.f32 %v1495, %v1962
        %v1964 = vpop.f32.mrf.mxu0
        %1965 = vdwg.mxu0
        %v1967 = vsel %vm1945, %v1542, 0
        %v1970 = vsel %vm1949, %v1938, 0
        %1972 = vmatpush.bf16.msra.mxu0 0
        %1973 = vmatpush.bf16.msra.mxu0 0
        %1974 = vmatpush.bf16.msra.mxu0 0
        %1975 = vmatpush.bf16.msra.mxu0 0
        %1976 = vmatpush.bf16.msra.mxu0 0
        %1977 = vmatpush.bf16.msra.mxu0 0
        %1978 = vmatpush.bf16.msra.mxu0 0
        %1979 = vmatpush.bf16.msra.mxu0 %v1970
        %1980 = vmatmul.bf16.gmra.mxu0 %v1967
        %v1981 = vpop.f32.mrf.mxu0
        %v1982 = vadd.f32 %v1495, %v1981
        %v1983 = vpop.f32.mrf.mxu0
        %1984 = vdwg.mxu0
        %v1986 = vsel %vm1945, %v1545, 0
        %v1989 = vsel %vm1949, %v1941, 0
        %1991 = vmatpush.bf16.msra.mxu0 0
        %1992 = vmatpush.bf16.msra.mxu0 0
        %1993 = vmatpush.bf16.msra.mxu0 0
        %1994 = vmatpush.bf16.msra.mxu0 0
        %1995 = vmatpush.bf16.msra.mxu0 0
        %1996 = vmatpush.bf16.msra.mxu0 0
        %1997 = vmatpush.bf16.msra.mxu0 0
        %1998 = vmatpush.bf16.msra.mxu0 %v1989
        %1999 = vmatmul.bf16.gmra.mxu0 %v1986
        %v2000 = vpop.f32.mrf.mxu0
        %v2001 = vadd.f32 %v1495, %v2000
        %v2002 = vpop.f32.mrf.mxu0
        %2003 = vdwg.mxu0
        %v2005 = vsel %vm1945, %v1548, 0
        %v2008 = vsel %vm1949, %v1944, 0
        %2010 = vmatpush.bf16.msra.mxu0 0
        %2011 = vmatpush.bf16.msra.mxu0 0
        %2012 = vmatpush.bf16.msra.mxu0 0
        %2013 = vmatpush.bf16.msra.mxu0 0
        %2014 = vmatpush.bf16.msra.mxu0 0
        %2015 = vmatpush.bf16.msra.mxu0 0
        %2016 = vmatpush.bf16.msra.mxu0 0
        %2017 = vmatpush.bf16.msra.mxu0 %v2008
        %2018 = vmatmul.bf16.gmra.mxu0 %v2005
        %v2019 = vpop.f32.mrf.mxu0
        %v2020 = vadd.f32 %v1495, %v2019
        %v2021 = vpop.f32.mrf.mxu0
        %2022 = vdwg.mxu0
        %v2023 = vsel %vm1945, %v1963, -inf
        %2024 = vmax.xlane.f32.xlu0 %v2023
        %v2025 = vpop.xlane.xlu0 %2024
        %v2026 = vsel %vm1945, %v1982, -inf
        %2027 = vmax.xlane.f32.xlu0 %v2026
        %v2028 = vpop.xlane.xlu0 %2027
        %v2029 = vsel %vm1945, %v2001, -inf
        %2030 = vmax.xlane.f32.xlu0 %v2029
        %v2031 = vpop.xlane.xlu0 %2030
        %v2032 = vsel %vm1945, %v2020, -inf
        %2033 = vmax.xlane.f32.xlu0 %v2032
        %v2034 = vpop.xlane.xlu0 %2033
        %v2035 = vsub.f32 %v1963, %v2025
        %v2036 = vsub.f32 %v1982, %v2028
        %v2037 = vsub.f32 %v2001, %v2031
        %v2038 = vsub.f32 %v2020, %v2034
        %v2039 = vmul.f32 %v2035, 1.442695
        %v2040 = vpow.pop %v2039
        %v2041 = vmul.f32 %v2036, 1.442695
        %v2042 = vpow.pop %v2041
        %v2043 = vmul.f32 %v2037, 1.442695
        %v2044 = vpow.pop %v2043
        %v2045 = vmul.f32 %v2038, 1.442695
        %v2046 = vpow.pop %v2045
        %v2047 = vsel %vm1945, %v2040, 0.0
        %2048 = vadd.xlane.f32.xlu0 %v2047
        %v2049 = vpop.xlane.xlu0 %2048
        %v2050 = vsel %vm1945, %v2042, 0.0
        %2051 = vadd.xlane.f32.xlu0 %v2050
        %v2052 = vpop.xlane.xlu0 %2051
        %v2053 = vsel %vm1945, %v2044, 0.0
        %2054 = vadd.xlane.f32.xlu0 %v2053
        %v2055 = vpop.xlane.xlu0 %2054
        %v2056 = vsel %vm1945, %v2046, 0.0
        %2057 = vadd.xlane.f32.xlu0 %v2056
        %v2058 = vpop.xlane.xlu0 %2057
        %v2059 = vrcp.pop %v2049
        %v2060 = vrcp.pop %v2052
        %v2061 = vrcp.pop %v2055
        %v2062 = vrcp.pop %v2058
        %v2063 = vmul.f32 %v2040, %v2059
        %v2064 = vmul.f32 %v2042, %v2060
        %v2065 = vmul.f32 %v2044, %v2061
        %v2066 = vmul.f32 %v2046, %v2062
        %v2067 = vpack.c.bf16 %v2063, %v2063
        %v2068 = vpack.c.bf16 %v2064, %v2064
        %v2069 = vpack.c.bf16 %v2065, %v2065
        %v2070 = vpack.c.bf16 %v2066, %v2066
        %2071 = vxpose.xlu0.c.b16.start [1/8] %v1485, 128
        %2072 = vxpose.xlu0.c.b16.cont [2/8] 0, 128
        %2073 = vxpose.xlu0.c.b16.cont [3/8] 0, 128
        %2074 = vxpose.xlu0.c.b16.cont [4/8] 0, 128
        %2075 = vxpose.xlu0.c.b16.cont [5/8] 0, 128
        %2076 = vxpose.xlu0.c.b16.cont [6/8] 0, 128
        %2077 = vxpose.xlu0.c.b16.cont [7/8] 0, 128
        %2078 = vxpose.xlu0.c.b16.end [8/8] 0, 128
        %v2079 = vpop.trf.xlu0
        %v2080 = vpop.trf.xlu0
        %v2081 = vpop.trf.xlu0
        %v2082 = vpop.trf.xlu0
        %v2083 = vpop.trf.xlu0
        %v2084 = vpop.trf.xlu0
        %v2085 = vpop.trf.xlu0
        %v2086 = vpop.trf.xlu0
        %2087 = vxpose.xlu0.c.b16.start [1/8] %v1486, 128
        %2088 = vxpose.xlu0.c.b16.cont [2/8] 0, 128
        %2089 = vxpose.xlu0.c.b16.cont [3/8] 0, 128
        %2090 = vxpose.xlu0.c.b16.cont [4/8] 0, 128
        %2091 = vxpose.xlu0.c.b16.cont [5/8] 0, 128
        %2092 = vxpose.xlu0.c.b16.cont [6/8] 0, 128
        %2093 = vxpose.xlu0.c.b16.cont [7/8] 0, 128
        %2094 = vxpose.xlu0.c.b16.end [8/8] 0, 128
        %v2095 = vpop.trf.xlu0
        %v2096 = vpop.trf.xlu0
        %v2097 = vpop.trf.xlu0
        %v2098 = vpop.trf.xlu0
        %v2099 = vpop.trf.xlu0
        %v2100 = vpop.trf.xlu0
        %v2101 = vpop.trf.xlu0
        %v2102 = vpop.trf.xlu0
        %2103 = vxpose.xlu0.c.b16.start [1/8] %v1487, 128
        %2104 = vxpose.xlu0.c.b16.cont [2/8] 0, 128
        %2105 = vxpose.xlu0.c.b16.cont [3/8] 0, 128
        %2106 = vxpose.xlu0.c.b16.cont [4/8] 0, 128
        %2107 = vxpose.xlu0.c.b16.cont [5/8] 0, 128
        %2108 = vxpose.xlu0.c.b16.cont [6/8] 0, 128
        %2109 = vxpose.xlu0.c.b16.cont [7/8] 0, 128
        %2110 = vxpose.xlu0.c.b16.end [8/8] 0, 128
        %v2111 = vpop.trf.xlu0
        %v2112 = vpop.trf.xlu0
        %v2113 = vpop.trf.xlu0
        %v2114 = vpop.trf.xlu0
        %v2115 = vpop.trf.xlu0
        %v2116 = vpop.trf.xlu0
        %v2117 = vpop.trf.xlu0
        %v2118 = vpop.trf.xlu0
        %2119 = vxpose.xlu0.c.b16.start [1/8] %v1488, 128
        %2120 = vxpose.xlu0.c.b16.cont [2/8] 0, 128
        %2121 = vxpose.xlu0.c.b16.cont [3/8] 0, 128
        %2122 = vxpose.xlu0.c.b16.cont [4/8] 0, 128
        %2123 = vxpose.xlu0.c.b16.cont [5/8] 0, 128
        %2124 = vxpose.xlu0.c.b16.cont [6/8] 0, 128
        %2125 = vxpose.xlu0.c.b16.cont [7/8] 0, 128
        %2126 = vxpose.xlu0.c.b16.end [8/8] 0, 128
        %v2127 = vpop.trf.xlu0
        %v2128 = vpop.trf.xlu0
        %v2129 = vpop.trf.xlu0
        %v2130 = vpop.trf.xlu0
        %v2131 = vpop.trf.xlu0
        %v2132 = vpop.trf.xlu0
        %v2133 = vpop.trf.xlu0
        %v2134 = vpop.trf.xlu0
        %2135 = vxpose.xlu0.c.b16.start [1/8] %v1489, 128
        %2136 = vxpose.xlu0.c.b16.cont [2/8] 0, 128
        %2137 = vxpose.xlu0.c.b16.cont [3/8] 0, 128
        %2138 = vxpose.xlu0.c.b16.cont [4/8] 0, 128
        %2139 = vxpose.xlu0.c.b16.cont [5/8] 0, 128
        %2140 = vxpose.xlu0.c.b16.cont [6/8] 0, 128
        %2141 = vxpose.xlu0.c.b16.cont [7/8] 0, 128
        %2142 = vxpose.xlu0.c.b16.end [8/8] 0, 128
        %v2143 = vpop.trf.xlu0
        %v2144 = vpop.trf.xlu0
        %v2145 = vpop.trf.xlu0
        %v2146 = vpop.trf.xlu0
        %v2147 = vpop.trf.xlu0
        %v2148 = vpop.trf.xlu0
        %v2149 = vpop.trf.xlu0
        %v2150 = vpop.trf.xlu0
        %2151 = vxpose.xlu0.c.b16.start [1/8] %v1490, 128
        %2152 = vxpose.xlu0.c.b16.cont [2/8] 0, 128
        %2153 = vxpose.xlu0.c.b16.cont [3/8] 0, 128
        %2154 = vxpose.xlu0.c.b16.cont [4/8] 0, 128
        %2155 = vxpose.xlu0.c.b16.cont [5/8] 0, 128
        %2156 = vxpose.xlu0.c.b16.cont [6/8] 0, 128
        %2157 = vxpose.xlu0.c.b16.cont [7/8] 0, 128
        %2158 = vxpose.xlu0.c.b16.end [8/8] 0, 128
        %v2159 = vpop.trf.xlu0
        %v2160 = vpop.trf.xlu0
        %v2161 = vpop.trf.xlu0
        %v2162 = vpop.trf.xlu0
        %v2163 = vpop.trf.xlu0
        %v2164 = vpop.trf.xlu0
        %v2165 = vpop.trf.xlu0
        %v2166 = vpop.trf.xlu0
        %2167 = vxpose.xlu0.c.b16.start [1/8] %v1491, 128
        %2168 = vxpose.xlu0.c.b16.cont [2/8] 0, 128
        %2169 = vxpose.xlu0.c.b16.cont [3/8] 0, 128
        %2170 = vxpose.xlu0.c.b16.cont [4/8] 0, 128
        %2171 = vxpose.xlu0.c.b16.cont [5/8] 0, 128
        %2172 = vxpose.xlu0.c.b16.cont [6/8] 0, 128
        %2173 = vxpose.xlu0.c.b16.cont [7/8] 0, 128
        %2174 = vxpose.xlu0.c.b16.end [8/8] 0, 128
        %v2175 = vpop.trf.xlu0
        %v2176 = vpop.trf.xlu0
        %v2177 = vpop.trf.xlu0
        %v2178 = vpop.trf.xlu0
        %v2179 = vpop.trf.xlu0
        %v2180 = vpop.trf.xlu0
        %v2181 = vpop.trf.xlu0
        %v2182 = vpop.trf.xlu0
        %2183 = vxpose.xlu0.c.b16.start [1/8] %v1492, 128
        %2184 = vxpose.xlu0.c.b16.cont [2/8] 0, 128
        %2185 = vxpose.xlu0.c.b16.cont [3/8] 0, 128
        %2186 = vxpose.xlu0.c.b16.cont [4/8] 0, 128
        %2187 = vxpose.xlu0.c.b16.cont [5/8] 0, 128
        %2188 = vxpose.xlu0.c.b16.cont [6/8] 0, 128
        %2189 = vxpose.xlu0.c.b16.cont [7/8] 0, 128
        %2190 = vxpose.xlu0.c.b16.end [8/8] 0, 128
        %v2191 = vpop.trf.xlu0
        %v2192 = vpop.trf.xlu0
        %v2193 = vpop.trf.xlu0
        %v2194 = vpop.trf.xlu0
        %v2195 = vpop.trf.xlu0
        %v2196 = vpop.trf.xlu0
        %v2197 = vpop.trf.xlu0
        %v2198 = vpop.trf.xlu0
        %v2199 = vrot.slane %v2143, 4
        %v2200 = vsel %vm1497, %v2199, %v2079
        %v2202 = vunpack.c.l.s4 1983009808
        %v2203 = vunpack.c.0.s8 %v2202
        %v2204 = vperm.slane %v2200, %v2203
        %v2205 = vrot.slane %v2175, 4
        %v2206 = vsel %vm1497, %v2205, %v2111
        %v2208 = vunpack.c.l.s4 1983009808
        %v2209 = vunpack.c.0.s8 %v2208
        %v2210 = vperm.slane %v2206, %v2209
        %v2211 = vrot.slane %v2210, 4
        %v2212 = vsel %vm1497, %v2211, %v2204
        %v2213 = vrot.slane %v2204, 4
        %v2214 = vsel %vm1497, %v2210, %v2213
        %v2216 = vunpack.c.l.s4 1934713408
        %v2217 = vunpack.c.0.s8 %v2216
        %v2218 = vperm.slane %v2212, %v2217
        %v2220 = vunpack.c.l.s4 1934713408
        %v2221 = vunpack.c.0.s8 %v2220
        %v2222 = vperm.slane %v2214, %v2221
        %v2223 = vrot.slane %v2218, 4
        %v2224 = vsel %vm1497, 0, %v2223
        %v2225 = vrot.slane %v2222, 4
        %v2226 = vsel %vm1497, 0, %v2225
        %v2227 = vrot.slane %v2159, 4
        %v2228 = vsel %vm1497, %v2227, %v2095
        %v2230 = vunpack.c.l.s4 1983009808
        %v2231 = vunpack.c.0.s8 %v2230
        %v2232 = vperm.slane %v2228, %v2231
        %v2233 = vrot.slane %v2191, 4
        %v2234 = vsel %vm1497, %v2233, %v2127
        %v2236 = vunpack.c.l.s4 1983009808
        %v2237 = vunpack.c.0.s8 %v2236
        %v2238 = vperm.slane %v2234, %v2237
        %v2239 = vrot.slane %v2238, 4
        %v2240 = vsel %vm1497, %v2239, %v2232
        %v2241 = vrot.slane %v2232, 4
        %v2242 = vsel %vm1497, %v2238, %v2241
        %v2244 = vunpack.c.l.s4 1934713408
        %v2245 = vunpack.c.0.s8 %v2244
        %v2246 = vperm.slane %v2240, %v2245
        %v2248 = vunpack.c.l.s4 1934713408
        %v2249 = vunpack.c.0.s8 %v2248
        %v2250 = vperm.slane %v2242, %v2249
        %v2251 = vrot.slane %v2246, 4
        %v2252 = vsel %vm1497, 0, %v2251
        %v2253 = vrot.slane %v2250, 4
        %v2254 = vsel %vm1497, 0, %v2253
        %v2257 = vpack.i.b16 %v2246, %v2218
        %v2259 = vshrl.u32 %v2218, 16
        %v2260 = vshrl.u32 %v2246, 16
        %v2261 = vpack.i.b16 %v2260, %v2259
        %v2265 = vpack.i.b16 %v2252, %v2224
        %v2267 = vshrl.u32 %v2224, 16
        %v2268 = vshrl.u32 %v2252, 16
        %v2269 = vpack.i.b16 %v2268, %v2267
        %v2273 = vpack.i.b16 %v2250, %v2222
        %v2275 = vshrl.u32 %v2222, 16
        %v2276 = vshrl.u32 %v2250, 16
        %v2277 = vpack.i.b16 %v2276, %v2275
        %v2281 = vpack.i.b16 %v2254, %v2226
        %v2283 = vshrl.u32 %v2226, 16
        %v2284 = vshrl.u32 %v2254, 16
        %v2285 = vpack.i.b16 %v2284, %v2283
        %2287 = vxpose.xlu0.c.b16.start [1/8] %v2257, 128
        %2288 = vxpose.xlu0.c.b16.cont [2/8] 0, 128
        %2289 = vxpose.xlu0.c.b16.cont [3/8] 0, 128
        %2290 = vxpose.xlu0.c.b16.cont [4/8] 0, 128
        %2291 = vxpose.xlu0.c.b16.cont [5/8] 0, 128
        %2292 = vxpose.xlu0.c.b16.cont [6/8] 0, 128
        %2293 = vxpose.xlu0.c.b16.cont [7/8] 0, 128
        %2294 = vxpose.xlu0.c.b16.end [8/8] 0, 128
        %v2295 = vpop.trf.xlu0
        %v2296 = vpop.trf.xlu0
        %v2297 = vpop.trf.xlu0
        %v2298 = vpop.trf.xlu0
        %v2299 = vpop.trf.xlu0
        %v2300 = vpop.trf.xlu0
        %v2301 = vpop.trf.xlu0
        %v2302 = vpop.trf.xlu0
        %2303 = vxpose.xlu0.c.b16.start [1/8] %v2261, 128
        %2304 = vxpose.xlu0.c.b16.cont [2/8] 0, 128
        %2305 = vxpose.xlu0.c.b16.cont [3/8] 0, 128
        %2306 = vxpose.xlu0.c.b16.cont [4/8] 0, 128
        %2307 = vxpose.xlu0.c.b16.cont [5/8] 0, 128
        %2308 = vxpose.xlu0.c.b16.cont [6/8] 0, 128
        %2309 = vxpose.xlu0.c.b16.cont [7/8] 0, 128
        %2310 = vxpose.xlu0.c.b16.end [8/8] 0, 128
        %v2311 = vpop.trf.xlu0
        %v2312 = vpop.trf.xlu0
        %v2313 = vpop.trf.xlu0
        %v2314 = vpop.trf.xlu0
        %v2315 = vpop.trf.xlu0
        %v2316 = vpop.trf.xlu0
        %v2317 = vpop.trf.xlu0
        %v2318 = vpop.trf.xlu0
        %2319 = vxpose.xlu0.c.b16.start [1/8] %v2265, 128
        %2320 = vxpose.xlu0.c.b16.cont [2/8] 0, 128
        %2321 = vxpose.xlu0.c.b16.cont [3/8] 0, 128
        %2322 = vxpose.xlu0.c.b16.cont [4/8] 0, 128
        %2323 = vxpose.xlu0.c.b16.cont [5/8] 0, 128
        %2324 = vxpose.xlu0.c.b16.cont [6/8] 0, 128
        %2325 = vxpose.xlu0.c.b16.cont [7/8] 0, 128
        %2326 = vxpose.xlu0.c.b16.end [8/8] 0, 128
        %v2327 = vpop.trf.xlu0
        %v2328 = vpop.trf.xlu0
        %v2329 = vpop.trf.xlu0
        %v2330 = vpop.trf.xlu0
        %v2331 = vpop.trf.xlu0
        %v2332 = vpop.trf.xlu0
        %v2333 = vpop.trf.xlu0
        %v2334 = vpop.trf.xlu0
        %2335 = vxpose.xlu0.c.b16.start [1/8] %v2269, 128
        %2336 = vxpose.xlu0.c.b16.cont [2/8] 0, 128
        %2337 = vxpose.xlu0.c.b16.cont [3/8] 0, 128
        %2338 = vxpose.xlu0.c.b16.cont [4/8] 0, 128
        %2339 = vxpose.xlu0.c.b16.cont [5/8] 0, 128
        %2340 = vxpose.xlu0.c.b16.cont [6/8] 0, 128
        %2341 = vxpose.xlu0.c.b16.cont [7/8] 0, 128
        %2342 = vxpose.xlu0.c.b16.end [8/8] 0, 128
        %v2343 = vpop.trf.xlu0
        %v2344 = vpop.trf.xlu0
        %v2345 = vpop.trf.xlu0
        %v2346 = vpop.trf.xlu0
        %v2347 = vpop.trf.xlu0
        %v2348 = vpop.trf.xlu0
        %v2349 = vpop.trf.xlu0
        %v2350 = vpop.trf.xlu0
        %2351 = vxpose.xlu0.c.b16.start [1/8] %v2273, 128
        %2352 = vxpose.xlu0.c.b16.cont [2/8] 0, 128
        %2353 = vxpose.xlu0.c.b16.cont [3/8] 0, 128
        %2354 = vxpose.xlu0.c.b16.cont [4/8] 0, 128
        %2355 = vxpose.xlu0.c.b16.cont [5/8] 0, 128
        %2356 = vxpose.xlu0.c.b16.cont [6/8] 0, 128
        %2357 = vxpose.xlu0.c.b16.cont [7/8] 0, 128
        %2358 = vxpose.xlu0.c.b16.end [8/8] 0, 128
        %v2359 = vpop.trf.xlu0
        %v2360 = vpop.trf.xlu0
        %v2361 = vpop.trf.xlu0
        %v2362 = vpop.trf.xlu0
        %v2363 = vpop.trf.xlu0
        %v2364 = vpop.trf.xlu0
        %v2365 = vpop.trf.xlu0
        %v2366 = vpop.trf.xlu0
        %2367 = vxpose.xlu0.c.b16.start [1/8] %v2277, 128
        %2368 = vxpose.xlu0.c.b16.cont [2/8] 0, 128
        %2369 = vxpose.xlu0.c.b16.cont [3/8] 0, 128
        %2370 = vxpose.xlu0.c.b16.cont [4/8] 0, 128
        %2371 = vxpose.xlu0.c.b16.cont [5/8] 0, 128
        %2372 = vxpose.xlu0.c.b16.cont [6/8] 0, 128
        %2373 = vxpose.xlu0.c.b16.cont [7/8] 0, 128
        %2374 = vxpose.xlu0.c.b16.end [8/8] 0, 128
        %v2375 = vpop.trf.xlu0
        %v2376 = vpop.trf.xlu0
        %v2377 = vpop.trf.xlu0
        %v2378 = vpop.trf.xlu0
        %v2379 = vpop.trf.xlu0
        %v2380 = vpop.trf.xlu0
        %v2381 = vpop.trf.xlu0
        %v2382 = vpop.trf.xlu0
        %2383 = vxpose.xlu0.c.b16.start [1/8] %v2281, 128
        %2384 = vxpose.xlu0.c.b16.cont [2/8] 0, 128
        %2385 = vxpose.xlu0.c.b16.cont [3/8] 0, 128
        %2386 = vxpose.xlu0.c.b16.cont [4/8] 0, 128
        %2387 = vxpose.xlu0.c.b16.cont [5/8] 0, 128
        %2388 = vxpose.xlu0.c.b16.cont [6/8] 0, 128
        %2389 = vxpose.xlu0.c.b16.cont [7/8] 0, 128
        %2390 = vxpose.xlu0.c.b16.end [8/8] 0, 128
        %v2391 = vpop.trf.xlu0
        %v2392 = vpop.trf.xlu0
        %v2393 = vpop.trf.xlu0
        %v2394 = vpop.trf.xlu0
        %v2395 = vpop.trf.xlu0
        %v2396 = vpop.trf.xlu0
        %v2397 = vpop.trf.xlu0
        %v2398 = vpop.trf.xlu0
        %2399 = vxpose.xlu0.c.b16.start [1/8] %v2285, 128
        %2400 = vxpose.xlu0.c.b16.cont [2/8] 0, 128
        %2401 = vxpose.xlu0.c.b16.cont [3/8] 0, 128
        %2402 = vxpose.xlu0.c.b16.cont [4/8] 0, 128
        %2403 = vxpose.xlu0.c.b16.cont [5/8] 0, 128
        %2404 = vxpose.xlu0.c.b16.cont [6/8] 0, 128
        %2405 = vxpose.xlu0.c.b16.cont [7/8] 0, 128
        %2406 = vxpose.xlu0.c.b16.end [8/8] 0, 128
        %v2407 = vpop.trf.xlu0
        %v2408 = vpop.trf.xlu0
        %v2409 = vpop.trf.xlu0
        %v2410 = vpop.trf.xlu0
        %v2411 = vpop.trf.xlu0
        %v2412 = vpop.trf.xlu0
        %v2413 = vpop.trf.xlu0
        %v2414 = vpop.trf.xlu0
        %v2415 = vrot.slane %v2359, 4
        %v2416 = vsel %vm1497, %v2415, %v2295
        %v2418 = vunpack.c.l.s4 1983009808
        %v2419 = vunpack.c.0.s8 %v2418
        %v2420 = vperm.slane %v2416, %v2419
        %v2421 = vrot.slane %v2391, 4
        %v2422 = vsel %vm1497, %v2421, %v2327
        %v2424 = vunpack.c.l.s4 1983009808
        %v2425 = vunpack.c.0.s8 %v2424
        %v2426 = vperm.slane %v2422, %v2425
        %v2427 = vrot.slane %v2426, 4
        %v2428 = vsel %vm1497, %v2427, %v2420
        %v2430 = vunpack.c.l.s4 1934713408
        %v2431 = vunpack.c.0.s8 %v2430
        %v2432 = vperm.slane %v2428, %v2431
        %v2433 = vrot.slane %v2432, 4
        %v2434 = vsel %vm1497, 0, %v2433
        %v2435 = vrot.slane %v2375, 4
        %v2436 = vsel %vm1497, %v2435, %v2311
        %v2438 = vunpack.c.l.s4 1983009808
        %v2439 = vunpack.c.0.s8 %v2438
        %v2440 = vperm.slane %v2436, %v2439
        %v2441 = vrot.slane %v2407, 4
        %v2442 = vsel %vm1497, %v2441, %v2343
        %v2444 = vunpack.c.l.s4 1983009808
        %v2445 = vunpack.c.0.s8 %v2444
        %v2446 = vperm.slane %v2442, %v2445
        %v2447 = vrot.slane %v2446, 4
        %v2448 = vsel %vm1497, %v2447, %v2440
        %v2450 = vunpack.c.l.s4 1934713408
        %v2451 = vunpack.c.0.s8 %v2450
        %v2452 = vperm.slane %v2448, %v2451
        %v2453 = vrot.slane %v2452, 4
        %v2454 = vsel %vm1497, 0, %v2453
        %v2457 = vpack.i.b16 %v2452, %v2432
        %v2458 = vshrl.u32 %v2432, 16
        %v2459 = vshrl.u32 %v2452, 16
        %v2460 = vpack.i.b16 %v2459, %v2458
        %v2463 = vpack.i.b16 %v2454, %v2434
        %v2464 = vshrl.u32 %v2434, 16
        %v2465 = vshrl.u32 %v2454, 16
        %v2466 = vpack.i.b16 %v2465, %v2464
        %v2468 = vsel %vm1945, %v2457, 0
        %v2471 = vsel %vm1945, %v2067, 0
        %2473 = vmatpush.bf16.xpose.msra.mxu0 0
        %2474 = vmatpush.bf16.xpose.msra.mxu0 0
        %2475 = vmatpush.bf16.xpose.msra.mxu0 0
        %2476 = vmatpush.bf16.xpose.msra.mxu0 0
        %2477 = vmatpush.bf16.xpose.msra.mxu0 0
        %2478 = vmatpush.bf16.xpose.msra.mxu0 0
        %2479 = vmatpush.bf16.xpose.msra.mxu0 0
        %2480 = vmatpush.bf16.xpose.msra.mxu0 %v2471
        %2481 = vmatmul.bf16.gmra.mxu0 %v2468
        %v2482 = vpop.f32.mrf.mxu0
        %v2483 = vadd.f32 0.0, %v2482
        %v2484 = vpop.f32.mrf.mxu0
        %2485 = vdwg.mxu0
        %v2487 = vsel %vm1945, %v2460, 0
        %v2490 = vsel %vm1945, %v2068, 0
        %2492 = vmatpush.bf16.xpose.msra.mxu0 0
        %2493 = vmatpush.bf16.xpose.msra.mxu0 0
        %2494 = vmatpush.bf16.xpose.msra.mxu0 0
        %2495 = vmatpush.bf16.xpose.msra.mxu0 0
        %2496 = vmatpush.bf16.xpose.msra.mxu0 0
        %2497 = vmatpush.bf16.xpose.msra.mxu0 0
        %2498 = vmatpush.bf16.xpose.msra.mxu0 0
        %2499 = vmatpush.bf16.xpose.msra.mxu0 %v2490
        %2500 = vmatmul.bf16.gmra.mxu0 %v2487
        %v2501 = vpop.f32.mrf.mxu0
        %v2502 = vadd.f32 0.0, %v2501
        %v2503 = vpop.f32.mrf.mxu0
        %2504 = vdwg.mxu0
        %v2506 = vsel %vm1945, %v2463, 0
        %v2509 = vsel %vm1945, %v2069, 0
        %2511 = vmatpush.bf16.xpose.msra.mxu0 0
        %2512 = vmatpush.bf16.xpose.msra.mxu0 0
        %2513 = vmatpush.bf16.xpose.msra.mxu0 0
        %2514 = vmatpush.bf16.xpose.msra.mxu0 0
        %2515 = vmatpush.bf16.xpose.msra.mxu0 0
        %2516 = vmatpush.bf16.xpose.msra.mxu0 0
        %2517 = vmatpush.bf16.xpose.msra.mxu0 0
        %2518 = vmatpush.bf16.xpose.msra.mxu0 %v2509
        %2519 = vmatmul.bf16.gmra.mxu0 %v2506
        %v2520 = vpop.f32.mrf.mxu0
        %v2521 = vadd.f32 0.0, %v2520
        %v2522 = vpop.f32.mrf.mxu0
        %2523 = vdwg.mxu0
        %v2525 = vsel %vm1945, %v2466, 0
        %v2528 = vsel %vm1945, %v2070, 0
        %2530 = vmatpush.bf16.xpose.msra.mxu0 0
        %2531 = vmatpush.bf16.xpose.msra.mxu0 0
        %2532 = vmatpush.bf16.xpose.msra.mxu0 0
        %2533 = vmatpush.bf16.xpose.msra.mxu0 0
        %2534 = vmatpush.bf16.xpose.msra.mxu0 0
        %2535 = vmatpush.bf16.xpose.msra.mxu0 0
        %2536 = vmatpush.bf16.xpose.msra.mxu0 0
        %2537 = vmatpush.bf16.xpose.msra.mxu0 %v2528
        %2538 = vmatmul.bf16.gmra.mxu0 %v2525
        %v2539 = vpop.f32.mrf.mxu0
        %v2540 = vadd.f32 0.0, %v2539
        %v2541 = vpop.f32.mrf.mxu0
        %2542 = vdwg.mxu0
        %2543 = vxpose.xlu0.b32.start [1/16] %v2483, 128
        %2544 = vxpose.xlu0.b32.cont [2/16] 0.0, 128
        %2545 = vxpose.xlu0.b32.cont [3/16] 0.0, 128
        %2546 = vxpose.xlu0.b32.cont [4/16] 0.0, 128
        %2547 = vxpose.xlu0.b32.cont [5/16] 0.0, 128
        %2548 = vxpose.xlu0.b32.cont [6/16] 0.0, 128
        %2549 = vxpose.xlu0.b32.cont [7/16] 0.0, 128
        %2550 = vxpose.xlu0.b32.cont [8/16] 0.0, 128
        %2551 = vxpose.xlu0.b32.cont [9/16] 0.0, 128
        %2552 = vxpose.xlu0.b32.cont [10/16] 0.0, 128
        %2553 = vxpose.xlu0.b32.cont [11/16] 0.0, 128
        %2554 = vxpose.xlu0.b32.cont [12/16] 0.0, 128
        %2555 = vxpose.xlu0.b32.cont [13/16] 0.0, 128
        %2556 = vxpose.xlu0.b32.cont [14/16] 0.0, 128
        %2557 = vxpose.xlu0.b32.cont [15/16] 0.0, 128
        %2558 = vxpose.xlu0.b32.end [16/16] 0.0, 128
        %v2559 = vpop.trf.xlu0
        %v2560 = vpop.trf.xlu0
        %v2561 = vpop.trf.xlu0
        %v2562 = vpop.trf.xlu0
        %v2563 = vpop.trf.xlu0
        %v2564 = vpop.trf.xlu0
        %v2565 = vpop.trf.xlu0
        %v2566 = vpop.trf.xlu0
        %v2567 = vpop.trf.xlu0
        %v2568 = vpop.trf.xlu0
        %v2569 = vpop.trf.xlu0
        %v2570 = vpop.trf.xlu0
        %v2571 = vpop.trf.xlu0
        %v2572 = vpop.trf.xlu0
        %v2573 = vpop.trf.xlu0
        %v2574 = vpop.trf.xlu0
        %2575 = vxpose.xlu0.b32.start [1/16] %v2502, 128
        %2576 = vxpose.xlu0.b32.cont [2/16] 0.0, 128
        %2577 = vxpose.xlu0.b32.cont [3/16] 0.0, 128
        %2578 = vxpose.xlu0.b32.cont [4/16] 0.0, 128
        %2579 = vxpose.xlu0.b32.cont [5/16] 0.0, 128
        %2580 = vxpose.xlu0.b32.cont [6/16] 0.0, 128
        %2581 = vxpose.xlu0.b32.cont [7/16] 0.0, 128
        %2582 = vxpose.xlu0.b32.cont [8/16] 0.0, 128
        %2583 = vxpose.xlu0.b32.cont [9/16] 0.0, 128
        %2584 = vxpose.xlu0.b32.cont [10/16] 0.0, 128
        %2585 = vxpose.xlu0.b32.cont [11/16] 0.0, 128
        %2586 = vxpose.xlu0.b32.cont [12/16] 0.0, 128
        %2587 = vxpose.xlu0.b32.cont [13/16] 0.0, 128
        %2588 = vxpose.xlu0.b32.cont [14/16] 0.0, 128
        %2589 = vxpose.xlu0.b32.cont [15/16] 0.0, 128
        %2590 = vxpose.xlu0.b32.end [16/16] 0.0, 128
        %v2591 = vpop.trf.xlu0
        %v2592 = vpop.trf.xlu0
        %v2593 = vpop.trf.xlu0
        %v2594 = vpop.trf.xlu0
        %v2595 = vpop.trf.xlu0
        %v2596 = vpop.trf.xlu0
        %v2597 = vpop.trf.xlu0
        %v2598 = vpop.trf.xlu0
        %v2599 = vpop.trf.xlu0
        %v2600 = vpop.trf.xlu0
        %v2601 = vpop.trf.xlu0
        %v2602 = vpop.trf.xlu0
        %v2603 = vpop.trf.xlu0
        %v2604 = vpop.trf.xlu0
        %v2605 = vpop.trf.xlu0
        %v2606 = vpop.trf.xlu0
        %2607 = vxpose.xlu0.b32.start [1/16] %v2521, 128
        %2608 = vxpose.xlu0.b32.cont [2/16] 0.0, 128
        %2609 = vxpose.xlu0.b32.cont [3/16] 0.0, 128
        %2610 = vxpose.xlu0.b32.cont [4/16] 0.0, 128
        %2611 = vxpose.xlu0.b32.cont [5/16] 0.0, 128
        %2612 = vxpose.xlu0.b32.cont [6/16] 0.0, 128
        %2613 = vxpose.xlu0.b32.cont [7/16] 0.0, 128
        %2614 = vxpose.xlu0.b32.cont [8/16] 0.0, 128
        %2615 = vxpose.xlu0.b32.cont [9/16] 0.0, 128
        %2616 = vxpose.xlu0.b32.cont [10/16] 0.0, 128
        %2617 = vxpose.xlu0.b32.cont [11/16] 0.0, 128
        %2618 = vxpose.xlu0.b32.cont [12/16] 0.0, 128
        %2619 = vxpose.xlu0.b32.cont [13/16] 0.0, 128
        %2620 = vxpose.xlu0.b32.cont [14/16] 0.0, 128
        %2621 = vxpose.xlu0.b32.cont [15/16] 0.0, 128
        %2622 = vxpose.xlu0.b32.end [16/16] 0.0, 128
        %v2623 = vpop.trf.xlu0
        %v2624 = vpop.trf.xlu0
        %v2625 = vpop.trf.xlu0
        %v2626 = vpop.trf.xlu0
        %v2627 = vpop.trf.xlu0
        %v2628 = vpop.trf.xlu0
        %v2629 = vpop.trf.xlu0
        %v2630 = vpop.trf.xlu0
        %v2631 = vpop.trf.xlu0
        %v2632 = vpop.trf.xlu0
        %v2633 = vpop.trf.xlu0
        %v2634 = vpop.trf.xlu0
        %v2635 = vpop.trf.xlu0
        %v2636 = vpop.trf.xlu0
        %v2637 = vpop.trf.xlu0
        %v2638 = vpop.trf.xlu0
        %2639 = vxpose.xlu0.b32.start [1/16] %v2540, 128
        %2640 = vxpose.xlu0.b32.cont [2/16] 0.0, 128
        %2641 = vxpose.xlu0.b32.cont [3/16] 0.0, 128
        %2642 = vxpose.xlu0.b32.cont [4/16] 0.0, 128
        %2643 = vxpose.xlu0.b32.cont [5/16] 0.0, 128
        %2644 = vxpose.xlu0.b32.cont [6/16] 0.0, 128
        %2645 = vxpose.xlu0.b32.cont [7/16] 0.0, 128
        %2646 = vxpose.xlu0.b32.cont [8/16] 0.0, 128
        %2647 = vxpose.xlu0.b32.cont [9/16] 0.0, 128
        %2648 = vxpose.xlu0.b32.cont [10/16] 0.0, 128
        %2649 = vxpose.xlu0.b32.cont [11/16] 0.0, 128
        %2650 = vxpose.xlu0.b32.cont [12/16] 0.0, 128
        %2651 = vxpose.xlu0.b32.cont [13/16] 0.0, 128
        %2652 = vxpose.xlu0.b32.cont [14/16] 0.0, 128
        %2653 = vxpose.xlu0.b32.cont [15/16] 0.0, 128
        %2654 = vxpose.xlu0.b32.end [16/16] 0.0, 128
        %v2655 = vpop.trf.xlu0
        %v2656 = vpop.trf.xlu0
        %v2657 = vpop.trf.xlu0
        %v2658 = vpop.trf.xlu0
        %v2659 = vpop.trf.xlu0
        %v2660 = vpop.trf.xlu0
        %v2661 = vpop.trf.xlu0
        %v2662 = vpop.trf.xlu0
        %v2663 = vpop.trf.xlu0
        %v2664 = vpop.trf.xlu0
        %v2665 = vpop.trf.xlu0
        %v2666 = vpop.trf.xlu0
        %v2667 = vpop.trf.xlu0
        %v2668 = vpop.trf.xlu0
        %v2669 = vpop.trf.xlu0
        %v2670 = vpop.trf.xlu0
        %v2671 = vrot.slane %v2623, 4
        %v2672 = vsel %vm1279, %v2671, %v2559
        %v2673 = vrot.slane %v2559, 4
        %v2674 = vsel %vm1279, %v2623, %v2673
        %v2676 = vunpack.c.l.s4 1983009808
        %v2677 = vunpack.c.0.s8 %v2676
        %v2678 = vperm.slane %v2672, %v2677
        %v2680 = vunpack.c.l.s4 1983009808
        %v2681 = vunpack.c.0.s8 %v2680
        %v2682 = vperm.slane %v2674, %v2681
        %v2683 = vrot.slane %v2655, 4
        %v2684 = vsel %vm1279, %v2683, %v2591
        %v2685 = vrot.slane %v2591, 4
        %v2686 = vsel %vm1279, %v2655, %v2685
        %v2688 = vunpack.c.l.s4 1983009808
        %v2689 = vunpack.c.0.s8 %v2688
        %v2690 = vperm.slane %v2684, %v2689
        %v2692 = vunpack.c.l.s4 1983009808
        %v2693 = vunpack.c.0.s8 %v2692
        %v2694 = vperm.slane %v2686, %v2693
        %v2695 = vrot.slane %v2690, 4
        %v2696 = vsel %vm1279, %v2695, %v2678
        %v2697 = vrot.slane %v2678, 4
        %v2698 = vsel %vm1279, %v2690, %v2697
        %v2700 = vunpack.c.l.s4 1934713408
        %v2701 = vunpack.c.0.s8 %v2700
        %v2702 = vperm.slane %v2696, %v2701
        %v2704 = vunpack.c.l.s4 1934713408
        %v2705 = vunpack.c.0.s8 %v2704
        %v2706 = vperm.slane %v2698, %v2705
        %v2707 = vrot.slane %v2694, 4
        %v2708 = vsel %vm1279, %v2707, %v2682
        %v2709 = vrot.slane %v2682, 4
        %v2710 = vsel %vm1279, %v2694, %v2709
        %v2712 = vunpack.c.l.s4 1934713408
        %v2713 = vunpack.c.0.s8 %v2712
        %v2714 = vperm.slane %v2708, %v2713
        %v2716 = vunpack.c.l.s4 1934713408
        %v2717 = vunpack.c.0.s8 %v2716
        %v2718 = vperm.slane %v2710, %v2717
        %v2719 = vrot.slane %v2702, 4
        %v2720 = vsel %vm1279, 0.0, %v2719
        %v2721 = vrot.slane %v2706, 4
        %v2722 = vsel %vm1279, 0.0, %v2721
        %v2723 = vrot.slane %v2714, 4
        %v2724 = vsel %vm1279, 0.0, %v2723
        %v2725 = vrot.slane %v2718, 4
        %v2726 = vsel %vm1279, 0.0, %v2725
        %v2727 = vsel %vm1279, %v2721, %v2702
        %v2729 = vunpack.c.l.s4 1983009808
        %v2730 = vunpack.c.0.s8 %v2729
        %v2731 = vperm.slane %v2727, %v2730
        %v2732 = vrot.slane %v2722, 4
        %v2733 = vsel %vm1279, %v2732, %v2720
        %v2735 = vunpack.c.l.s4 1983009808
        %v2736 = vunpack.c.0.s8 %v2735
        %v2737 = vperm.slane %v2733, %v2736
        %v2738 = vsel %vm1279, %v2725, %v2714
        %v2740 = vunpack.c.l.s4 1983009808
        %v2741 = vunpack.c.0.s8 %v2740
        %v2742 = vperm.slane %v2738, %v2741
        %v2743 = vrot.slane %v2726, 4
        %v2744 = vsel %vm1279, %v2743, %v2724
        %v2746 = vunpack.c.l.s4 1983009808
        %v2747 = vunpack.c.0.s8 %v2746
        %v2748 = vperm.slane %v2744, %v2747
        %v2749 = vrot.slane %v2737, 4
        %v2750 = vsel %vm1279, %v2749, %v2731
        %v2751 = vrot.slane %v2731, 4
        %v2752 = vsel %vm1279, %v2737, %v2751
        %v2754 = vunpack.c.l.s4 1934713408
        %v2755 = vunpack.c.0.s8 %v2754
        %v2756 = vperm.slane %v2750, %v2755
        %v2758 = vunpack.c.l.s4 1934713408
        %v2759 = vunpack.c.0.s8 %v2758
        %v2760 = vperm.slane %v2752, %v2759
        %v2761 = vrot.slane %v2748, 4
        %v2762 = vsel %vm1279, %v2761, %v2742
        %v2763 = vrot.slane %v2742, 4
        %v2764 = vsel %vm1279, %v2748, %v2763
        %v2766 = vunpack.c.l.s4 1934713408
        %v2767 = vunpack.c.0.s8 %v2766
        %v2768 = vperm.slane %v2762, %v2767
        %v2770 = vunpack.c.l.s4 1934713408
        %v2771 = vunpack.c.0.s8 %v2770
        %v2772 = vperm.slane %v2764, %v2771
        %v2773 = vrot.slane %v2768, 4
        %v2774 = vsel %vm1279, %v2773, %v2756
        %v2775 = vrot.slane %v2756, 4
        %v2776 = vsel %vm1279, %v2768, %v2775
        %v2777 = vrot.slane %v2772, 4
        %v2778 = vsel %vm1279, %v2777, %v2760
        %v2779 = vrot.slane %v2760, 4
        %v2780 = vsel %vm1279, %v2772, %v2779
        %2782 = vrot.lane.b32.xlu0 %v2776, 8
        %v2783 = vpop.permute.xlu0 %2782
        %2786 = vrot.lane.b32.xlu0 %v2778, 16
        %v2787 = vpop.permute.xlu0 %2786
        %2790 = vrot.lane.b32.xlu0 %v2780, 24
        %v2791 = vpop.permute.xlu0 %2790
        %v2793 = vsel %vm1945, %v2774, %v2783
        %vm2794 = vcmask 130048
        %v2795 = vsel %vm2794, %v2793, %v2787
        %vm2796 = vcmask 195584
        %v2797 = vsel %vm2796, %v2795, %v2791
        %v2798 = vpack.c.bf16 %v2797, %v2797
        %v2800 = vperm.slane %v1204, 0
        %v2806 = vunpack.c.l.b16 %v1200
        %v2807 = vunpack.c.l.b16 %v1201
        %v2808 = vunpack.c.l.b16 %v1202
        %v2809 = vunpack.c.l.b16 %v1203
        %v2810 = vpack.c.b16 %v2807, %v2806
        %v2811 = vpack.c.b16 %v2809, %v2808
        %v2815 = vsel %vm1220, %v2798, 0
        %2817 = vmatpush.bf16.msra.mxu0 0
        %2818 = vmatpush.bf16.msra.mxu0 0
        %2819 = vmatpush.bf16.msra.mxu0 0
        %2820 = vmatpush.bf16.msra.mxu0 0
        %2821 = vmatpush.bf16.msra.mxu0 0
        %2822 = vmatpush.bf16.msra.mxu0 0
        %2823 = vmatpush.bf16.msra.mxu0 %v2811
        %2824 = vmatpush.bf16.msra.mxu0 %v2810
        %2825 = vmatmul.bf16.gmra.mxu0 %v2815
        %v2826 = vpop.f32.mrf.mxu0
        %v2827 = vadd.f32 %v2800, %v2826
        %v2828 = vpop.f32.mrf.mxu0
        %2829 = vdwg.mxu0
        %v2830 = vadd.f32 %v2827, %v1186
        %v2831 = vld [vmem:[#allocation16] sm:$0x1]
        %v2832 = vld [vmem:[#allocation17] sm:$0x1]
        %v2833 = vsel %vm1220, %v2830, 0.0
        %2834 = vadd.xlane.f32.xlu0 %v2833
        %v2835 = vpop.xlane.xlu0 %2834
        %v2836 = vrcp.pop 32.0
        %v2837 = vmul.f32 32.0, %v2836
        %v2838 = vsub.f32 1.0, %v2837
        %v2839 = vmul.f32 %v2836, %v2838
        %v2840 = vadd.f32 %v2836, %v2839
        %vm2841 = vweird.f32 %v2836
        %v2842 = vsel %vm2841, %v2836, %v2840
        %v2843 = vmul.f32 %v2835, %v2842
        %v2844 = vsub.f32 %v2830, %v2843
        %v2845 = vmul.f32 %v2844, %v2844
        %v2846 = vsel %vm1220, %v2845, 0.0
        %2847 = vadd.xlane.f32.xlu0 %v2846
        %v2848 = vpop.xlane.xlu0 %2847
        %v2849 = vmul.f32 %v2848, %v2842
        %v2850 = vadd.f32 %v2849, 1e-05
        %v2851 = vrsqrt.pop %v2850
        %v2852 = vmul.f32 %v2851, %v2850
        %v2853 = vmul.f32 %v2852, %v2851
        %v2854 = vmul.f32 0.5, %v2853
        %v2855 = vsub.f32 1.5, %v2854
        %v2856 = vmul.f32 %v2851, %v2855
        %vm2857 = vweird.f32 %v2850
        %vm2858 = vweird.f32 %v2851
        %vm2859 = vmor %vm2857, %vm2858
        %v2860 = vsel %vm2859, %v2851, %v2856
        %v2861 = vmul.f32 %v2844, %v2860
        %v2863 = vperm.slane %v2831, 0
        %v2865 = vmul.f32 %v2861, %v2863
        %v2867 = vperm.slane %v2832, 0
        %v2869 = vadd.f32 %v2865, %v2867
        %2871 = vset.pattern.permute.xlu0 0
        %2872 = vperm.xlu0 %2871, %v1187
        %v2873 = vpop.permute.xlu0 %2872
        %v2875 = vmul.f32 %v2869, %v2873
        %v2876 = vld [vmem:[%s1016] sm:$0xf]
        %v2877 = vld [vmem:[%s1036] sm:$0xf]
        %v2878 = vld [vmem:[%s14] sm:$0xf]
        %v2879 = vld [vmem:[%s14 + $0x4] sm:$0xf]
        %v2880 = vld [vmem:[%s14 + $0x8] sm:$0xf]
        %v2881 = vld [vmem:[%s14 + $0xc] sm:$0xf]
        %v2882 = vld [vmem:[#allocation19] sm:$0x1]
        %v2883 = vld [vmem:[%s16] sm:$0xf]
        %v2884 = vld [vmem:[%s16 + $0x4] sm:$0xf]
        %v2885 = vld [vmem:[%s16 + $0x8] sm:$0xf]
        %v2886 = vld [vmem:[%s16 + $0xc] sm:$0xf]
        %v2887 = vld [vmem:[%s17] sm:$0x1]
        %v2888 = vld [vmem:[#allocation20] sm:$0xf]
        %v2889 = vld [vmem:[#allocation20 + $0x4] sm:$0xf]
        %v2890 = vld [vmem:[#allocation20 + $0x8] sm:$0xf]
        %v2891 = vld [vmem:[#allocation20 + $0xc] sm:$0xf]
        %v2892 = vld [vmem:[%s19] sm:$0x1]
        %v2893 = vpack.c.bf16 %v2875, %v2875
        %v2895 = vperm.slane %v2882, 0
        %v2901 = vunpack.c.l.b16 %v2878
        %v2902 = vunpack.c.l.b16 %v2879
        %v2903 = vunpack.c.l.b16 %v2880
        %v2904 = vunpack.c.l.b16 %v2881
        %v2905 = vpack.c.b16 %v2902, %v2901
        %v2906 = vpack.c.b16 %v2904, %v2903
        %v2910 = vsel %vm1220, %v2893, 0
        %2912 = vmatpush.bf16.msra.mxu0 0
        %2913 = vmatpush.bf16.msra.mxu0 0
        %2914 = vmatpush.bf16.msra.mxu0 0
        %2915 = vmatpush.bf16.msra.mxu0 0
        %2916 = vmatpush.bf16.msra.mxu0 0
        %2917 = vmatpush.bf16.msra.mxu0 0
        %2918 = vmatpush.bf16.msra.mxu0 %v2906
        %2919 = vmatpush.bf16.msra.mxu0 %v2905
        %2920 = vmatmul.bf16.gmra.mxu0 %v2910
        %v2921 = vpop.f32.mrf.mxu0
        %v2922 = vadd.f32 %v2895, %v2921
        %v2923 = vpop.f32.mrf.mxu0
        %2924 = vdwg.mxu0
        %v2926 = vperm.slane %v2887, 0
        %v2932 = vunpack.c.l.b16 %v2883
        %v2933 = vunpack.c.l.b16 %v2884
        %v2934 = vunpack.c.l.b16 %v2885
        %v2935 = vunpack.c.l.b16 %v2886
        %v2936 = vpack.c.b16 %v2933, %v2932
        %v2937 = vpack.c.b16 %v2935, %v2934
        %v2941 = vsel %vm1220, %v2876, 0
        %2943 = vmatpush.bf16.msra.mxu0 0
        %2944 = vmatpush.bf16.msra.mxu0 0
        %2945 = vmatpush.bf16.msra.mxu0 0
        %2946 = vmatpush.bf16.msra.mxu0 0
        %2947 = vmatpush.bf16.msra.mxu0 0
        %2948 = vmatpush.bf16.msra.mxu0 0
        %2949 = vmatpush.bf16.msra.mxu0 %v2937
        %2950 = vmatpush.bf16.msra.mxu0 %v2936
        %2951 = vmatmul.bf16.gmra.mxu0 %v2941
        %v2952 = vpop.f32.mrf.mxu0
        %v2953 = vadd.f32 %v2926, %v2952
        %v2954 = vpop.f32.mrf.mxu0
        %2955 = vdwg.mxu0
        %2957 = vrot.lane.b32.xlu0 %v2922, 120
        %v2958 = vpop.permute.xlu0 %2957
        %2960 = vrot.lane.b32.xlu0 %v2922, 112
        %v2961 = vpop.permute.xlu0 %2960
        %2963 = vrot.lane.b32.xlu0 %v2922, 104
        %v2964 = vpop.permute.xlu0 %2963
        %v2966 = vrot.slane %v2961, 4
        %v2967 = vsel %vm1279, %v2966, %v2922
        %v2968 = vrot.slane %v2922, 4
        %v2969 = vsel %vm1279, %v2961, %v2968
        %v2971 = vunpack.c.l.s4 1983009808
        %v2972 = vunpack.c.0.s8 %v2971
        %v2973 = vperm.slane %v2967, %v2972
        %v2975 = vunpack.c.l.s4 1983009808
        %v2976 = vunpack.c.0.s8 %v2975
        %v2977 = vperm.slane %v2969, %v2976
        %v2978 = vrot.slane %v2964, 4
        %v2979 = vsel %vm1279, %v2978, %v2958
        %v2980 = vrot.slane %v2958, 4
        %v2981 = vsel %vm1279, %v2964, %v2980
        %v2983 = vunpack.c.l.s4 1983009808
        %v2984 = vunpack.c.0.s8 %v2983
        %v2985 = vperm.slane %v2979, %v2984
        %v2987 = vunpack.c.l.s4 1983009808
        %v2988 = vunpack.c.0.s8 %v2987
        %v2989 = vperm.slane %v2981, %v2988
        %v2990 = vrot.slane %v2985, 4
        %v2991 = vsel %vm1279, %v2990, %v2973
        %v2992 = vrot.slane %v2973, 4
        %v2993 = vsel %vm1279, %v2985, %v2992
        %v2995 = vunpack.c.l.s4 1934713408
        %v2996 = vunpack.c.0.s8 %v2995
        %v2997 = vperm.slane %v2991, %v2996
        %v2999 = vunpack.c.l.s4 1934713408
        %v3000 = vunpack.c.0.s8 %v2999
        %v3001 = vperm.slane %v2993, %v3000
        %v3002 = vrot.slane %v2989, 4
        %v3003 = vsel %vm1279, %v3002, %v2977
        %v3004 = vrot.slane %v2977, 4
        %v3005 = vsel %vm1279, %v2989, %v3004
        %v3007 = vunpack.c.l.s4 1934713408
        %v3008 = vunpack.c.0.s8 %v3007
        %v3009 = vperm.slane %v3003, %v3008
        %v3011 = vunpack.c.l.s4 1934713408
        %v3012 = vunpack.c.0.s8 %v3011
        %v3013 = vperm.slane %v3005, %v3012
        %v3014 = vrot.slane %v2997, 4
        %v3015 = vsel %vm1279, 0.0, %v3014
        %v3016 = vrot.slane %v3001, 4
        %v3017 = vsel %vm1279, 0.0, %v3016
        %v3018 = vrot.slane %v3009, 4
        %v3019 = vsel %vm1279, 0.0, %v3018
        %v3020 = vrot.slane %v3013, 4
        %v3021 = vsel %vm1279, 0.0, %v3020
        %v3022 = vpack.c.bf16 %v2997, %v2997
        %v3023 = vpack.c.bf16 %v3015, %v3015
        %v3024 = vpack.c.bf16 %v3001, %v3001
        %v3025 = vpack.c.bf16 %v3017, %v3017
        %v3026 = vpack.c.bf16 %v3009, %v3009
        %v3027 = vpack.c.bf16 %v3019, %v3019
        %v3028 = vpack.c.bf16 %v3013, %v3013
        %v3029 = vpack.c.bf16 %v3021, %v3021
        %3031 = vrot.lane.b32.xlu0 %v2953, 120
        %v3032 = vpop.permute.xlu0 %3031
        %3034 = vrot.lane.b32.xlu0 %v2953, 112
        %v3035 = vpop.permute.xlu0 %3034
        %3037 = vrot.lane.b32.xlu0 %v2953, 104
        %v3038 = vpop.permute.xlu0 %3037
        %v3040 = vrot.slane %v3035, 4
        %v3041 = vsel %vm1279, %v3040, %v2953
        %v3042 = vrot.slane %v2953, 4
        %v3043 = vsel %vm1279, %v3035, %v3042
        %v3045 = vunpack.c.l.s4 1983009808
        %v3046 = vunpack.c.0.s8 %v3045
        %v3047 = vperm.slane %v3041, %v3046
        %v3049 = vunpack.c.l.s4 1983009808
        %v3050 = vunpack.c.0.s8 %v3049
        %v3051 = vperm.slane %v3043, %v3050
        %v3052 = vrot.slane %v3038, 4
        %v3053 = vsel %vm1279, %v3052, %v3032
        %v3054 = vrot.slane %v3032, 4
        %v3055 = vsel %vm1279, %v3038, %v3054
        %v3057 = vunpack.c.l.s4 1983009808
        %v3058 = vunpack.c.0.s8 %v3057
        %v3059 = vperm.slane %v3053, %v3058
        %v3061 = vunpack.c.l.s4 1983009808
        %v3062 = vunpack.c.0.s8 %v3061
        %v3063 = vperm.slane %v3055, %v3062
        %v3064 = vrot.slane %v3059, 4
        %v3065 = vsel %vm1279, %v3064, %v3047
        %v3066 = vrot.slane %v3047, 4
        %v3067 = vsel %vm1279, %v3059, %v3066
        %v3069 = vunpack.c.l.s4 1934713408
        %v3070 = vunpack.c.0.s8 %v3069
        %v3071 = vperm.slane %v3065, %v3070
        %v3073 = vunpack.c.l.s4 1934713408
        %v3074 = vunpack.c.0.s8 %v3073
        %v3075 = vperm.slane %v3067, %v3074
        %v3076 = vrot.slane %v3063, 4
        %v3077 = vsel %vm1279, %v3076, %v3051
        %v3078 = vrot.slane %v3051, 4
        %v3079 = vsel %vm1279, %v3063, %v3078
        %v3081 = vunpack.c.l.s4 1934713408
        %v3082 = vunpack.c.0.s8 %v3081
        %v3083 = vperm.slane %v3077, %v3082
        %v3085 = vunpack.c.l.s4 1934713408
        %v3086 = vunpack.c.0.s8 %v3085
        %v3087 = vperm.slane %v3079, %v3086
        %v3088 = vrot.slane %v3071, 4
        %v3089 = vsel %vm1279, 0.0, %v3088
        %v3090 = vrot.slane %v3075, 4
        %v3091 = vsel %vm1279, 0.0, %v3090
        %v3092 = vrot.slane %v3083, 4
        %v3093 = vsel %vm1279, 0.0, %v3092
        %v3094 = vrot.slane %v3087, 4
        %v3095 = vsel %vm1279, 0.0, %v3094
        %v3096 = vpack.c.bf16 %v3071, %v3071
        %v3097 = vpack.c.bf16 %v3089, %v3089
        %v3098 = vpack.c.bf16 %v3075, %v3075
        %v3099 = vpack.c.bf16 %v3091, %v3091
        %v3100 = vpack.c.bf16 %v3083, %v3083
        %v3101 = vpack.c.bf16 %v3093, %v3093
        %v3102 = vpack.c.bf16 %v3087, %v3087
        %v3103 = vpack.c.bf16 %v3095, %v3095
        %3104 = vrot.lane.b32.xlu0 %v2953, 96
        %v3105 = vpop.permute.xlu0 %3104
        %3106 = vrot.lane.b32.xlu0 %v3032, 96
        %v3107 = vpop.permute.xlu0 %3106
        %3108 = vrot.lane.b32.xlu0 %v3035, 96
        %v3109 = vpop.permute.xlu0 %3108
        %3110 = vrot.lane.b32.xlu0 %v3038, 96
        %v3111 = vpop.permute.xlu0 %3110
        %v3116 = vrot.slane %v3109, 4
        %v3117 = vsel %vm1279, %v3116, %v3105
        %v3118 = vrot.slane %v3105, 4
        %v3119 = vsel %vm1279, %v3109, %v3118
        %v3121 = vunpack.c.l.s4 1983009808
        %v3122 = vunpack.c.0.s8 %v3121
        %v3123 = vperm.slane %v3117, %v3122
        %v3125 = vunpack.c.l.s4 1983009808
        %v3126 = vunpack.c.0.s8 %v3125
        %v3127 = vperm.slane %v3119, %v3126
        %v3128 = vrot.slane %v3111, 4
        %v3129 = vsel %vm1279, %v3128, %v3107
        %v3130 = vrot.slane %v3107, 4
        %v3131 = vsel %vm1279, %v3111, %v3130
        %v3133 = vunpack.c.l.s4 1983009808
        %v3134 = vunpack.c.0.s8 %v3133
        %v3135 = vperm.slane %v3129, %v3134
        %v3137 = vunpack.c.l.s4 1983009808
        %v3138 = vunpack.c.0.s8 %v3137
        %v3139 = vperm.slane %v3131, %v3138
        %v3140 = vrot.slane %v3135, 4
        %v3141 = vsel %vm1279, %v3140, %v3123
        %v3142 = vrot.slane %v3123, 4
        %v3143 = vsel %vm1279, %v3135, %v3142
        %v3145 = vunpack.c.l.s4 1934713408
        %v3146 = vunpack.c.0.s8 %v3145
        %v3147 = vperm.slane %v3141, %v3146
        %v3149 = vunpack.c.l.s4 1934713408
        %v3150 = vunpack.c.0.s8 %v3149
        %v3151 = vperm.slane %v3143, %v3150
        %v3152 = vrot.slane %v3139, 4
        %v3153 = vsel %vm1279, %v3152, %v3127
        %v3154 = vrot.slane %v3127, 4
        %v3155 = vsel %vm1279, %v3139, %v3154
        %v3157 = vunpack.c.l.s4 1934713408
        %v3158 = vunpack.c.0.s8 %v3157
        %v3159 = vperm.slane %v3153, %v3158
        %v3161 = vunpack.c.l.s4 1934713408
        %v3162 = vunpack.c.0.s8 %v3161
        %v3163 = vperm.slane %v3155, %v3162
        %v3164 = vrot.slane %v3147, 4
        %v3165 = vsel %vm1279, 0.0, %v3164
        %v3166 = vrot.slane %v3151, 4
        %v3167 = vsel %vm1279, 0.0, %v3166
        %v3168 = vrot.slane %v3159, 4
        %v3169 = vsel %vm1279, 0.0, %v3168
        %v3170 = vrot.slane %v3163, 4
        %v3171 = vsel %vm1279, 0.0, %v3170
        %v3172 = vpack.c.bf16 %v3147, %v3147
        %v3173 = vpack.c.bf16 %v3165, %v3165
        %v3174 = vpack.c.bf16 %v3151, %v3151
        %v3175 = vpack.c.bf16 %v3167, %v3167
        %v3176 = vpack.c.bf16 %v3159, %v3159
        %v3177 = vpack.c.bf16 %v3169, %v3169
        %v3178 = vpack.c.bf16 %v3163, %v3163
        %v3179 = vpack.c.bf16 %v3171, %v3171
        %v3180 = vunpack.c.l.bf16 %v2877
        %vm3181 = vcmp.gt.f32.partialorder %v3180, 0.0
        %v3182 = vsel %vm3181, 0.0, -1e+09
        %v3183 = vrot.slane %v3026, 4
        %v3184 = vsel %vm1497, %v3183, %v3022
        %v3186 = vunpack.c.l.s4 1983009808
        %v3187 = vunpack.c.0.s8 %v3186
        %v3188 = vperm.slane %v3184, %v3187
        %v3189 = vrot.slane %v3028, 4
        %v3190 = vsel %vm1497, %v3189, %v3024
        %v3192 = vunpack.c.l.s4 1983009808
        %v3193 = vunpack.c.0.s8 %v3192
        %v3194 = vperm.slane %v3190, %v3193
        %v3195 = vrot.slane %v3194, 4
        %v3196 = vsel %vm1497, %v3195, %v3188
        %v3198 = vunpack.c.l.s4 1934713408
        %v3199 = vunpack.c.0.s8 %v3198
        %v3200 = vperm.slane %v3196, %v3199
        %v3201 = vrot.slane %v3200, 4
        %v3202 = vsel %vm1497, 0, %v3201
        %v3203 = vrot.slane %v3027, 4
        %v3204 = vsel %vm1497, %v3203, %v3023
        %v3206 = vunpack.c.l.s4 1983009808
        %v3207 = vunpack.c.0.s8 %v3206
        %v3208 = vperm.slane %v3204, %v3207
        %v3209 = vrot.slane %v3029, 4
        %v3210 = vsel %vm1497, %v3209, %v3025
        %v3212 = vunpack.c.l.s4 1983009808
        %v3213 = vunpack.c.0.s8 %v3212
        %v3214 = vperm.slane %v3210, %v3213
        %v3215 = vrot.slane %v3214, 4
        %v3216 = vsel %vm1497, %v3215, %v3208
        %v3218 = vunpack.c.l.s4 1934713408
        %v3219 = vunpack.c.0.s8 %v3218
        %v3220 = vperm.slane %v3216, %v3219
        %v3221 = vrot.slane %v3220, 4
        %v3222 = vsel %vm1497, 0, %v3221
        %v3225 = vpack.i.b16 %v3220, %v3200
        %v3226 = vshrl.u32 %v3200, 16
        %v3227 = vshrl.u32 %v3220, 16
        %v3228 = vpack.i.b16 %v3227, %v3226
        %v3231 = vpack.i.b16 %v3222, %v3202
        %v3232 = vshrl.u32 %v3202, 16
        %v3233 = vshrl.u32 %v3222, 16
        %v3234 = vpack.i.b16 %v3233, %v3232
        %3235 = vxpose.xlu0.c.b16.start [1/8] %v3096, 128
        %3236 = vxpose.xlu0.c.b16.cont [2/8] 0, 128
        %3237 = vxpose.xlu0.c.b16.cont [3/8] 0, 128
        %3238 = vxpose.xlu0.c.b16.cont [4/8] 0, 128
        %3239 = vxpose.xlu0.c.b16.cont [5/8] 0, 128
        %3240 = vxpose.xlu0.c.b16.cont [6/8] 0, 128
        %3241 = vxpose.xlu0.c.b16.cont [7/8] 0, 128
        %3242 = vxpose.xlu0.c.b16.end [8/8] 0, 128
        %v3243 = vpop.trf.xlu0
        %v3244 = vpop.trf.xlu0
        %v3245 = vpop.trf.xlu0
        %v3246 = vpop.trf.xlu0
        %v3247 = vpop.trf.xlu0
        %v3248 = vpop.trf.xlu0
        %v3249 = vpop.trf.xlu0
        %v3250 = vpop.trf.xlu0
        %3251 = vxpose.xlu0.c.b16.start [1/8] %v3097, 128
        %3252 = vxpose.xlu0.c.b16.cont [2/8] 0, 128
        %3253 = vxpose.xlu0.c.b16.cont [3/8] 0, 128
        %3254 = vxpose.xlu0.c.b16.cont [4/8] 0, 128
        %3255 = vxpose.xlu0.c.b16.cont [5/8] 0, 128
        %3256 = vxpose.xlu0.c.b16.cont [6/8] 0, 128
        %3257 = vxpose.xlu0.c.b16.cont [7/8] 0, 128
        %3258 = vxpose.xlu0.c.b16.end [8/8] 0, 128
        %v3259 = vpop.trf.xlu0
        %v3260 = vpop.trf.xlu0
        %v3261 = vpop.trf.xlu0
        %v3262 = vpop.trf.xlu0
        %v3263 = vpop.trf.xlu0
        %v3264 = vpop.trf.xlu0
        %v3265 = vpop.trf.xlu0
        %v3266 = vpop.trf.xlu0
        %3267 = vxpose.xlu0.c.b16.start [1/8] %v3098, 128
        %3268 = vxpose.xlu0.c.b16.cont [2/8] 0, 128
        %3269 = vxpose.xlu0.c.b16.cont [3/8] 0, 128
        %3270 = vxpose.xlu0.c.b16.cont [4/8] 0, 128
        %3271 = vxpose.xlu0.c.b16.cont [5/8] 0, 128
        %3272 = vxpose.xlu0.c.b16.cont [6/8] 0, 128
        %3273 = vxpose.xlu0.c.b16.cont [7/8] 0, 128
        %3274 = vxpose.xlu0.c.b16.end [8/8] 0, 128
        %v3275 = vpop.trf.xlu0
        %v3276 = vpop.trf.xlu0
        %v3277 = vpop.trf.xlu0
        %v3278 = vpop.trf.xlu0
        %v3279 = vpop.trf.xlu0
        %v3280 = vpop.trf.xlu0
        %v3281 = vpop.trf.xlu0
        %v3282 = vpop.trf.xlu0
        %3283 = vxpose.xlu0.c.b16.start [1/8] %v3099, 128
        %3284 = vxpose.xlu0.c.b16.cont [2/8] 0, 128
        %3285 = vxpose.xlu0.c.b16.cont [3/8] 0, 128
        %3286 = vxpose.xlu0.c.b16.cont [4/8] 0, 128
        %3287 = vxpose.xlu0.c.b16.cont [5/8] 0, 128
        %3288 = vxpose.xlu0.c.b16.cont [6/8] 0, 128
        %3289 = vxpose.xlu0.c.b16.cont [7/8] 0, 128
        %3290 = vxpose.xlu0.c.b16.end [8/8] 0, 128
        %v3291 = vpop.trf.xlu0
        %v3292 = vpop.trf.xlu0
        %v3293 = vpop.trf.xlu0
        %v3294 = vpop.trf.xlu0
        %v3295 = vpop.trf.xlu0
        %v3296 = vpop.trf.xlu0
        %v3297 = vpop.trf.xlu0
        %v3298 = vpop.trf.xlu0
        %3299 = vxpose.xlu0.c.b16.start [1/8] %v3100, 128
        %3300 = vxpose.xlu0.c.b16.cont [2/8] 0, 128
        %3301 = vxpose.xlu0.c.b16.cont [3/8] 0, 128
        %3302 = vxpose.xlu0.c.b16.cont [4/8] 0, 128
        %3303 = vxpose.xlu0.c.b16.cont [5/8] 0, 128
        %3304 = vxpose.xlu0.c.b16.cont [6/8] 0, 128
        %3305 = vxpose.xlu0.c.b16.cont [7/8] 0, 128
        %3306 = vxpose.xlu0.c.b16.end [8/8] 0, 128
        %v3307 = vpop.trf.xlu0
        %v3308 = vpop.trf.xlu0
        %v3309 = vpop.trf.xlu0
        %v3310 = vpop.trf.xlu0
        %v3311 = vpop.trf.xlu0
        %v3312 = vpop.trf.xlu0
        %v3313 = vpop.trf.xlu0
        %v3314 = vpop.trf.xlu0
        %3315 = vxpose.xlu0.c.b16.start [1/8] %v3101, 128
        %3316 = vxpose.xlu0.c.b16.cont [2/8] 0, 128
        %3317 = vxpose.xlu0.c.b16.cont [3/8] 0, 128
        %3318 = vxpose.xlu0.c.b16.cont [4/8] 0, 128
        %3319 = vxpose.xlu0.c.b16.cont [5/8] 0, 128
        %3320 = vxpose.xlu0.c.b16.cont [6/8] 0, 128
        %3321 = vxpose.xlu0.c.b16.cont [7/8] 0, 128
        %3322 = vxpose.xlu0.c.b16.end [8/8] 0, 128
        %v3323 = vpop.trf.xlu0
        %v3324 = vpop.trf.xlu0
        %v3325 = vpop.trf.xlu0
        %v3326 = vpop.trf.xlu0
        %v3327 = vpop.trf.xlu0
        %v3328 = vpop.trf.xlu0
        %v3329 = vpop.trf.xlu0
        %v3330 = vpop.trf.xlu0
        %3331 = vxpose.xlu0.c.b16.start [1/8] %v3102, 128
        %3332 = vxpose.xlu0.c.b16.cont [2/8] 0, 128
        %3333 = vxpose.xlu0.c.b16.cont [3/8] 0, 128
        %3334 = vxpose.xlu0.c.b16.cont [4/8] 0, 128
        %3335 = vxpose.xlu0.c.b16.cont [5/8] 0, 128
        %3336 = vxpose.xlu0.c.b16.cont [6/8] 0, 128
        %3337 = vxpose.xlu0.c.b16.cont [7/8] 0, 128
        %3338 = vxpose.xlu0.c.b16.end [8/8] 0, 128
        %v3339 = vpop.trf.xlu0
        %v3340 = vpop.trf.xlu0
        %v3341 = vpop.trf.xlu0
        %v3342 = vpop.trf.xlu0
        %v3343 = vpop.trf.xlu0
        %v3344 = vpop.trf.xlu0
        %v3345 = vpop.trf.xlu0
        %v3346 = vpop.trf.xlu0
        %3347 = vxpose.xlu0.c.b16.start [1/8] %v3103, 128
        %3348 = vxpose.xlu0.c.b16.cont [2/8] 0, 128
        %3349 = vxpose.xlu0.c.b16.cont [3/8] 0, 128
        %3350 = vxpose.xlu0.c.b16.cont [4/8] 0, 128
        %3351 = vxpose.xlu0.c.b16.cont [5/8] 0, 128
        %3352 = vxpose.xlu0.c.b16.cont [6/8] 0, 128
        %3353 = vxpose.xlu0.c.b16.cont [7/8] 0, 128
        %3354 = vxpose.xlu0.c.b16.end [8/8] 0, 128
        %v3355 = vpop.trf.xlu0
        %v3356 = vpop.trf.xlu0
        %v3357 = vpop.trf.xlu0
        %v3358 = vpop.trf.xlu0
        %v3359 = vpop.trf.xlu0
        %v3360 = vpop.trf.xlu0
        %v3361 = vpop.trf.xlu0
        %v3362 = vpop.trf.xlu0
        %v3363 = vrot.slane %v3307, 4
        %v3364 = vsel %vm1497, %v3363, %v3243
        %v3366 = vunpack.c.l.s4 1983009808
        %v3367 = vunpack.c.0.s8 %v3366
        %v3368 = vperm.slane %v3364, %v3367
        %v3369 = vrot.slane %v3339, 4
        %v3370 = vsel %vm1497, %v3369, %v3275
        %v3372 = vunpack.c.l.s4 1983009808
        %v3373 = vunpack.c.0.s8 %v3372
        %v3374 = vperm.slane %v3370, %v3373
        %v3375 = vrot.slane %v3374, 4
        %v3376 = vsel %vm1497, %v3375, %v3368
        %v3377 = vrot.slane %v3368, 4
        %v3378 = vsel %vm1497, %v3374, %v3377
        %v3380 = vunpack.c.l.s4 1934713408
        %v3381 = vunpack.c.0.s8 %v3380
        %v3382 = vperm.slane %v3376, %v3381
        %v3384 = vunpack.c.l.s4 1934713408
        %v3385 = vunpack.c.0.s8 %v3384
        %v3386 = vperm.slane %v3378, %v3385
        %v3387 = vrot.slane %v3382, 4
        %v3388 = vsel %vm1497, 0, %v3387
        %v3389 = vrot.slane %v3386, 4
        %v3390 = vsel %vm1497, 0, %v3389
        %v3391 = vrot.slane %v3323, 4
        %v3392 = vsel %vm1497, %v3391, %v3259
        %v3394 = vunpack.c.l.s4 1983009808
        %v3395 = vunpack.c.0.s8 %v3394
        %v3396 = vperm.slane %v3392, %v3395
        %v3397 = vrot.slane %v3355, 4
        %v3398 = vsel %vm1497, %v3397, %v3291
        %v3400 = vunpack.c.l.s4 1983009808
        %v3401 = vunpack.c.0.s8 %v3400
        %v3402 = vperm.slane %v3398, %v3401
        %v3403 = vrot.slane %v3402, 4
        %v3404 = vsel %vm1497, %v3403, %v3396
        %v3405 = vrot.slane %v3396, 4
        %v3406 = vsel %vm1497, %v3402, %v3405
        %v3408 = vunpack.c.l.s4 1934713408
        %v3409 = vunpack.c.0.s8 %v3408
        %v3410 = vperm.slane %v3404, %v3409
        %v3412 = vunpack.c.l.s4 1934713408
        %v3413 = vunpack.c.0.s8 %v3412
        %v3414 = vperm.slane %v3406, %v3413
        %v3415 = vrot.slane %v3410, 4
        %v3416 = vsel %vm1497, 0, %v3415
        %v3417 = vrot.slane %v3414, 4
        %v3418 = vsel %vm1497, 0, %v3417
        %v3421 = vpack.i.b16 %v3410, %v3382
        %v3423 = vshrl.u32 %v3382, 16
        %v3424 = vshrl.u32 %v3410, 16
        %v3425 = vpack.i.b16 %v3424, %v3423
        %v3429 = vpack.i.b16 %v3416, %v3388
        %v3431 = vshrl.u32 %v3388, 16
        %v3432 = vshrl.u32 %v3416, 16
        %v3433 = vpack.i.b16 %v3432, %v3431
        %v3437 = vpack.i.b16 %v3414, %v3386
        %v3439 = vshrl.u32 %v3386, 16
        %v3440 = vshrl.u32 %v3414, 16
        %v3441 = vpack.i.b16 %v3440, %v3439
        %v3445 = vpack.i.b16 %v3418, %v3390
        %v3447 = vshrl.u32 %v3390, 16
        %v3448 = vshrl.u32 %v3418, 16
        %v3449 = vpack.i.b16 %v3448, %v3447
        %3451 = vxpose.xlu0.c.b16.start [1/8] %v3421, 128
        %3452 = vxpose.xlu0.c.b16.cont [2/8] 0, 128
        %3453 = vxpose.xlu0.c.b16.cont [3/8] 0, 128
        %3454 = vxpose.xlu0.c.b16.cont [4/8] 0, 128
        %3455 = vxpose.xlu0.c.b16.cont [5/8] 0, 128
        %3456 = vxpose.xlu0.c.b16.cont [6/8] 0, 128
        %3457 = vxpose.xlu0.c.b16.cont [7/8] 0, 128
        %3458 = vxpose.xlu0.c.b16.end [8/8] 0, 128
        %v3459 = vpop.trf.xlu0
        %v3460 = vpop.trf.xlu0
        %v3461 = vpop.trf.xlu0
        %v3462 = vpop.trf.xlu0
        %v3463 = vpop.trf.xlu0
        %v3464 = vpop.trf.xlu0
        %v3465 = vpop.trf.xlu0
        %v3466 = vpop.trf.xlu0
        %3467 = vxpose.xlu0.c.b16.start [1/8] %v3425, 128
        %3468 = vxpose.xlu0.c.b16.cont [2/8] 0, 128
        %3469 = vxpose.xlu0.c.b16.cont [3/8] 0, 128
        %3470 = vxpose.xlu0.c.b16.cont [4/8] 0, 128
        %3471 = vxpose.xlu0.c.b16.cont [5/8] 0, 128
        %3472 = vxpose.xlu0.c.b16.cont [6/8] 0, 128
        %3473 = vxpose.xlu0.c.b16.cont [7/8] 0, 128
        %3474 = vxpose.xlu0.c.b16.end [8/8] 0, 128
        %v3475 = vpop.trf.xlu0
        %v3476 = vpop.trf.xlu0
        %v3477 = vpop.trf.xlu0
        %v3478 = vpop.trf.xlu0
        %v3479 = vpop.trf.xlu0
        %v3480 = vpop.trf.xlu0
        %v3481 = vpop.trf.xlu0
        %v3482 = vpop.trf.xlu0
        %3483 = vxpose.xlu0.c.b16.start [1/8] %v3429, 128
        %3484 = vxpose.xlu0.c.b16.cont [2/8] 0, 128
        %3485 = vxpose.xlu0.c.b16.cont [3/8] 0, 128
        %3486 = vxpose.xlu0.c.b16.cont [4/8] 0, 128
        %3487 = vxpose.xlu0.c.b16.cont [5/8] 0, 128
        %3488 = vxpose.xlu0.c.b16.cont [6/8] 0, 128
        %3489 = vxpose.xlu0.c.b16.cont [7/8] 0, 128
        %3490 = vxpose.xlu0.c.b16.end [8/8] 0, 128
        %v3491 = vpop.trf.xlu0
        %v3492 = vpop.trf.xlu0
        %v3493 = vpop.trf.xlu0
        %v3494 = vpop.trf.xlu0
        %v3495 = vpop.trf.xlu0
        %v3496 = vpop.trf.xlu0
        %v3497 = vpop.trf.xlu0
        %v3498 = vpop.trf.xlu0
        %3499 = vxpose.xlu0.c.b16.start [1/8] %v3433, 128
        %3500 = vxpose.xlu0.c.b16.cont [2/8] 0, 128
        %3501 = vxpose.xlu0.c.b16.cont [3/8] 0, 128
        %3502 = vxpose.xlu0.c.b16.cont [4/8] 0, 128
        %3503 = vxpose.xlu0.c.b16.cont [5/8] 0, 128
        %3504 = vxpose.xlu0.c.b16.cont [6/8] 0, 128
        %3505 = vxpose.xlu0.c.b16.cont [7/8] 0, 128
        %3506 = vxpose.xlu0.c.b16.end [8/8] 0, 128
        %v3507 = vpop.trf.xlu0
        %v3508 = vpop.trf.xlu0
        %v3509 = vpop.trf.xlu0
        %v3510 = vpop.trf.xlu0
        %v3511 = vpop.trf.xlu0
        %v3512 = vpop.trf.xlu0
        %v3513 = vpop.trf.xlu0
        %v3514 = vpop.trf.xlu0
        %3515 = vxpose.xlu0.c.b16.start [1/8] %v3437, 128
        %3516 = vxpose.xlu0.c.b16.cont [2/8] 0, 128
        %3517 = vxpose.xlu0.c.b16.cont [3/8] 0, 128
        %3518 = vxpose.xlu0.c.b16.cont [4/8] 0, 128
        %3519 = vxpose.xlu0.c.b16.cont [5/8] 0, 128
        %3520 = vxpose.xlu0.c.b16.cont [6/8] 0, 128
        %3521 = vxpose.xlu0.c.b16.cont [7/8] 0, 128
        %3522 = vxpose.xlu0.c.b16.end [8/8] 0, 128
        %v3523 = vpop.trf.xlu0
        %v3524 = vpop.trf.xlu0
        %v3525 = vpop.trf.xlu0
        %v3526 = vpop.trf.xlu0
        %v3527 = vpop.trf.xlu0
        %v3528 = vpop.trf.xlu0
        %v3529 = vpop.trf.xlu0
        %v3530 = vpop.trf.xlu0
        %3531 = vxpose.xlu0.c.b16.start [1/8] %v3441, 128
        %3532 = vxpose.xlu0.c.b16.cont [2/8] 0, 128
        %3533 = vxpose.xlu0.c.b16.cont [3/8] 0, 128
        %3534 = vxpose.xlu0.c.b16.cont [4/8] 0, 128
        %3535 = vxpose.xlu0.c.b16.cont [5/8] 0, 128
        %3536 = vxpose.xlu0.c.b16.cont [6/8] 0, 128
        %3537 = vxpose.xlu0.c.b16.cont [7/8] 0, 128
        %3538 = vxpose.xlu0.c.b16.end [8/8] 0, 128
        %v3539 = vpop.trf.xlu0
        %v3540 = vpop.trf.xlu0
        %v3541 = vpop.trf.xlu0
        %v3542 = vpop.trf.xlu0
        %v3543 = vpop.trf.xlu0
        %v3544 = vpop.trf.xlu0
        %v3545 = vpop.trf.xlu0
        %v3546 = vpop.trf.xlu0
        %3547 = vxpose.xlu0.c.b16.start [1/8] %v3445, 128
        %3548 = vxpose.xlu0.c.b16.cont [2/8] 0, 128
        %3549 = vxpose.xlu0.c.b16.cont [3/8] 0, 128
        %3550 = vxpose.xlu0.c.b16.cont [4/8] 0, 128
        %3551 = vxpose.xlu0.c.b16.cont [5/8] 0, 128
        %3552 = vxpose.xlu0.c.b16.cont [6/8] 0, 128
        %3553 = vxpose.xlu0.c.b16.cont [7/8] 0, 128
        %3554 = vxpose.xlu0.c.b16.end [8/8] 0, 128
        %v3555 = vpop.trf.xlu0
        %v3556 = vpop.trf.xlu0
        %v3557 = vpop.trf.xlu0
        %v3558 = vpop.trf.xlu0
        %v3559 = vpop.trf.xlu0
        %v3560 = vpop.trf.xlu0
        %v3561 = vpop.trf.xlu0
        %v3562 = vpop.trf.xlu0
        %3563 = vxpose.xlu0.c.b16.start [1/8] %v3449, 128
        %3564 = vxpose.xlu0.c.b16.cont [2/8] 0, 128
        %3565 = vxpose.xlu0.c.b16.cont [3/8] 0, 128
        %3566 = vxpose.xlu0.c.b16.cont [4/8] 0, 128
        %3567 = vxpose.xlu0.c.b16.cont [5/8] 0, 128
        %3568 = vxpose.xlu0.c.b16.cont [6/8] 0, 128
        %3569 = vxpose.xlu0.c.b16.cont [7/8] 0, 128
        %3570 = vxpose.xlu0.c.b16.end [8/8] 0, 128
        %v3571 = vpop.trf.xlu0
        %v3572 = vpop.trf.xlu0
        %v3573 = vpop.trf.xlu0
        %v3574 = vpop.trf.xlu0
        %v3575 = vpop.trf.xlu0
        %v3576 = vpop.trf.xlu0
        %v3577 = vpop.trf.xlu0
        %v3578 = vpop.trf.xlu0
        %v3579 = vrot.slane %v3523, 4
        %v3580 = vsel %vm1497, %v3579, %v3459
        %v3582 = vunpack.c.l.s4 1983009808
        %v3583 = vunpack.c.0.s8 %v3582
        %v3584 = vperm.slane %v3580, %v3583
        %v3585 = vrot.slane %v3555, 4
        %v3586 = vsel %vm1497, %v3585, %v3491
        %v3588 = vunpack.c.l.s4 1983009808
        %v3589 = vunpack.c.0.s8 %v3588
        %v3590 = vperm.slane %v3586, %v3589
        %v3591 = vrot.slane %v3590, 4
        %v3592 = vsel %vm1497, %v3591, %v3584
        %v3594 = vunpack.c.l.s4 1934713408
        %v3595 = vunpack.c.0.s8 %v3594
        %v3596 = vperm.slane %v3592, %v3595
        %v3597 = vrot.slane %v3596, 4
        %v3598 = vsel %vm1497, 0, %v3597
        %v3599 = vrot.slane %v3539, 4
        %v3600 = vsel %vm1497, %v3599, %v3475
        %v3602 = vunpack.c.l.s4 1983009808
        %v3603 = vunpack.c.0.s8 %v3602
        %v3604 = vperm.slane %v3600, %v3603
        %v3605 = vrot.slane %v3571, 4
        %v3606 = vsel %vm1497, %v3605, %v3507
        %v3608 = vunpack.c.l.s4 1983009808
        %v3609 = vunpack.c.0.s8 %v3608
        %v3610 = vperm.slane %v3606, %v3609
        %v3611 = vrot.slane %v3610, 4
        %v3612 = vsel %vm1497, %v3611, %v3604
        %v3614 = vunpack.c.l.s4 1934713408
        %v3615 = vunpack.c.0.s8 %v3614
        %v3616 = vperm.slane %v3612, %v3615
        %v3617 = vrot.slane %v3616, 4
        %v3618 = vsel %vm1497, 0, %v3617
        %v3621 = vpack.i.b16 %v3616, %v3596
        %v3622 = vshrl.u32 %v3596, 16
        %v3623 = vshrl.u32 %v3616, 16
        %v3624 = vpack.i.b16 %v3623, %v3622
        %v3627 = vpack.i.b16 %v3618, %v3598
        %v3628 = vshrl.u32 %v3598, 16
        %v3629 = vshrl.u32 %v3618, 16
        %v3630 = vpack.i.b16 %v3629, %v3628
        %v3632 = vsel %vm1945, %v3225, 0
        %v3635 = vsel %vm1949, %v3621, 0
        %3637 = vmatpush.bf16.msra.mxu0 0
        %3638 = vmatpush.bf16.msra.mxu0 0
        %3639 = vmatpush.bf16.msra.mxu0 0
        %3640 = vmatpush.bf16.msra.mxu0 0
        %3641 = vmatpush.bf16.msra.mxu0 0
        %3642 = vmatpush.bf16.msra.mxu0 0
        %3643 = vmatpush.bf16.msra.mxu0 0
        %3644 = vmatpush.bf16.msra.mxu0 %v3635
        %3645 = vmatmul.bf16.gmra.mxu0 %v3632
        %v3646 = vpop.f32.mrf.mxu0
        %v3647 = vadd.f32 %v3182, %v3646
        %v3648 = vpop.f32.mrf.mxu0
        %3649 = vdwg.mxu0
        %v3651 = vsel %vm1945, %v3228, 0
        %v3654 = vsel %vm1949, %v3624, 0
        %3656 = vmatpush.bf16.msra.mxu0 0
        %3657 = vmatpush.bf16.msra.mxu0 0
        %3658 = vmatpush.bf16.msra.mxu0 0
        %3659 = vmatpush.bf16.msra.mxu0 0
        %3660 = vmatpush.bf16.msra.mxu0 0
        %3661 = vmatpush.bf16.msra.mxu0 0
        %3662 = vmatpush.bf16.msra.mxu0 0
        %3663 = vmatpush.bf16.msra.mxu0 %v3654
        %3664 = vmatmul.bf16.gmra.mxu0 %v3651
        %v3665 = vpop.f32.mrf.mxu0
        %v3666 = vadd.f32 %v3182, %v3665
        %v3667 = vpop.f32.mrf.mxu0
        %3668 = vdwg.mxu0
        %v3670 = vsel %vm1945, %v3231, 0
        %v3673 = vsel %vm1949, %v3627, 0
        %3675 = vmatpush.bf16.msra.mxu0 0
        %3676 = vmatpush.bf16.msra.mxu0 0
        %3677 = vmatpush.bf16.msra.mxu0 0
        %3678 = vmatpush.bf16.msra.mxu0 0
        %3679 = vmatpush.bf16.msra.mxu0 0
        %3680 = vmatpush.bf16.msra.mxu0 0
        %3681 = vmatpush.bf16.msra.mxu0 0
        %3682 = vmatpush.bf16.msra.mxu0 %v3673
        %3683 = vmatmul.bf16.gmra.mxu0 %v3670
        %v3684 = vpop.f32.mrf.mxu0
        %v3685 = vadd.f32 %v3182, %v3684
        %v3686 = vpop.f32.mrf.mxu0
        %3687 = vdwg.mxu0
        %v3689 = vsel %vm1945, %v3234, 0
        %v3692 = vsel %vm1949, %v3630, 0
        %3694 = vmatpush.bf16.msra.mxu0 0
        %3695 = vmatpush.bf16.msra.mxu0 0
        %3696 = vmatpush.bf16.msra.mxu0 0
        %3697 = vmatpush.bf16.msra.mxu0 0
        %3698 = vmatpush.bf16.msra.mxu0 0
        %3699 = vmatpush.bf16.msra.mxu0 0
        %3700 = vmatpush.bf16.msra.mxu0 0
        %3701 = vmatpush.bf16.msra.mxu0 %v3692
        %3702 = vmatmul.bf16.gmra.mxu0 %v3689
        %v3703 = vpop.f32.mrf.mxu0
        %v3704 = vadd.f32 %v3182, %v3703
        %v3705 = vpop.f32.mrf.mxu0
        %3706 = vdwg.mxu0
        %v3707 = vsel %vm1945, %v3647, -inf
        %3708 = vmax.xlane.f32.xlu0 %v3707
        %v3709 = vpop.xlane.xlu0 %3708
        %v3710 = vsel %vm1945, %v3666, -inf
        %3711 = vmax.xlane.f32.xlu0 %v3710
        %v3712 = vpop.xlane.xlu0 %3711
        %v3713 = vsel %vm1945, %v3685, -inf
        %3714 = vmax.xlane.f32.xlu0 %v3713
        %v3715 = vpop.xlane.xlu0 %3714
        %v3716 = vsel %vm1945, %v3704, -inf
        %3717 = vmax.xlane.f32.xlu0 %v3716
        %v3718 = vpop.xlane.xlu0 %3717
        %v3719 = vsub.f32 %v3647, %v3709
        %v3720 = vsub.f32 %v3666, %v3712
        %v3721 = vsub.f32 %v3685, %v3715
        %v3722 = vsub.f32 %v3704, %v3718
        %v3723 = vmul.f32 %v3719, 1.442695
        %v3724 = vpow.pop %v3723
        %v3725 = vmul.f32 %v3720, 1.442695
        %v3726 = vpow.pop %v3725
        %v3727 = vmul.f32 %v3721, 1.442695
        %v3728 = vpow.pop %v3727
        %v3729 = vmul.f32 %v3722, 1.442695
        %v3730 = vpow.pop %v3729
        %v3731 = vsel %vm1945, %v3724, 0.0
        %3732 = vadd.xlane.f32.xlu0 %v3731
        %v3733 = vpop.xlane.xlu0 %3732
        %v3734 = vsel %vm1945, %v3726, 0.0
        %3735 = vadd.xlane.f32.xlu0 %v3734
        %v3736 = vpop.xlane.xlu0 %3735
        %v3737 = vsel %vm1945, %v3728, 0.0
        %3738 = vadd.xlane.f32.xlu0 %v3737
        %v3739 = vpop.xlane.xlu0 %3738
        %v3740 = vsel %vm1945, %v3730, 0.0
        %3741 = vadd.xlane.f32.xlu0 %v3740
        %v3742 = vpop.xlane.xlu0 %3741
        %v3743 = vrcp.pop %v3733
        %v3744 = vrcp.pop %v3736
        %v3745 = vrcp.pop %v3739
        %v3746 = vrcp.pop %v3742
        %v3747 = vmul.f32 %v3724, %v3743
        %v3748 = vmul.f32 %v3726, %v3744
        %v3749 = vmul.f32 %v3728, %v3745
        %v3750 = vmul.f32 %v3730, %v3746
        %v3751 = vpack.c.bf16 %v3747, %v3747
        %v3752 = vpack.c.bf16 %v3748, %v3748
        %v3753 = vpack.c.bf16 %v3749, %v3749
        %v3754 = vpack.c.bf16 %v3750, %v3750
        %3755 = vxpose.xlu0.c.b16.start [1/8] %v3172, 128
        %3756 = vxpose.xlu0.c.b16.cont [2/8] 0, 128
        %3757 = vxpose.xlu0.c.b16.cont [3/8] 0, 128
        %3758 = vxpose.xlu0.c.b16.cont [4/8] 0, 128
        %3759 = vxpose.xlu0.c.b16.cont [5/8] 0, 128
        %3760 = vxpose.xlu0.c.b16.cont [6/8] 0, 128
        %3761 = vxpose.xlu0.c.b16.cont [7/8] 0, 128
        %3762 = vxpose.xlu0.c.b16.end [8/8] 0, 128
        %v3763 = vpop.trf.xlu0
        %v3764 = vpop.trf.xlu0
        %v3765 = vpop.trf.xlu0
        %v3766 = vpop.trf.xlu0
        %v3767 = vpop.trf.xlu0
        %v3768 = vpop.trf.xlu0
        %v3769 = vpop.trf.xlu0
        %v3770 = vpop.trf.xlu0
        %3771 = vxpose.xlu0.c.b16.start [1/8] %v3173, 128
        %3772 = vxpose.xlu0.c.b16.cont [2/8] 0, 128
        %3773 = vxpose.xlu0.c.b16.cont [3/8] 0, 128
        %3774 = vxpose.xlu0.c.b16.cont [4/8] 0, 128
        %3775 = vxpose.xlu0.c.b16.cont [5/8] 0, 128
        %3776 = vxpose.xlu0.c.b16.cont [6/8] 0, 128
        %3777 = vxpose.xlu0.c.b16.cont [7/8] 0, 128
        %3778 = vxpose.xlu0.c.b16.end [8/8] 0, 128
        %v3779 = vpop.trf.xlu0
        %v3780 = vpop.trf.xlu0
        %v3781 = vpop.trf.xlu0
        %v3782 = vpop.trf.xlu0
        %v3783 = vpop.trf.xlu0
        %v3784 = vpop.trf.xlu0
        %v3785 = vpop.trf.xlu0
        %v3786 = vpop.trf.xlu0
        %3787 = vxpose.xlu0.c.b16.start [1/8] %v3174, 128
        %3788 = vxpose.xlu0.c.b16.cont [2/8] 0, 128
        %3789 = vxpose.xlu0.c.b16.cont [3/8] 0, 128
        %3790 = vxpose.xlu0.c.b16.cont [4/8] 0, 128
        %3791 = vxpose.xlu0.c.b16.cont [5/8] 0, 128
        %3792 = vxpose.xlu0.c.b16.cont [6/8] 0, 128
        %3793 = vxpose.xlu0.c.b16.cont [7/8] 0, 128
        %3794 = vxpose.xlu0.c.b16.end [8/8] 0, 128
        %v3795 = vpop.trf.xlu0
        %v3796 = vpop.trf.xlu0
        %v3797 = vpop.trf.xlu0
        %v3798 = vpop.trf.xlu0
        %v3799 = vpop.trf.xlu0
        %v3800 = vpop.trf.xlu0
        %v3801 = vpop.trf.xlu0
        %v3802 = vpop.trf.xlu0
        %3803 = vxpose.xlu0.c.b16.start [1/8] %v3175, 128
        %3804 = vxpose.xlu0.c.b16.cont [2/8] 0, 128
        %3805 = vxpose.xlu0.c.b16.cont [3/8] 0, 128
        %3806 = vxpose.xlu0.c.b16.cont [4/8] 0, 128
        %3807 = vxpose.xlu0.c.b16.cont [5/8] 0, 128
        %3808 = vxpose.xlu0.c.b16.cont [6/8] 0, 128
        %3809 = vxpose.xlu0.c.b16.cont [7/8] 0, 128
        %3810 = vxpose.xlu0.c.b16.end [8/8] 0, 128
        %v3811 = vpop.trf.xlu0
        %v3812 = vpop.trf.xlu0
        %v3813 = vpop.trf.xlu0
        %v3814 = vpop.trf.xlu0
        %v3815 = vpop.trf.xlu0
        %v3816 = vpop.trf.xlu0
        %v3817 = vpop.trf.xlu0
        %v3818 = vpop.trf.xlu0
        %3819 = vxpose.xlu0.c.b16.start [1/8] %v3176, 128
        %3820 = vxpose.xlu0.c.b16.cont [2/8] 0, 128
        %3821 = vxpose.xlu0.c.b16.cont [3/8] 0, 128
        %3822 = vxpose.xlu0.c.b16.cont [4/8] 0, 128
        %3823 = vxpose.xlu0.c.b16.cont [5/8] 0, 128
        %3824 = vxpose.xlu0.c.b16.cont [6/8] 0, 128
        %3825 = vxpose.xlu0.c.b16.cont [7/8] 0, 128
        %3826 = vxpose.xlu0.c.b16.end [8/8] 0, 128
        %v3827 = vpop.trf.xlu0
        %v3828 = vpop.trf.xlu0
        %v3829 = vpop.trf.xlu0
        %v3830 = vpop.trf.xlu0
        %v3831 = vpop.trf.xlu0
        %v3832 = vpop.trf.xlu0
        %v3833 = vpop.trf.xlu0
        %v3834 = vpop.trf.xlu0
        %3835 = vxpose.xlu0.c.b16.start [1/8] %v3177, 128
        %3836 = vxpose.xlu0.c.b16.cont [2/8] 0, 128
        %3837 = vxpose.xlu0.c.b16.cont [3/8] 0, 128
        %3838 = vxpose.xlu0.c.b16.cont [4/8] 0, 128
        %3839 = vxpose.xlu0.c.b16.cont [5/8] 0, 128
        %3840 = vxpose.xlu0.c.b16.cont [6/8] 0, 128
        %3841 = vxpose.xlu0.c.b16.cont [7/8] 0, 128
        %3842 = vxpose.xlu0.c.b16.end [8/8] 0, 128
        %v3843 = vpop.trf.xlu0
        %v3844 = vpop.trf.xlu0
        %v3845 = vpop.trf.xlu0
        %v3846 = vpop.trf.xlu0
        %v3847 = vpop.trf.xlu0
        %v3848 = vpop.trf.xlu0
        %v3849 = vpop.trf.xlu0
        %v3850 = vpop.trf.xlu0
        %3851 = vxpose.xlu0.c.b16.start [1/8] %v3178, 128
        %3852 = vxpose.xlu0.c.b16.cont [2/8] 0, 128
        %3853 = vxpose.xlu0.c.b16.cont [3/8] 0, 128
        %3854 = vxpose.xlu0.c.b16.cont [4/8] 0, 128
        %3855 = vxpose.xlu0.c.b16.cont [5/8] 0, 128
        %3856 = vxpose.xlu0.c.b16.cont [6/8] 0, 128
        %3857 = vxpose.xlu0.c.b16.cont [7/8] 0, 128
        %3858 = vxpose.xlu0.c.b16.end [8/8] 0, 128
        %v3859 = vpop.trf.xlu0
        %v3860 = vpop.trf.xlu0
        %v3861 = vpop.trf.xlu0
        %v3862 = vpop.trf.xlu0
        %v3863 = vpop.trf.xlu0
        %v3864 = vpop.trf.xlu0
        %v3865 = vpop.trf.xlu0
        %v3866 = vpop.trf.xlu0
        %3867 = vxpose.xlu0.c.b16.start [1/8] %v3179, 128
        %3868 = vxpose.xlu0.c.b16.cont [2/8] 0, 128
        %3869 = vxpose.xlu0.c.b16.cont [3/8] 0, 128
        %3870 = vxpose.xlu0.c.b16.cont [4/8] 0, 128
        %3871 = vxpose.xlu0.c.b16.cont [5/8] 0, 128
        %3872 = vxpose.xlu0.c.b16.cont [6/8] 0, 128
        %3873 = vxpose.xlu0.c.b16.cont [7/8] 0, 128
        %3874 = vxpose.xlu0.c.b16.end [8/8] 0, 128
        %v3875 = vpop.trf.xlu0
        %v3876 = vpop.trf.xlu0
        %v3877 = vpop.trf.xlu0
        %v3878 = vpop.trf.xlu0
        %v3879 = vpop.trf.xlu0
        %v3880 = vpop.trf.xlu0
        %v3881 = vpop.trf.xlu0
        %v3882 = vpop.trf.xlu0
        %v3883 = vrot.slane %v3827, 4
        %v3884 = vsel %vm1497, %v3883, %v3763
        %v3886 = vunpack.c.l.s4 1983009808
        %v3887 = vunpack.c.0.s8 %v3886
        %v3888 = vperm.slane %v3884, %v3887
        %v3889 = vrot.slane %v3859, 4
        %v3890 = vsel %vm1497, %v3889, %v3795
        %v3892 = vunpack.c.l.s4 1983009808
        %v3893 = vunpack.c.0.s8 %v3892
        %v3894 = vperm.slane %v3890, %v3893
        %v3895 = vrot.slane %v3894, 4
        %v3896 = vsel %vm1497, %v3895, %v3888
        %v3897 = vrot.slane %v3888, 4
        %v3898 = vsel %vm1497, %v3894, %v3897
        %v3900 = vunpack.c.l.s4 1934713408
        %v3901 = vunpack.c.0.s8 %v3900
        %v3902 = vperm.slane %v3896, %v3901
        %v3904 = vunpack.c.l.s4 1934713408
        %v3905 = vunpack.c.0.s8 %v3904
        %v3906 = vperm.slane %v3898, %v3905
        %v3907 = vrot.slane %v3902, 4
        %v3908 = vsel %vm1497, 0, %v3907
        %v3909 = vrot.slane %v3906, 4
        %v3910 = vsel %vm1497, 0, %v3909
        %v3911 = vrot.slane %v3843, 4
        %v3912 = vsel %vm1497, %v3911, %v3779
        %v3914 = vunpack.c.l.s4 1983009808
        %v3915 = vunpack.c.0.s8 %v3914
        %v3916 = vperm.slane %v3912, %v3915
        %v3917 = vrot.slane %v3875, 4
        %v3918 = vsel %vm1497, %v3917, %v3811
        %v3920 = vunpack.c.l.s4 1983009808
        %v3921 = vunpack.c.0.s8 %v3920
        %v3922 = vperm.slane %v3918, %v3921
        %v3923 = vrot.slane %v3922, 4
        %v3924 = vsel %vm1497, %v3923, %v3916
        %v3925 = vrot.slane %v3916, 4
        %v3926 = vsel %vm1497, %v3922, %v3925
        %v3928 = vunpack.c.l.s4 1934713408
        %v3929 = vunpack.c.0.s8 %v3928
        %v3930 = vperm.slane %v3924, %v3929
        %v3932 = vunpack.c.l.s4 1934713408
        %v3933 = vunpack.c.0.s8 %v3932
        %v3934 = vperm.slane %v3926, %v3933
        %v3935 = vrot.slane %v3930, 4
        %v3936 = vsel %vm1497, 0, %v3935
        %v3937 = vrot.slane %v3934, 4
        %v3938 = vsel %vm1497, 0, %v3937
        %v3941 = vpack.i.b16 %v3930, %v3902
        %v3943 = vshrl.u32 %v3902, 16
        %v3944 = vshrl.u32 %v3930, 16
        %v3945 = vpack.i.b16 %v3944, %v3943
        %v3949 = vpack.i.b16 %v3936, %v3908
        %v3951 = vshrl.u32 %v3908, 16
        %v3952 = vshrl.u32 %v3936, 16
        %v3953 = vpack.i.b16 %v3952, %v3951
        %v3957 = vpack.i.b16 %v3934, %v3906
        %v3959 = vshrl.u32 %v3906, 16
        %v3960 = vshrl.u32 %v3934, 16
        %v3961 = vpack.i.b16 %v3960, %v3959
        %v3965 = vpack.i.b16 %v3938, %v3910
        %v3967 = vshrl.u32 %v3910, 16
        %v3968 = vshrl.u32 %v3938, 16
        %v3969 = vpack.i.b16 %v3968, %v3967
        %3971 = vxpose.xlu0.c.b16.start [1/8] %v3941, 128
        %3972 = vxpose.xlu0.c.b16.cont [2/8] 0, 128
        %3973 = vxpose.xlu0.c.b16.cont [3/8] 0, 128
        %3974 = vxpose.xlu0.c.b16.cont [4/8] 0, 128
        %3975 = vxpose.xlu0.c.b16.cont [5/8] 0, 128
        %3976 = vxpose.xlu0.c.b16.cont [6/8] 0, 128
        %3977 = vxpose.xlu0.c.b16.cont [7/8] 0, 128
        %3978 = vxpose.xlu0.c.b16.end [8/8] 0, 128
        %v3979 = vpop.trf.xlu0
        %v3980 = vpop.trf.xlu0
        %v3981 = vpop.trf.xlu0
        %v3982 = vpop.trf.xlu0
        %v3983 = vpop.trf.xlu0
        %v3984 = vpop.trf.xlu0
        %v3985 = vpop.trf.xlu0
        %v3986 = vpop.trf.xlu0
        %3987 = vxpose.xlu0.c.b16.start [1/8] %v3945, 128
        %3988 = vxpose.xlu0.c.b16.cont [2/8] 0, 128
        %3989 = vxpose.xlu0.c.b16.cont [3/8] 0, 128
        %3990 = vxpose.xlu0.c.b16.cont [4/8] 0, 128
        %3991 = vxpose.xlu0.c.b16.cont [5/8] 0, 128
        %3992 = vxpose.xlu0.c.b16.cont [6/8] 0, 128
        %3993 = vxpose.xlu0.c.b16.cont [7/8] 0, 128
        %3994 = vxpose.xlu0.c.b16.end [8/8] 0, 128
        %v3995 = vpop.trf.xlu0
        %v3996 = vpop.trf.xlu0
        %v3997 = vpop.trf.xlu0
        %v3998 = vpop.trf.xlu0
        %v3999 = vpop.trf.xlu0
        %v4000 = vpop.trf.xlu0
        %v4001 = vpop.trf.xlu0
        %v4002 = vpop.trf.xlu0
        %4003 = vxpose.xlu0.c.b16.start [1/8] %v3949, 128
        %4004 = vxpose.xlu0.c.b16.cont [2/8] 0, 128
        %4005 = vxpose.xlu0.c.b16.cont [3/8] 0, 128
        %4006 = vxpose.xlu0.c.b16.cont [4/8] 0, 128
        %4007 = vxpose.xlu0.c.b16.cont [5/8] 0, 128
        %4008 = vxpose.xlu0.c.b16.cont [6/8] 0, 128
        %4009 = vxpose.xlu0.c.b16.cont [7/8] 0, 128
        %4010 = vxpose.xlu0.c.b16.end [8/8] 0, 128
        %v4011 = vpop.trf.xlu0
        %v4012 = vpop.trf.xlu0
        %v4013 = vpop.trf.xlu0
        %v4014 = vpop.trf.xlu0
        %v4015 = vpop.trf.xlu0
        %v4016 = vpop.trf.xlu0
        %v4017 = vpop.trf.xlu0
        %v4018 = vpop.trf.xlu0
        %4019 = vxpose.xlu0.c.b16.start [1/8] %v3953, 128
        %4020 = vxpose.xlu0.c.b16.cont [2/8] 0, 128
        %4021 = vxpose.xlu0.c.b16.cont [3/8] 0, 128
        %4022 = vxpose.xlu0.c.b16.cont [4/8] 0, 128
        %4023 = vxpose.xlu0.c.b16.cont [5/8] 0, 128
        %4024 = vxpose.xlu0.c.b16.cont [6/8] 0, 128
        %4025 = vxpose.xlu0.c.b16.cont [7/8] 0, 128
        %4026 = vxpose.xlu0.c.b16.end [8/8] 0, 128
        %v4027 = vpop.trf.xlu0
        %v4028 = vpop.trf.xlu0
        %v4029 = vpop.trf.xlu0
        %v4030 = vpop.trf.xlu0
        %v4031 = vpop.trf.xlu0
        %v4032 = vpop.trf.xlu0
        %v4033 = vpop.trf.xlu0
        %v4034 = vpop.trf.xlu0
        %4035 = vxpose.xlu0.c.b16.start [1/8] %v3957, 128
        %4036 = vxpose.xlu0.c.b16.cont [2/8] 0, 128
        %4037 = vxpose.xlu0.c.b16.cont [3/8] 0, 128
        %4038 = vxpose.xlu0.c.b16.cont [4/8] 0, 128
        %4039 = vxpose.xlu0.c.b16.cont [5/8] 0, 128
        %4040 = vxpose.xlu0.c.b16.cont [6/8] 0, 128
        %4041 = vxpose.xlu0.c.b16.cont [7/8] 0, 128
        %4042 = vxpose.xlu0.c.b16.end [8/8] 0, 128
        %v4043 = vpop.trf.xlu0
        %v4044 = vpop.trf.xlu0
        %v4045 = vpop.trf.xlu0
        %v4046 = vpop.trf.xlu0
        %v4047 = vpop.trf.xlu0
        %v4048 = vpop.trf.xlu0
        %v4049 = vpop.trf.xlu0
        %v4050 = vpop.trf.xlu0
        %4051 = vxpose.xlu0.c.b16.start [1/8] %v3961, 128
        %4052 = vxpose.xlu0.c.b16.cont [2/8] 0, 128
        %4053 = vxpose.xlu0.c.b16.cont [3/8] 0, 128
        %4054 = vxpose.xlu0.c.b16.cont [4/8] 0, 128
        %4055 = vxpose.xlu0.c.b16.cont [5/8] 0, 128
        %4056 = vxpose.xlu0.c.b16.cont [6/8] 0, 128
        %4057 = vxpose.xlu0.c.b16.cont [7/8] 0, 128
        %4058 = vxpose.xlu0.c.b16.end [8/8] 0, 128
        %v4059 = vpop.trf.xlu0
        %v4060 = vpop.trf.xlu0
        %v4061 = vpop.trf.xlu0
        %v4062 = vpop.trf.xlu0
        %v4063 = vpop.trf.xlu0
        %v4064 = vpop.trf.xlu0
        %v4065 = vpop.trf.xlu0
        %v4066 = vpop.trf.xlu0
        %4067 = vxpose.xlu0.c.b16.start [1/8] %v3965, 128
        %4068 = vxpose.xlu0.c.b16.cont [2/8] 0, 128
        %4069 = vxpose.xlu0.c.b16.cont [3/8] 0, 128
        %4070 = vxpose.xlu0.c.b16.cont [4/8] 0, 128
        %4071 = vxpose.xlu0.c.b16.cont [5/8] 0, 128
        %4072 = vxpose.xlu0.c.b16.cont [6/8] 0, 128
        %4073 = vxpose.xlu0.c.b16.cont [7/8] 0, 128
        %4074 = vxpose.xlu0.c.b16.end [8/8] 0, 128
        %v4075 = vpop.trf.xlu0
        %v4076 = vpop.trf.xlu0
        %v4077 = vpop.trf.xlu0
        %v4078 = vpop.trf.xlu0
        %v4079 = vpop.trf.xlu0
        %v4080 = vpop.trf.xlu0
        %v4081 = vpop.trf.xlu0
        %v4082 = vpop.trf.xlu0
        %4083 = vxpose.xlu0.c.b16.start [1/8] %v3969, 128
        %4084 = vxpose.xlu0.c.b16.cont [2/8] 0, 128
        %4085 = vxpose.xlu0.c.b16.cont [3/8] 0, 128
        %4086 = vxpose.xlu0.c.b16.cont [4/8] 0, 128
        %4087 = vxpose.xlu0.c.b16.cont [5/8] 0, 128
        %4088 = vxpose.xlu0.c.b16.cont [6/8] 0, 128
        %4089 = vxpose.xlu0.c.b16.cont [7/8] 0, 128
        %4090 = vxpose.xlu0.c.b16.end [8/8] 0, 128
        %v4091 = vpop.trf.xlu0
        %v4092 = vpop.trf.xlu0
        %v4093 = vpop.trf.xlu0
        %v4094 = vpop.trf.xlu0
        %v4095 = vpop.trf.xlu0
        %v4096 = vpop.trf.xlu0
        %v4097 = vpop.trf.xlu0
        %v4098 = vpop.trf.xlu0
        %v4099 = vrot.slane %v4043, 4
        %v4100 = vsel %vm1497, %v4099, %v3979
        %v4102 = vunpack.c.l.s4 1983009808
        %v4103 = vunpack.c.0.s8 %v4102
        %v4104 = vperm.slane %v4100, %v4103
        %v4105 = vrot.slane %v4075, 4
        %v4106 = vsel %vm1497, %v4105, %v4011
        %v4108 = vunpack.c.l.s4 1983009808
        %v4109 = vunpack.c.0.s8 %v4108
        %v4110 = vperm.slane %v4106, %v4109
        %v4111 = vrot.slane %v4110, 4
        %v4112 = vsel %vm1497, %v4111, %v4104
        %v4114 = vunpack.c.l.s4 1934713408
        %v4115 = vunpack.c.0.s8 %v4114
        %v4116 = vperm.slane %v4112, %v4115
        %v4117 = vrot.slane %v4116, 4
        %v4118 = vsel %vm1497, 0, %v4117
        %v4119 = vrot.slane %v4059, 4
        %v4120 = vsel %vm1497, %v4119, %v3995
        %v4122 = vunpack.c.l.s4 1983009808
        %v4123 = vunpack.c.0.s8 %v4122
        %v4124 = vperm.slane %v4120, %v4123
        %v4125 = vrot.slane %v4091, 4
        %v4126 = vsel %vm1497, %v4125, %v4027
        %v4128 = vunpack.c.l.s4 1983009808
        %v4129 = vunpack.c.0.s8 %v4128
        %v4130 = vperm.slane %v4126, %v4129
        %v4131 = vrot.slane %v4130, 4
        %v4132 = vsel %vm1497, %v4131, %v4124
        %v4134 = vunpack.c.l.s4 1934713408
        %v4135 = vunpack.c.0.s8 %v4134
        %v4136 = vperm.slane %v4132, %v4135
        %v4137 = vrot.slane %v4136, 4
        %v4138 = vsel %vm1497, 0, %v4137
        %v4141 = vpack.i.b16 %v4136, %v4116
        %v4142 = vshrl.u32 %v4116, 16
        %v4143 = vshrl.u32 %v4136, 16
        %v4144 = vpack.i.b16 %v4143, %v4142
        %v4147 = vpack.i.b16 %v4138, %v4118
        %v4148 = vshrl.u32 %v4118, 16
        %v4149 = vshrl.u32 %v4138, 16
        %v4150 = vpack.i.b16 %v4149, %v4148
        %v4152 = vsel %vm1945, %v4141, 0
        %v4155 = vsel %vm1945, %v3751, 0
        %4157 = vmatpush.bf16.xpose.msra.mxu0 0
        %4158 = vmatpush.bf16.xpose.msra.mxu0 0
        %4159 = vmatpush.bf16.xpose.msra.mxu0 0
        %4160 = vmatpush.bf16.xpose.msra.mxu0 0
        %4161 = vmatpush.bf16.xpose.msra.mxu0 0
        %4162 = vmatpush.bf16.xpose.msra.mxu0 0
        %4163 = vmatpush.bf16.xpose.msra.mxu0 0
        %4164 = vmatpush.bf16.xpose.msra.mxu0 %v4155
        %4165 = vmatmul.bf16.gmra.mxu0 %v4152
        %v4166 = vpop.f32.mrf.mxu0
        %v4167 = vadd.f32 0.0, %v4166
        %v4168 = vpop.f32.mrf.mxu0
        %4169 = vdwg.mxu0
        %v4171 = vsel %vm1945, %v4144, 0
        %v4174 = vsel %vm1945, %v3752, 0
        %4176 = vmatpush.bf16.xpose.msra.mxu0 0
        %4177 = vmatpush.bf16.xpose.msra.mxu0 0
        %4178 = vmatpush.bf16.xpose.msra.mxu0 0
        %4179 = vmatpush.bf16.xpose.msra.mxu0 0
        %4180 = vmatpush.bf16.xpose.msra.mxu0 0
        %4181 = vmatpush.bf16.xpose.msra.mxu0 0
        %4182 = vmatpush.bf16.xpose.msra.mxu0 0
        %4183 = vmatpush.bf16.xpose.msra.mxu0 %v4174
        %4184 = vmatmul.bf16.gmra.mxu0 %v4171
        %v4185 = vpop.f32.mrf.mxu0
        %v4186 = vadd.f32 0.0, %v4185
        %v4187 = vpop.f32.mrf.mxu0
        %4188 = vdwg.mxu0
        %v4190 = vsel %vm1945, %v4147, 0
        %v4193 = vsel %vm1945, %v3753, 0
        %4195 = vmatpush.bf16.xpose.msra.mxu0 0
        %4196 = vmatpush.bf16.xpose.msra.mxu0 0
        %4197 = vmatpush.bf16.xpose.msra.mxu0 0
        %4198 = vmatpush.bf16.xpose.msra.mxu0 0
        %4199 = vmatpush.bf16.xpose.msra.mxu0 0
        %4200 = vmatpush.bf16.xpose.msra.mxu0 0
        %4201 = vmatpush.bf16.xpose.msra.mxu0 0
        %4202 = vmatpush.bf16.xpose.msra.mxu0 %v4193
        %4203 = vmatmul.bf16.gmra.mxu0 %v4190
        %v4204 = vpop.f32.mrf.mxu0
        %v4205 = vadd.f32 0.0, %v4204
        %v4206 = vpop.f32.mrf.mxu0
        %4207 = vdwg.mxu0
        %v4209 = vsel %vm1945, %v4150, 0
        %v4212 = vsel %vm1945, %v3754, 0
        %4214 = vmatpush.bf16.xpose.msra.mxu0 0
        %4215 = vmatpush.bf16.xpose.msra.mxu0 0
        %4216 = vmatpush.bf16.xpose.msra.mxu0 0
        %4217 = vmatpush.bf16.xpose.msra.mxu0 0
        %4218 = vmatpush.bf16.xpose.msra.mxu0 0
        %4219 = vmatpush.bf16.xpose.msra.mxu0 0
        %4220 = vmatpush.bf16.xpose.msra.mxu0 0
        %4221 = vmatpush.bf16.xpose.msra.mxu0 %v4212
        %4222 = vmatmul.bf16.gmra.mxu0 %v4209
        %v4223 = vpop.f32.mrf.mxu0
        %v4224 = vadd.f32 0.0, %v4223
        %v4225 = vpop.f32.mrf.mxu0
        %4226 = vdwg.mxu0
        %4227 = vxpose.xlu0.b32.start [1/16] %v4167, 128
        %4228 = vxpose.xlu0.b32.cont [2/16] 0.0, 128
        %4229 = vxpose.xlu0.b32.cont [3/16] 0.0, 128
        %4230 = vxpose.xlu0.b32.cont [4/16] 0.0, 128
        %4231 = vxpose.xlu0.b32.cont [5/16] 0.0, 128
        %4232 = vxpose.xlu0.b32.cont [6/16] 0.0, 128
        %4233 = vxpose.xlu0.b32.cont [7/16] 0.0, 128
        %4234 = vxpose.xlu0.b32.cont [8/16] 0.0, 128
        %4235 = vxpose.xlu0.b32.cont [9/16] 0.0, 128
        %4236 = vxpose.xlu0.b32.cont [10/16] 0.0, 128
        %4237 = vxpose.xlu0.b32.cont [11/16] 0.0, 128
        %4238 = vxpose.xlu0.b32.cont [12/16] 0.0, 128
        %4239 = vxpose.xlu0.b32.cont [13/16] 0.0, 128
        %4240 = vxpose.xlu0.b32.cont [14/16] 0.0, 128
        %4241 = vxpose.xlu0.b32.cont [15/16] 0.0, 128
        %4242 = vxpose.xlu0.b32.end [16/16] 0.0, 128
        %v4243 = vpop.trf.xlu0
        %v4244 = vpop.trf.xlu0
        %v4245 = vpop.trf.xlu0
        %v4246 = vpop.trf.xlu0
        %v4247 = vpop.trf.xlu0
        %v4248 = vpop.trf.xlu0
        %v4249 = vpop.trf.xlu0
        %v4250 = vpop.trf.xlu0
        %v4251 = vpop.trf.xlu0
        %v4252 = vpop.trf.xlu0
        %v4253 = vpop.trf.xlu0
        %v4254 = vpop.trf.xlu0
        %v4255 = vpop.trf.xlu0
        %v4256 = vpop.trf.xlu0
        %v4257 = vpop.trf.xlu0
        %v4258 = vpop.trf.xlu0
        %4259 = vxpose.xlu0.b32.start [1/16] %v4186, 128
        %4260 = vxpose.xlu0.b32.cont [2/16] 0.0, 128
        %4261 = vxpose.xlu0.b32.cont [3/16] 0.0, 128
        %4262 = vxpose.xlu0.b32.cont [4/16] 0.0, 128
        %4263 = vxpose.xlu0.b32.cont [5/16] 0.0, 128
        %4264 = vxpose.xlu0.b32.cont [6/16] 0.0, 128
        %4265 = vxpose.xlu0.b32.cont [7/16] 0.0, 128
        %4266 = vxpose.xlu0.b32.cont [8/16] 0.0, 128
        %4267 = vxpose.xlu0.b32.cont [9/16] 0.0, 128
        %4268 = vxpose.xlu0.b32.cont [10/16] 0.0, 128
        %4269 = vxpose.xlu0.b32.cont [11/16] 0.0, 128
        %4270 = vxpose.xlu0.b32.cont [12/16] 0.0, 128
        %4271 = vxpose.xlu0.b32.cont [13/16] 0.0, 128
        %4272 = vxpose.xlu0.b32.cont [14/16] 0.0, 128
        %4273 = vxpose.xlu0.b32.cont [15/16] 0.0, 128
        %4274 = vxpose.xlu0.b32.end [16/16] 0.0, 128
        %v4275 = vpop.trf.xlu0
        %v4276 = vpop.trf.xlu0
        %v4277 = vpop.trf.xlu0
        %v4278 = vpop.trf.xlu0
        %v4279 = vpop.trf.xlu0
        %v4280 = vpop.trf.xlu0
        %v4281 = vpop.trf.xlu0
        %v4282 = vpop.trf.xlu0
        %v4283 = vpop.trf.xlu0
        %v4284 = vpop.trf.xlu0
        %v4285 = vpop.trf.xlu0
        %v4286 = vpop.trf.xlu0
        %v4287 = vpop.trf.xlu0
        %v4288 = vpop.trf.xlu0
        %v4289 = vpop.trf.xlu0
        %v4290 = vpop.trf.xlu0
        %4291 = vxpose.xlu0.b32.start [1/16] %v4205, 128
        %4292 = vxpose.xlu0.b32.cont [2/16] 0.0, 128
        %4293 = vxpose.xlu0.b32.cont [3/16] 0.0, 128
        %4294 = vxpose.xlu0.b32.cont [4/16] 0.0, 128
        %4295 = vxpose.xlu0.b32.cont [5/16] 0.0, 128
        %4296 = vxpose.xlu0.b32.cont [6/16] 0.0, 128
        %4297 = vxpose.xlu0.b32.cont [7/16] 0.0, 128
        %4298 = vxpose.xlu0.b32.cont [8/16] 0.0, 128
        %4299 = vxpose.xlu0.b32.cont [9/16] 0.0, 128
        %4300 = vxpose.xlu0.b32.cont [10/16] 0.0, 128
        %4301 = vxpose.xlu0.b32.cont [11/16] 0.0, 128
        %4302 = vxpose.xlu0.b32.cont [12/16] 0.0, 128
        %4303 = vxpose.xlu0.b32.cont [13/16] 0.0, 128
        %4304 = vxpose.xlu0.b32.cont [14/16] 0.0, 128
        %4305 = vxpose.xlu0.b32.cont [15/16] 0.0, 128
        %4306 = vxpose.xlu0.b32.end [16/16] 0.0, 128
        %v4307 = vpop.trf.xlu0
        %v4308 = vpop.trf.xlu0
        %v4309 = vpop.trf.xlu0
        %v4310 = vpop.trf.xlu0
        %v4311 = vpop.trf.xlu0
        %v4312 = vpop.trf.xlu0
        %v4313 = vpop.trf.xlu0
        %v4314 = vpop.trf.xlu0
        %v4315 = vpop.trf.xlu0
        %v4316 = vpop.trf.xlu0
        %v4317 = vpop.trf.xlu0
        %v4318 = vpop.trf.xlu0
        %v4319 = vpop.trf.xlu0
        %v4320 = vpop.trf.xlu0
        %v4321 = vpop.trf.xlu0
        %v4322 = vpop.trf.xlu0
        %4323 = vxpose.xlu0.b32.start [1/16] %v4224, 128
        %4324 = vxpose.xlu0.b32.cont [2/16] 0.0, 128
        %4325 = vxpose.xlu0.b32.cont [3/16] 0.0, 128
        %4326 = vxpose.xlu0.b32.cont [4/16] 0.0, 128
        %4327 = vxpose.xlu0.b32.cont [5/16] 0.0, 128
        %4328 = vxpose.xlu0.b32.cont [6/16] 0.0, 128
        %4329 = vxpose.xlu0.b32.cont [7/16] 0.0, 128
        %4330 = vxpose.xlu0.b32.cont [8/16] 0.0, 128
        %4331 = vxpose.xlu0.b32.cont [9/16] 0.0, 128
        %4332 = vxpose.xlu0.b32.cont [10/16] 0.0, 128
        %4333 = vxpose.xlu0.b32.cont [11/16] 0.0, 128
        %4334 = vxpose.xlu0.b32.cont [12/16] 0.0, 128
        %4335 = vxpose.xlu0.b32.cont [13/16] 0.0, 128
        %4336 = vxpose.xlu0.b32.cont [14/16] 0.0, 128
        %4337 = vxpose.xlu0.b32.cont [15/16] 0.0, 128
        %4338 = vxpose.xlu0.b32.end [16/16] 0.0, 128
        %v4339 = vpop.trf.xlu0
        %v4340 = vpop.trf.xlu0
        %v4341 = vpop.trf.xlu0
        %v4342 = vpop.trf.xlu0
        %v4343 = vpop.trf.xlu0
        %v4344 = vpop.trf.xlu0
        %v4345 = vpop.trf.xlu0
        %v4346 = vpop.trf.xlu0
        %v4347 = vpop.trf.xlu0
        %v4348 = vpop.trf.xlu0
        %v4349 = vpop.trf.xlu0
        %v4350 = vpop.trf.xlu0
        %v4351 = vpop.trf.xlu0
        %v4352 = vpop.trf.xlu0
        %v4353 = vpop.trf.xlu0
        %v4354 = vpop.trf.xlu0
        %v4355 = vrot.slane %v4307, 4
        %v4356 = vsel %vm1279, %v4355, %v4243
        %v4357 = vrot.slane %v4243, 4
        %v4358 = vsel %vm1279, %v4307, %v4357
        %v4360 = vunpack.c.l.s4 1983009808
        %v4361 = vunpack.c.0.s8 %v4360
        %v4362 = vperm.slane %v4356, %v4361
        %v4364 = vunpack.c.l.s4 1983009808
        %v4365 = vunpack.c.0.s8 %v4364
        %v4366 = vperm.slane %v4358, %v4365
        %v4367 = vrot.slane %v4339, 4
        %v4368 = vsel %vm1279, %v4367, %v4275
        %v4369 = vrot.slane %v4275, 4
        %v4370 = vsel %vm1279, %v4339, %v4369
        %v4372 = vunpack.c.l.s4 1983009808
        %v4373 = vunpack.c.0.s8 %v4372
        %v4374 = vperm.slane %v4368, %v4373
        %v4376 = vunpack.c.l.s4 1983009808
        %v4377 = vunpack.c.0.s8 %v4376
        %v4378 = vperm.slane %v4370, %v4377
        %v4379 = vrot.slane %v4374, 4
        %v4380 = vsel %vm1279, %v4379, %v4362
        %v4381 = vrot.slane %v4362, 4
        %v4382 = vsel %vm1279, %v4374, %v4381
        %v4384 = vunpack.c.l.s4 1934713408
        %v4385 = vunpack.c.0.s8 %v4384
        %v4386 = vperm.slane %v4380, %v4385
        %v4388 = vunpack.c.l.s4 1934713408
        %v4389 = vunpack.c.0.s8 %v4388
        %v4390 = vperm.slane %v4382, %v4389
        %v4391 = vrot.slane %v4378, 4
        %v4392 = vsel %vm1279, %v4391, %v4366
        %v4393 = vrot.slane %v4366, 4
        %v4394 = vsel %vm1279, %v4378, %v4393
        %v4396 = vunpack.c.l.s4 1934713408
        %v4397 = vunpack.c.0.s8 %v4396
        %v4398 = vperm.slane %v4392, %v4397
        %v4400 = vunpack.c.l.s4 1934713408
        %v4401 = vunpack.c.0.s8 %v4400
        %v4402 = vperm.slane %v4394, %v4401
        %v4403 = vrot.slane %v4386, 4
        %v4404 = vsel %vm1279, 0.0, %v4403
        %v4405 = vrot.slane %v4390, 4
        %v4406 = vsel %vm1279, 0.0, %v4405
        %v4407 = vrot.slane %v4398, 4
        %v4408 = vsel %vm1279, 0.0, %v4407
        %v4409 = vrot.slane %v4402, 4
        %v4410 = vsel %vm1279, 0.0, %v4409
        %v4411 = vsel %vm1279, %v4405, %v4386
        %v4413 = vunpack.c.l.s4 1983009808
        %v4414 = vunpack.c.0.s8 %v4413
        %v4415 = vperm.slane %v4411, %v4414
        %v4416 = vrot.slane %v4406, 4
        %v4417 = vsel %vm1279, %v4416, %v4404
        %v4419 = vunpack.c.l.s4 1983009808
        %v4420 = vunpack.c.0.s8 %v4419
        %v4421 = vperm.slane %v4417, %v4420
        %v4422 = vsel %vm1279, %v4409, %v4398
        %v4424 = vunpack.c.l.s4 1983009808
        %v4425 = vunpack.c.0.s8 %v4424
        %v4426 = vperm.slane %v4422, %v4425
        %v4427 = vrot.slane %v4410, 4
        %v4428 = vsel %vm1279, %v4427, %v4408
        %v4430 = vunpack.c.l.s4 1983009808
        %v4431 = vunpack.c.0.s8 %v4430
        %v4432 = vperm.slane %v4428, %v4431
        %v4433 = vrot.slane %v4421, 4
        %v4434 = vsel %vm1279, %v4433, %v4415
        %v4435 = vrot.slane %v4415, 4
        %v4436 = vsel %vm1279, %v4421, %v4435
        %v4438 = vunpack.c.l.s4 1934713408
        %v4439 = vunpack.c.0.s8 %v4438
        %v4440 = vperm.slane %v4434, %v4439
        %v4442 = vunpack.c.l.s4 1934713408
        %v4443 = vunpack.c.0.s8 %v4442
        %v4444 = vperm.slane %v4436, %v4443
        %v4445 = vrot.slane %v4432, 4
        %v4446 = vsel %vm1279, %v4445, %v4426
        %v4447 = vrot.slane %v4426, 4
        %v4448 = vsel %vm1279, %v4432, %v4447
        %v4450 = vunpack.c.l.s4 1934713408
        %v4451 = vunpack.c.0.s8 %v4450
        %v4452 = vperm.slane %v4446, %v4451
        %v4454 = vunpack.c.l.s4 1934713408
        %v4455 = vunpack.c.0.s8 %v4454
        %v4456 = vperm.slane %v4448, %v4455
        %v4457 = vrot.slane %v4452, 4
        %v4458 = vsel %vm1279, %v4457, %v4440
        %v4459 = vrot.slane %v4440, 4
        %v4460 = vsel %vm1279, %v4452, %v4459
        %v4461 = vrot.slane %v4456, 4
        %v4462 = vsel %vm1279, %v4461, %v4444
        %v4463 = vrot.slane %v4444, 4
        %v4464 = vsel %vm1279, %v4456, %v4463
        %4466 = vrot.lane.b32.xlu0 %v4460, 8
        %v4467 = vpop.permute.xlu0 %4466
        %4470 = vrot.lane.b32.xlu0 %v4462, 16
        %v4471 = vpop.permute.xlu0 %4470
        %4474 = vrot.lane.b32.xlu0 %v4464, 24
        %v4475 = vpop.permute.xlu0 %4474
        %v4477 = vsel %vm1945, %v4458, %v4467
        %v4478 = vsel %vm2794, %v4477, %v4471
        %v4479 = vsel %vm2796, %v4478, %v4475
        %v4480 = vpack.c.bf16 %v4479, %v4479
        %v4482 = vperm.slane %v2892, 0
        %v4488 = vunpack.c.l.b16 %v2888
        %v4489 = vunpack.c.l.b16 %v2889
        %v4490 = vunpack.c.l.b16 %v2890
        %v4491 = vunpack.c.l.b16 %v2891
        %v4492 = vpack.c.b16 %v4489, %v4488
        %v4493 = vpack.c.b16 %v4491, %v4490
        %v4497 = vsel %vm1220, %v4480, 0
        %4499 = vmatpush.bf16.msra.mxu0 0
        %4500 = vmatpush.bf16.msra.mxu0 0
        %4501 = vmatpush.bf16.msra.mxu0 0
        %4502 = vmatpush.bf16.msra.mxu0 0
        %4503 = vmatpush.bf16.msra.mxu0 0
        %4504 = vmatpush.bf16.msra.mxu0 0
        %4505 = vmatpush.bf16.msra.mxu0 %v4493
        %4506 = vmatpush.bf16.msra.mxu0 %v4492
        %4507 = vmatmul.bf16.gmra.mxu0 %v4497
        %v4508 = vpop.f32.mrf.mxu0
        %v4509 = vadd.f32 %v4482, %v4508
        %v4510 = vpop.f32.mrf.mxu0
        %4511 = vdwg.mxu0
        %v4512 = vadd.f32 %v4509, %v2875
        %v4513 = vld [vmem:[%s20] sm:$0x1]
        %v4514 = vld [vmem:[%s21] sm:$0x1]
        %v4515 = vsel %vm1220, %v4512, 0.0
        %4516 = vadd.xlane.f32.xlu0 %v4515
        %v4517 = vpop.xlane.xlu0 %4516
        %v4518 = vmul.f32 %v4517, %v2842
        %v4519 = vsub.f32 %v4512, %v4518
        %v4520 = vmul.f32 %v4519, %v4519
        %v4521 = vsel %vm1220, %v4520, 0.0
        %4522 = vadd.xlane.f32.xlu0 %v4521
        %v4523 = vpop.xlane.xlu0 %4522
        %v4524 = vmul.f32 %v4523, %v2842
        %v4525 = vadd.f32 %v4524, 1e-05
        %v4526 = vrsqrt.pop %v4525
        %v4527 = vmul.f32 %v4526, %v4525
        %v4528 = vmul.f32 %v4527, %v4526
        %v4529 = vmul.f32 0.5, %v4528
        %v4530 = vsub.f32 1.5, %v4529
        %v4531 = vmul.f32 %v4526, %v4530
        %vm4532 = vweird.f32 %v4525
        %vm4533 = vweird.f32 %v4526
        %vm4534 = vmor %vm4532, %vm4533
        %v4535 = vsel %vm4534, %v4526, %v4531
        %v4536 = vmul.f32 %v4519, %v4535
        %v4538 = vperm.slane %v4513, 0
        %v4540 = vmul.f32 %v4536, %v4538
        %v4542 = vperm.slane %v4514, 0
        %v4544 = vadd.f32 %v4540, %v4542
        %v4545 = vmul.f32 %v4544, %v2873
        %v4546 = vpack.c.bf16 %v4545, %v4545
        %v4547 = vld [vmem:[#allocation22] sm:$0xf]
        %v4548 = vld [vmem:[#allocation22 + $0x4] sm:$0xf]
        %v4549 = vld [vmem:[#allocation22 + $0x8] sm:$0xf]
        %v4550 = vld [vmem:[#allocation22 + $0xc] sm:$0xf]
        %v4551 = vld [vmem:[%s23] sm:$0x1]
        %v4553 = vperm.slane %v4551, 0
        %v4559 = vunpack.c.l.b16 %v4547
        %v4560 = vunpack.c.l.b16 %v4548
        %v4561 = vunpack.c.l.b16 %v4549
        %v4562 = vunpack.c.l.b16 %v4550
        %v4563 = vpack.c.b16 %v4560, %v4559
        %v4564 = vpack.c.b16 %v4562, %v4561
        %v4568 = vsel %vm1220, %v4546, 0
        %4570 = vmatpush.bf16.msra.mxu0 0
        %4571 = vmatpush.bf16.msra.mxu0 0
        %4572 = vmatpush.bf16.msra.mxu0 0
        %4573 = vmatpush.bf16.msra.mxu0 0
        %4574 = vmatpush.bf16.msra.mxu0 0
        %4575 = vmatpush.bf16.msra.mxu0 0
        %4576 = vmatpush.bf16.msra.mxu0 %v4564
        %4577 = vmatpush.bf16.msra.mxu0 %v4563
        %4578 = vmatmul.bf16.gmra.mxu0 %v4568
        %v4579 = vpop.f32.mrf.mxu0
        %v4580 = vadd.f32 %v4553, %v4579
        %v4581 = vpop.f32.mrf.mxu0
        %4582 = vdwg.mxu0
        %v4583 = vmax.f32 %v4580, 0.0
        %v4584 = vpack.c.bf16 %v4583, %v4583
        %v4585 = vld [vmem:[%s24] sm:$0xf]
        %v4586 = vld [vmem:[%s24 + $0x4] sm:$0xf]
        %v4587 = vld [vmem:[%s24 + $0x8] sm:$0xf]
        %v4588 = vld [vmem:[%s24 + $0xc] sm:$0xf]
        %v4589 = vld [vmem:[%s24 + $0x10] sm:$0xf]
        %v4590 = vld [vmem:[%s24 + $0x14] sm:$0xf]
        %v4591 = vld [vmem:[%s24 + $0x18] sm:$0xf]
        %v4592 = vld [vmem:[%s24 + $0x1c] sm:$0xf]
        %v4593 = vld [vmem:[%s25] sm:$0x1]
        %v4595 = vperm.slane %v4593, 0
        %v4605 = vunpack.c.l.b16 %v4585
        %v4606 = vunpack.c.l.b16 %v4586
        %v4607 = vunpack.c.l.b16 %v4587
        %v4608 = vunpack.c.l.b16 %v4588
        %v4609 = vunpack.c.l.b16 %v4589
        %v4610 = vunpack.c.l.b16 %v4590
        %v4611 = vunpack.c.l.b16 %v4591
        %v4612 = vunpack.c.l.b16 %v4592
        %v4613 = vpack.c.b16 %v4606, %v4605
        %v4614 = vpack.c.b16 %v4608, %v4607
        %v4615 = vpack.c.b16 %v4610, %v4609
        %v4616 = vpack.c.b16 %v4612, %v4611
        %vm4621 = vcmask 523264
        %v4623 = vsel %vm4621, %v4584, 0
        %4625 = vmatpush.bf16.msra.mxu0 0
        %4626 = vmatpush.bf16.msra.mxu0 0
        %4627 = vmatpush.bf16.msra.mxu0 0
        %4628 = vmatpush.bf16.msra.mxu0 0
        %4629 = vmatpush.bf16.msra.mxu0 %v4616
        %4630 = vmatpush.bf16.msra.mxu0 %v4615
        %4631 = vmatpush.bf16.msra.mxu0 %v4614
        %4632 = vmatpush.bf16.msra.mxu0 %v4613
        %4633 = vmatmul.bf16.gmra.mxu0 %v4623
        %v4634 = vpop.f32.mrf.mxu0
        %v4635 = vadd.f32 %v4595, %v4634
        %v4636 = vpop.f32.mrf.mxu0
        %4637 = vdwg.mxu0
        %v4638 = vadd.f32 %v4635, %v4545
        %v4639 = vld [vmem:[%s26] sm:$0x1]
        %v4640 = vld [vmem:[%s27] sm:$0x1]
        %v4641 = vsel %vm1220, %v4638, 0.0
        %4642 = vadd.xlane.f32.xlu0 %v4641
        %v4643 = vpop.xlane.xlu0 %4642
        %v4644 = vmul.f32 %v4643, %v2842
        %v4645 = vsub.f32 %v4638, %v4644
        %v4646 = vmul.f32 %v4645, %v4645
        %v4647 = vsel %vm1220, %v4646, 0.0
        %4648 = vadd.xlane.f32.xlu0 %v4647
        %v4649 = vpop.xlane.xlu0 %4648
        %v4650 = vmul.f32 %v4649, %v2842
        %v4651 = vadd.f32 %v4650, 1e-05
        %v4652 = vrsqrt.pop %v4651
        %v4653 = vmul.f32 %v4652, %v4651
        %v4654 = vmul.f32 %v4653, %v4652
        %v4655 = vmul.f32 0.5, %v4654
        %v4656 = vsub.f32 1.5, %v4655
        %v4657 = vmul.f32 %v4652, %v4656
        %vm4658 = vweird.f32 %v4651
        %vm4659 = vweird.f32 %v4652
        %vm4660 = vmor %vm4658, %vm4659
        %v4661 = vsel %vm4660, %v4652, %v4657
        %v4662 = vmul.f32 %v4645, %v4661
        %v4664 = vperm.slane %v4639, 0
        %v4666 = vmul.f32 %v4662, %v4664
        %v4668 = vperm.slane %v4640, 0
        %v4670 = vadd.f32 %v4666, %v4668
        %v4671 = vmul.f32 %v4670, %v2873
        %4672 = vst.msk [vmem:[%s1176] sm:$0xff] %vm1220, %v4671
        %s4673 = sand.u32 %s703, 1
        %s4674 = scalar_lea.sflag [#allocation4], %s4673
        %s4675 = sand.u32 %s703, 1
        %s4676 = smul.addr %s4675, 8
        %s4677 = scalar_lea.vmem [#allocation23], %s4676
        // Predicated region
        $region185: #{tpu_custom_call.1} parent=131 // pred_check
          %p4678 = pneg %p713
        $region186: #{tpu_custom_call.1} parent=131 // pred_check_branch
          %4680 = sbr.rel (%p4678) target = $region188
        $region187: #{tpu_custom_call.1} parent=131 // pred_region
          %4682 = vsyncadd %s4674, 0
          %s4683 = sadd.s32 %s60, %s59
          %s4684 = smul.addr %s4683, 8
          %s4685 = scalar_lea.hbm %s28, %s4684
          %s4687 = sshll.u32 %s4677, 4
          %s4688 = int_to_ptr.vmem [resolvable:$true] %s4687
          %s4689 = sshll.u32 %s4685, 4
          %s4690 = int_to_ptr.hbm [resolvable:$true] %s4689
          %4692 = dma.vmem_to_hbm [thread:$0]  %s4688, 128, %s4690, %s4674
        $region188: #{tpu_custom_call.1} parent=131 // pred_fallthru
          _
      $region132: #{tpu_custom_call.1} parent=5 // pred_fallthru
        _
      %p4693 = scmp.le.s32.totalorder 2, %s50
      // Predicated region
      $region189: #{tpu_custom_call.1} parent=5 // pred_check
        %p4694 = pneg %p4693
      $region190: #{tpu_custom_call.1} parent=5 // pred_check_branch
        %4696 = sbr.rel (%p4694) target = $region192
      $region191: #{tpu_custom_call.1} parent=5 // pred_region
        %s4697 = ssub.s32 %s50, 2
        // Predicated region
        $region193: #{tpu_custom_call.1} parent=191 // pred_check
          %p4698 = pneg %p719
        $region194: #{tpu_custom_call.1} parent=191 // pred_check_branch
          %4700 = sbr.rel (%p4698) target = $region196
        $region195: #{tpu_custom_call.1} parent=191 // pred_region
          %s4701 = sand.u32 %s704, 1
          %s4702 = scalar_lea.sflag [#allocation4], %s4701
          %s4703 = sand.u32 %s704, 1
          %s4704 = smul.addr %s4703, 8
          %s4705 = scalar_lea.vmem [#allocation23], %s4704
          %4707 = dma.done %s4702, 128
        $region196: #{tpu_custom_call.1} parent=191 // pred_fallthru
          _
      $region192: #{tpu_custom_call.1} parent=5 // pred_fallthru
        _
    $region6: #{tpu_custom_call.1} parent=1 // loop_footer
      %s54 = sadd.s32 1, %s50
    $region7: #{tpu_custom_call.1} parent=1 // loop_footer_branch
      %49 = sbr.rel target = $region3
    $region8: #{tpu_custom_call.1} parent=1 // loop_exit
      _
    %4708 = vsyncpa [#allocation3], 1
    %s4709 = scalar_lea.sflag [#allocation3], 1
    %4710 = vsyncpa %s4709, 1
    %4711 = vsyncpa [#allocation6], 1
    %s4712 = scalar_lea.sflag [#allocation6], 1
    %4713 = vsyncpa %s4712, 1
    %4714 = vsyncpa [#allocation9], 1
    %s4715 = scalar_lea.sflag [#allocation9], 1
    %4716 = vsyncpa %s4715, 1
    %4717 = vsyncpa [#allocation12], 1
    %4718 = vsyncpa [#allocation15], 1
    %4719 = vsyncpa [#allocation18], 1
    %4720 = vsyncpa [#allocation21], 1
    %4721 = vsyncpa [#allocation4], 1
    %s4722 = scalar_lea.sflag [#allocation4], 1
    %4723 = vsyncpa %s4722, 1

</llo_original>
